<compile_context>
chip_gen: v7x
topology: tpu7x:2x2x1
jax: 0.10.0
libtpu: 0.0.40
codegen_flags: <defaults>
</compile_context>

<pallas_src>
import functools

import jax
import jax.numpy as jnp
from jax import lax
from jax.experimental import pallas as pl
from jax.experimental.pallas import tpu as pltpu

KSIZE = 3


# --------------------------------------------------------------------- configs
def outconv_layer_configs(num_channels):
    """(in_ch, out_ch, stride) for the 13 ConvLayers of OutConv."""
    c = num_channels
    cfg = [(1, c, 1), (c, c, 1), (c, c, 1), (c, c, 1), (c, c, 2)]
    cfg += [(c, 2 * c, 1), (2 * c, 2 * c, 1), (2 * c, c, 2)]
    cfg += [(c, c // 2, 1), (c // 2, c // 4, 1), (c // 4, c // 8, 1),
            (c // 8, c // 16, 1), (c // 16, 2, 2)]
    return cfg


def _layer_lengths(l_in, configs):
    lens, l = [], l_in
    for _, _, s in configs:
        l = (l - KSIZE) // s + 1
        assert l > 0, "input_dim too small for the 13-layer stack"
        lens.append(l)
    return lens


def _round_up(v, m):
    return ((v + m - 1) // m) * m


def _w_row_offsets(configs):
    """Row offset of each layer's weight block inside the bf16 weight slab."""
    offs, off = [], 0
    for _, cout, _ in configs:
        offs.append(off)
        off += _round_up(cout, 16)   # 16-row blocks: bf16 sublane-pack aligned
    return offs, off


# ---------------------------------------------------------------------- kernel
def _fused_outconv_kernel(x_ref, w_ref, b_ref, o_ref, *,
                          configs, lengths, w_row_off, b_tile):
    # x_ref : (1, b_tile * l_in) f32   -- batch tile packed along lanes
    # w_ref : (W_ROWS, W_COLS)  bf16   -- layer li weights at rows w_row_off[li]
    #                                     layout [cout, k*cin + ci]
    # b_ref : (C_PAD, n_layers) f32    -- layer li bias in column li, rows 0:cout
    # o_ref : (b_tile, 2, l_final)     -- PyTorch (batch, 2, outputs_dim) layout
    n_layers = len(configs)
    act = x_ref[...]                                    # (1, b_tile*l_in) f32
    l_prev = act.shape[1] // b_tile

    def cat(pieces, axis):
        return pieces[0] if len(pieces) == 1 else jnp.concatenate(pieces, axis)

    for li, (cin, cout, stride) in enumerate(configs):
        # Guard against stale-lane reads if the config chain ever changes.
        assert act.shape[0] == cin, (li, act.shape, cin)
        l_full = l_prev - (KSIZE - 1)                   # stride-1 output length
        l_out = lengths[li]
        off = w_row_off[li]

        # ---- conv: per-tap matmuls accumulated in f32 (MXU; VPU when cin==1) -
        acc = None
        for k in range(KSIZE):
            tap = cat([act[:, b * l_prev + k: b * l_prev + k + l_full]
                       for b in range(b_tile)], axis=1)  # (cin, b_tile*l_full)
            if cin == 1:
                wk = w_ref[off:off + cout, k:k + 1].astype(jnp.float32)
                part = wk * tap.astype(jnp.float32)      # VPU outer-product
            else:
                wk = w_ref[off:off + cout, k * cin:(k + 1) * cin]     # bf16
                part = jnp.dot(wk, tap, preferred_element_type=jnp.float32)
            acc = part if acc is None else acc + part    # (cout, b_tile*l_full)

        # ---- stride 2: column selection via a tiny 0/1 matmul (no strided ld)
        if stride != 1:
            r = lax.broadcasted_iota(jnp.int32, (l_full, l_out), 0)
            c = lax.broadcasted_iota(jnp.int32, (l_full, l_out), 1)
            sel = (r == stride * c).astype(jnp.float32)  # (l_full, l_out)
            acc = cat([jnp.dot(acc[:, b * l_full:(b + 1) * l_full], sel,
                               preferred_element_type=jnp.float32)
                       for b in range(b_tile)], axis=1)  # (cout, b_tile*l_out)

        # ---- folded BatchNorm bias + Swish in f32 ---------------------------
        acc = acc + b_ref[0:cout, li:li + 1]             # (cout, 1) broadcast
        acc = acc * jax.nn.sigmoid(acc)                  # Swish

        if li + 1 < n_layers:
            act = acc.astype(jnp.bfloat16)               # bf16 between layers
            l_prev = l_out
        else:
            for b in range(b_tile):                      # (2, l_final) per elem
                o_ref[b, :, :] = acc[:, b * l_out:(b + 1) * l_out].astype(
                    o_ref.dtype)


# --------------------------------------------------------------------- wrapper
def outconv_forward(x, packed, *, batch_tile=8):
    """x: (B, input_dim) f32 -> (B, 2, outputs_dim), one fused pallas_call."""
    w_slab, b_slab, configs = packed
    bsz, l_in = x.shape
    lengths = _layer_lengths(l_in, configs)
    c_final, l_final = configs[-1][1], lengths[-1]

    # Batch tiling: b_tile elements per grid step, batch padded to a multiple.
    b_tile = min(bsz, batch_tile)
    pad = (-bsz) % b_tile
    if pad:
        x = jnp.concatenate([x, jnp.zeros((pad, l_in), x.dtype)], axis=0)
    bp = bsz + pad
    n_tiles = bp // b_tile

    # Pack each batch tile contiguously along lanes (free row-major reshape),
    # so the kernel receives a lane-dense (1, b_tile*l_in) slab per step.
    x_packed = x.reshape(n_tiles, 1, b_tile * l_in)

    w_row_off, _ = _w_row_offsets(configs)
    kernel = functools.partial(_fused_outconv_kernel,
                               configs=tuple(configs), lengths=tuple(lengths),
                               w_row_off=tuple(w_row_off), b_tile=b_tile)

    out = pl.pallas_call(
        kernel,
        out_shape=jax.ShapeDtypeStruct((bp, c_final, l_final), x.dtype),
        grid_spec=pltpu.PrefetchScalarGridSpec(
            num_scalar_prefetch=0,
            grid=(n_tiles,),
            in_specs=[
                pl.BlockSpec((None, 1, b_tile * l_in), lambda i: (i, 0, 0)),
                pl.BlockSpec(w_slab.shape, lambda i: (0, 0)),   # one bf16 slab
                pl.BlockSpec(b_slab.shape, lambda i: (0, 0)),   # one f32 slab
            ],
            out_specs=pl.BlockSpec((b_tile, c_final, l_final),
                                   lambda i: (i, 0, 0)),
        ),
        compiler_params=pltpu.CompilerParams(
            dimension_semantics=("parallel",)),   # v7x: shard tiles across TCs
    )(x_packed, w_slab, b_slab)
    return out if pad == 0 else out[:bsz]


# ---------------------------------------------------------------------- params
def init_params(key, num_channels, eps=1e-5):
    """Synthetic params with inference-mode BatchNorm folded in, packed into
    one bf16 weight slab and one f32 bias slab (single DMA each)."""
    assert num_channels % 16 == 0, "Dimension should be divisible by 16."
    configs = outconv_layer_configs(num_channels)
    n = len(configs)
    offs, w_rows = _w_row_offsets(configs)
    w_cols = _round_up(KSIZE * max(cin for cin, _, _ in configs), 128)
    c_pad = _round_up(max(cout for _, cout, _ in configs), 8)

    w_slab = jnp.zeros((w_rows, w_cols), jnp.float32)
    b_slab = jnp.zeros((c_pad, n), jnp.float32)

    for i, (cin, cout, stride) in enumerate(configs):
        k_w, k_b, k_g, k_bt = jax.random.split(jax.random.fold_in(key, i), 4)
        bound = 1.0 / float((cin * KSIZE) ** 0.5)
        w = jax.random.uniform(k_w, (cout, cin, KSIZE), jnp.float32, -bound, bound)
        bias = jax.random.uniform(k_b, (cout,), jnp.float32, -bound, bound)
        gamma = 1.0 + 0.1 * jax.random.normal(k_g, (cout,), jnp.float32)
        beta = 0.1 * jax.random.normal(k_bt, (cout,), jnp.float32)
        run_mean = jnp.zeros((cout,), jnp.float32)
        run_var = jnp.ones((cout,), jnp.float32)
        # Fold inference-mode BatchNorm1d into conv weight / bias.
        scale = gamma / jnp.sqrt(run_var + eps)                      # (cout,)
        w_eff = w * scale[:, None, None]                             # (cout,cin,K)
        b_eff = scale * (bias - run_mean) + beta                     # (cout,)
        # Pack as [cout, k*cin + ci] so the kernel's per-tap slice is W_k.
        w_packed = jnp.transpose(w_eff, (0, 2, 1)).reshape(cout, KSIZE * cin)
        w_slab = w_slab.at[offs[i]:offs[i] + cout, :KSIZE * cin].set(w_packed)
        b_slab = b_slab.at[:cout, i].set(b_eff)

    return w_slab.astype(jnp.bfloat16), b_slab, configs


# ------------------------------------------------------------------------ main
if __name__ == "__main__":
    key = jax.random.PRNGKey(0)
    batch, input_dim, num_channels = 2, 128, 16

    packed = init_params(jax.random.fold_in(key, 123), num_channels)
    x = jax.random.normal(jax.random.fold_in(key, 7), (batch, input_dim),
                          jnp.float32)

    out = outconv_forward(x, packed)
    out = jax.block_until_ready(out)

    # sanity: same length arithmetic as the PyTorch module
    L = input_dim
    for _, _, s in outconv_layer_configs(num_channels):
        L = (L - KSIZE) // s + 1
    assert out.shape == (batch, 2, L), (out.shape, (batch, 2, L))
    assert bool(jnp.all(jnp.isfinite(out)))
    print("KERNEL_OK")
</pallas_src>

<mosaic_0001>
module attributes {stable_mosaic.version = 11 : i64} {
  func.func @_fused_outconv_kernel(%arg0: i32, %arg1: memref<1x1x256xf32, #tpu.memory_space<vmem>>, %arg2: memref<240x128xbf16, #tpu.memory_space<vmem>>, %arg3: memref<32x13xf32, #tpu.memory_space<vmem>>, %arg4: memref<2x2x9xf32, #tpu.memory_space<vmem>>) attributes {dimension_semantics = [#tpu.dimension_semantics<parallel>], iteration_bounds = array<i64: 1>, scalar_prefetch = 0 : i64, scratch_operands = 0 : i64, tpu.core_type = #tpu.core_type<tc>, window_params = [{transform_indices = @transform_0, window_bounds = array<i64: 1, 1, 256>}, {pipeline_mode = #tpu.pipeline_mode<synchronous>, transform_indices = @transform_1, window_bounds = array<i64: 240, 128>}, {pipeline_mode = #tpu.pipeline_mode<synchronous>, transform_indices = @transform_2, window_bounds = array<i64: 32, 13>}, {transform_indices = @transform_3, window_bounds = array<i64: 2, 2, 9>}]} {
    %c0 = arith.constant 0 : index
    %c0_0 = arith.constant 0 : index
    %c0_1 = arith.constant 0 : index
    %0 = vector.load %arg1[%c0, %c0_0, %c0_1] : memref<1x1x256xf32, #tpu.memory_space<vmem>>, vector<1x1x256xf32>
    %1 = vector.shape_cast %0 : vector<1x1x256xf32> to vector<1x256xf32>
    %2 = vector.extract_strided_slice %1 {offsets = [0, 0], sizes = [1, 126], strides = [1, 1]} : vector<1x256xf32> to vector<1x126xf32>
    %3 = vector.extract_strided_slice %1 {offsets = [0, 128], sizes = [1, 126], strides = [1, 1]} : vector<1x256xf32> to vector<1x126xf32>
    %4 = tpu.concatenate %2, %3 in 1 : vector<1x126xf32>, vector<1x126xf32> -> vector<1x252xf32>
    %c0_2 = arith.constant 0 : index
    %c0_3 = arith.constant 0 : index
    %5 = vector.load %arg2[%c0_2, %c0_3] : memref<240x128xbf16, #tpu.memory_space<vmem>>, vector<16x1xbf16>
    %6 = arith.extf %5 : vector<16x1xbf16> to vector<16x1xf32>
    %7 = vector.broadcast %6 : vector<16x1xf32> to vector<16x252xf32>
    %8 = vector.broadcast %4 : vector<1x252xf32> to vector<16x252xf32>
    %9 = arith.mulf %7, %8 : vector<16x252xf32>
    %10 = vector.extract_strided_slice %1 {offsets = [0, 1], sizes = [1, 126], strides = [1, 1]} : vector<1x256xf32> to vector<1x126xf32>
    %11 = vector.extract_strided_slice %1 {offsets = [0, 129], sizes = [1, 126], strides = [1, 1]} : vector<1x256xf32> to vector<1x126xf32>
    %12 = tpu.concatenate %10, %11 in 1 : vector<1x126xf32>, vector<1x126xf32> -> vector<1x252xf32>
    %c0_4 = arith.constant 0 : index
    %c1 = arith.constant 1 : index
    %13 = vector.load %arg2[%c0_4, %c1] : memref<240x128xbf16, #tpu.memory_space<vmem>>, vector<16x1xbf16>
    %14 = arith.extf %13 : vector<16x1xbf16> to vector<16x1xf32>
    %15 = vector.broadcast %14 : vector<16x1xf32> to vector<16x252xf32>
    %16 = vector.broadcast %12 : vector<1x252xf32> to vector<16x252xf32>
    %17 = arith.mulf %15, %16 : vector<16x252xf32>
    %18 = arith.addf %9, %17 : vector<16x252xf32>
    %19 = vector.extract_strided_slice %1 {offsets = [0, 2], sizes = [1, 126], strides = [1, 1]} : vector<1x256xf32> to vector<1x126xf32>
    %20 = vector.extract_strided_slice %1 {offsets = [0, 130], sizes = [1, 126], strides = [1, 1]} : vector<1x256xf32> to vector<1x126xf32>
    %21 = tpu.concatenate %19, %20 in 1 : vector<1x126xf32>, vector<1x126xf32> -> vector<1x252xf32>
    %c0_5 = arith.constant 0 : index
    %c2 = arith.constant 2 : index
    %22 = vector.load %arg2[%c0_5, %c2] : memref<240x128xbf16, #tpu.memory_space<vmem>>, vector<16x1xbf16>
    %23 = arith.extf %22 : vector<16x1xbf16> to vector<16x1xf32>
    %24 = vector.broadcast %23 : vector<16x1xf32> to vector<16x252xf32>
    %25 = vector.broadcast %21 : vector<1x252xf32> to vector<16x252xf32>
    %26 = arith.mulf %24, %25 : vector<16x252xf32>
    %27 = arith.addf %18, %26 : vector<16x252xf32>
    %c0_6 = arith.constant 0 : index
    %c0_7 = arith.constant 0 : index
    %28 = vector.load %arg3[%c0_6, %c0_7] : memref<32x13xf32, #tpu.memory_space<vmem>>, vector<16x1xf32>
    %29 = vector.broadcast %28 : vector<16x1xf32> to vector<16x252xf32>
    %30 = arith.addf %27, %29 : vector<16x252xf32>
    %31 = arith.negf %30 : vector<16x252xf32>
    %32 = math.exp %31 : vector<16x252xf32>
    %cst = arith.constant 1.000000e+00 : f32
    %33 = vector.broadcast %cst : f32 to vector<16x252xf32>
    %34 = arith.addf %33, %32 : vector<16x252xf32>
    %35 = arith.divf %33, %34 : vector<16x252xf32>
    %36 = arith.mulf %30, %35 : vector<16x252xf32>
    %37 = arith.truncf %36 : vector<16x252xf32> to vector<16x252xbf16>
    %38 = vector.extract_strided_slice %37 {offsets = [0, 0], sizes = [16, 124], strides = [1, 1]} : vector<16x252xbf16> to vector<16x124xbf16>
    %39 = vector.extract_strided_slice %37 {offsets = [0, 126], sizes = [16, 124], strides = [1, 1]} : vector<16x252xbf16> to vector<16x124xbf16>
    %40 = tpu.concatenate %38, %39 in 1 : vector<16x124xbf16>, vector<16x124xbf16> -> vector<16x248xbf16>
    %c16 = arith.constant 16 : index
    %c0_8 = arith.constant 0 : index
    %41 = vector.load %arg2[%c16, %c0_8] : memref<240x128xbf16, #tpu.memory_space<vmem>>, vector<16x16xbf16>
    %cst_9 = arith.constant dense<0.000000e+00> : vector<16x248xf32>
    %42 = tpu.matmul %41, %40, %cst_9 {dimension_numbers = #tpu.dot_dimension_numbers<[1], [0], [0], [1], [0, 0, 1, 1], [], []>} : vector<16x16xbf16>, vector<16x248xbf16>, vector<16x248xf32> -> vector<16x248xf32>
    %43 = vector.extract_strided_slice %37 {offsets = [0, 1], sizes = [16, 124], strides = [1, 1]} : vector<16x252xbf16> to vector<16x124xbf16>
    %44 = vector.extract_strided_slice %37 {offsets = [0, 127], sizes = [16, 124], strides = [1, 1]} : vector<16x252xbf16> to vector<16x124xbf16>
    %45 = tpu.concatenate %43, %44 in 1 : vector<16x124xbf16>, vector<16x124xbf16> -> vector<16x248xbf16>
    %c16_10 = arith.constant 16 : index
    %c16_11 = arith.constant 16 : index
    %46 = vector.load %arg2[%c16_10, %c16_11] : memref<240x128xbf16, #tpu.memory_space<vmem>>, vector<16x16xbf16>
    %cst_12 = arith.constant dense<0.000000e+00> : vector<16x248xf32>
    %47 = tpu.matmul %46, %45, %cst_12 {dimension_numbers = #tpu.dot_dimension_numbers<[1], [0], [0], [1], [0, 0, 1, 1], [], []>} : vector<16x16xbf16>, vector<16x248xbf16>, vector<16x248xf32> -> vector<16x248xf32>
    %48 = arith.addf %42, %47 : vector<16x248xf32>
    %49 = vector.extract_strided_slice %37 {offsets = [0, 2], sizes = [16, 124], strides = [1, 1]} : vector<16x252xbf16> to vector<16x124xbf16>
    %50 = vector.extract_strided_slice %37 {offsets = [0, 128], sizes = [16, 124], strides = [1, 1]} : vector<16x252xbf16> to vector<16x124xbf16>
    %51 = tpu.concatenate %49, %50 in 1 : vector<16x124xbf16>, vector<16x124xbf16> -> vector<16x248xbf16>
    %c16_13 = arith.constant 16 : index
    %c32 = arith.constant 32 : index
    %52 = vector.load %arg2[%c16_13, %c32] : memref<240x128xbf16, #tpu.memory_space<vmem>>, vector<16x16xbf16>
    %cst_14 = arith.constant dense<0.000000e+00> : vector<16x248xf32>
    %53 = tpu.matmul %52, %51, %cst_14 {dimension_numbers = #tpu.dot_dimension_numbers<[1], [0], [0], [1], [0, 0, 1, 1], [], []>} : vector<16x16xbf16>, vector<16x248xbf16>, vector<16x248xf32> -> vector<16x248xf32>
    %54 = arith.addf %48, %53 : vector<16x248xf32>
    %c0_15 = arith.constant 0 : index
    %c1_16 = arith.constant 1 : index
    %55 = vector.load %arg3[%c0_15, %c1_16] : memref<32x13xf32, #tpu.memory_space<vmem>>, vector<16x1xf32>
    %56 = vector.broadcast %55 : vector<16x1xf32> to vector<16x248xf32>
    %57 = arith.addf %54, %56 : vector<16x248xf32>
    %58 = arith.negf %57 : vector<16x248xf32>
    %59 = math.exp %58 : vector<16x248xf32>
    %cst_17 = arith.constant 1.000000e+00 : f32
    %60 = vector.broadcast %cst_17 : f32 to vector<16x248xf32>
    %61 = arith.addf %60, %59 : vector<16x248xf32>
    %62 = arith.divf %60, %61 : vector<16x248xf32>
    %63 = arith.mulf %57, %62 : vector<16x248xf32>
    %64 = arith.truncf %63 : vector<16x248xf32> to vector<16x248xbf16>
    %65 = vector.extract_strided_slice %64 {offsets = [0, 0], sizes = [16, 122], strides = [1, 1]} : vector<16x248xbf16> to vector<16x122xbf16>
    %66 = vector.extract_strided_slice %64 {offsets = [0, 124], sizes = [16, 122], strides = [1, 1]} : vector<16x248xbf16> to vector<16x122xbf16>
    %67 = tpu.concatenate %65, %66 in 1 : vector<16x122xbf16>, vector<16x122xbf16> -> vector<16x244xbf16>
    %c32_18 = arith.constant 32 : index
    %c0_19 = arith.constant 0 : index
    %68 = vector.load %arg2[%c32_18, %c0_19] : memref<240x128xbf16, #tpu.memory_space<vmem>>, vector<16x16xbf16>
    %cst_20 = arith.constant dense<0.000000e+00> : vector<16x244xf32>
    %69 = tpu.matmul %68, %67, %cst_20 {dimension_numbers = #tpu.dot_dimension_numbers<[1], [0], [0], [1], [0, 0, 1, 1], [], []>} : vector<16x16xbf16>, vector<16x244xbf16>, vector<16x244xf32> -> vector<16x244xf32>
    %70 = vector.extract_strided_slice %64 {offsets = [0, 1], sizes = [16, 122], strides = [1, 1]} : vector<16x248xbf16> to vector<16x122xbf16>
    %71 = vector.extract_strided_slice %64 {offsets = [0, 125], sizes = [16, 122], strides = [1, 1]} : vector<16x248xbf16> to vector<16x122xbf16>
    %72 = tpu.concatenate %70, %71 in 1 : vector<16x122xbf16>, vector<16x122xbf16> -> vector<16x244xbf16>
    %c32_21 = arith.constant 32 : index
    %c16_22 = arith.constant 16 : index
    %73 = vector.load %arg2[%c32_21, %c16_22] : memref<240x128xbf16, #tpu.memory_space<vmem>>, vector<16x16xbf16>
    %cst_23 = arith.constant dense<0.000000e+00> : vector<16x244xf32>
    %74 = tpu.matmul %73, %72, %cst_23 {dimension_numbers = #tpu.dot_dimension_numbers<[1], [0], [0], [1], [0, 0, 1, 1], [], []>} : vector<16x16xbf16>, vector<16x244xbf16>, vector<16x244xf32> -> vector<16x244xf32>
    %75 = arith.addf %69, %74 : vector<16x244xf32>
    %76 = vector.extract_strided_slice %64 {offsets = [0, 2], sizes = [16, 122], strides = [1, 1]} : vector<16x248xbf16> to vector<16x122xbf16>
    %77 = vector.extract_strided_slice %64 {offsets = [0, 126], sizes = [16, 122], strides = [1, 1]} : vector<16x248xbf16> to vector<16x122xbf16>
    %78 = tpu.concatenate %76, %77 in 1 : vector<16x122xbf16>, vector<16x122xbf16> -> vector<16x244xbf16>
    %c32_24 = arith.constant 32 : index
    %c32_25 = arith.constant 32 : index
    %79 = vector.load %arg2[%c32_24, %c32_25] : memref<240x128xbf16, #tpu.memory_space<vmem>>, vector<16x16xbf16>
    %cst_26 = arith.constant dense<0.000000e+00> : vector<16x244xf32>
    %80 = tpu.matmul %79, %78, %cst_26 {dimension_numbers = #tpu.dot_dimension_numbers<[1], [0], [0], [1], [0, 0, 1, 1], [], []>} : vector<16x16xbf16>, vector<16x244xbf16>, vector<16x244xf32> -> vector<16x244xf32>
    %81 = arith.addf %75, %80 : vector<16x244xf32>
    %c0_27 = arith.constant 0 : index
    %c2_28 = arith.constant 2 : index
    %82 = vector.load %arg3[%c0_27, %c2_28] : memref<32x13xf32, #tpu.memory_space<vmem>>, vector<16x1xf32>
    %83 = vector.broadcast %82 : vector<16x1xf32> to vector<16x244xf32>
    %84 = arith.addf %81, %83 : vector<16x244xf32>
    %85 = arith.negf %84 : vector<16x244xf32>
    %86 = math.exp %85 : vector<16x244xf32>
    %cst_29 = arith.constant 1.000000e+00 : f32
    %87 = vector.broadcast %cst_29 : f32 to vector<16x244xf32>
    %88 = arith.addf %87, %86 : vector<16x244xf32>
    %89 = arith.divf %87, %88 : vector<16x244xf32>
    %90 = arith.mulf %84, %89 : vector<16x244xf32>
    %91 = arith.truncf %90 : vector<16x244xf32> to vector<16x244xbf16>
    %92 = vector.extract_strided_slice %91 {offsets = [0, 0], sizes = [16, 120], strides = [1, 1]} : vector<16x244xbf16> to vector<16x120xbf16>
    %93 = vector.extract_strided_slice %91 {offsets = [0, 122], sizes = [16, 120], strides = [1, 1]} : vector<16x244xbf16> to vector<16x120xbf16>
    %94 = tpu.concatenate %92, %93 in 1 : vector<16x120xbf16>, vector<16x120xbf16> -> vector<16x240xbf16>
    %c48 = arith.constant 48 : index
    %c0_30 = arith.constant 0 : index
    %95 = vector.load %arg2[%c48, %c0_30] : memref<240x128xbf16, #tpu.memory_space<vmem>>, vector<16x16xbf16>
    %cst_31 = arith.constant dense<0.000000e+00> : vector<16x240xf32>
    %96 = tpu.matmul %95, %94, %cst_31 {dimension_numbers = #tpu.dot_dimension_numbers<[1], [0], [0], [1], [0, 0, 1, 1], [], []>} : vector<16x16xbf16>, vector<16x240xbf16>, vector<16x240xf32> -> vector<16x240xf32>
    %97 = vector.extract_strided_slice %91 {offsets = [0, 1], sizes = [16, 120], strides = [1, 1]} : vector<16x244xbf16> to vector<16x120xbf16>
    %98 = vector.extract_strided_slice %91 {offsets = [0, 123], sizes = [16, 120], strides = [1, 1]} : vector<16x244xbf16> to vector<16x120xbf16>
    %99 = tpu.concatenate %97, %98 in 1 : vector<16x120xbf16>, vector<16x120xbf16> -> vector<16x240xbf16>
    %c48_32 = arith.constant 48 : index
    %c16_33 = arith.constant 16 : index
    %100 = vector.load %arg2[%c48_32, %c16_33] : memref<240x128xbf16, #tpu.memory_space<vmem>>, vector<16x16xbf16>
    %cst_34 = arith.constant dense<0.000000e+00> : vector<16x240xf32>
    %101 = tpu.matmul %100, %99, %cst_34 {dimension_numbers = #tpu.dot_dimension_numbers<[1], [0], [0], [1], [0, 0, 1, 1], [], []>} : vector<16x16xbf16>, vector<16x240xbf16>, vector<16x240xf32> -> vector<16x240xf32>
    %102 = arith.addf %96, %101 : vector<16x240xf32>
    %103 = vector.extract_strided_slice %91 {offsets = [0, 2], sizes = [16, 120], strides = [1, 1]} : vector<16x244xbf16> to vector<16x120xbf16>
    %104 = vector.extract_strided_slice %91 {offsets = [0, 124], sizes = [16, 120], strides = [1, 1]} : vector<16x244xbf16> to vector<16x120xbf16>
    %105 = tpu.concatenate %103, %104 in 1 : vector<16x120xbf16>, vector<16x120xbf16> -> vector<16x240xbf16>
    %c48_35 = arith.constant 48 : index
    %c32_36 = arith.constant 32 : index
    %106 = vector.load %arg2[%c48_35, %c32_36] : memref<240x128xbf16, #tpu.memory_space<vmem>>, vector<16x16xbf16>
    %cst_37 = arith.constant dense<0.000000e+00> : vector<16x240xf32>
    %107 = tpu.matmul %106, %105, %cst_37 {dimension_numbers = #tpu.dot_dimension_numbers<[1], [0], [0], [1], [0, 0, 1, 1], [], []>} : vector<16x16xbf16>, vector<16x240xbf16>, vector<16x240xf32> -> vector<16x240xf32>
    %108 = arith.addf %102, %107 : vector<16x240xf32>
    %c0_38 = arith.constant 0 : index
    %c3 = arith.constant 3 : index
    %109 = vector.load %arg3[%c0_38, %c3] : memref<32x13xf32, #tpu.memory_space<vmem>>, vector<16x1xf32>
    %110 = vector.broadcast %109 : vector<16x1xf32> to vector<16x240xf32>
    %111 = arith.addf %108, %110 : vector<16x240xf32>
    %112 = arith.negf %111 : vector<16x240xf32>
    %113 = math.exp %112 : vector<16x240xf32>
    %cst_39 = arith.constant 1.000000e+00 : f32
    %114 = vector.broadcast %cst_39 : f32 to vector<16x240xf32>
    %115 = arith.addf %114, %113 : vector<16x240xf32>
    %116 = arith.divf %114, %115 : vector<16x240xf32>
    %117 = arith.mulf %111, %116 : vector<16x240xf32>
    %118 = arith.truncf %117 : vector<16x240xf32> to vector<16x240xbf16>
    %119 = vector.extract_strided_slice %118 {offsets = [0, 0], sizes = [16, 118], strides = [1, 1]} : vector<16x240xbf16> to vector<16x118xbf16>
    %120 = vector.extract_strided_slice %118 {offsets = [0, 120], sizes = [16, 118], strides = [1, 1]} : vector<16x240xbf16> to vector<16x118xbf16>
    %121 = tpu.concatenate %119, %120 in 1 : vector<16x118xbf16>, vector<16x118xbf16> -> vector<16x236xbf16>
    %c64 = arith.constant 64 : index
    %c0_40 = arith.constant 0 : index
    %122 = vector.load %arg2[%c64, %c0_40] : memref<240x128xbf16, #tpu.memory_space<vmem>>, vector<16x16xbf16>
    %cst_41 = arith.constant dense<0.000000e+00> : vector<16x236xf32>
    %123 = tpu.matmul %122, %121, %cst_41 {dimension_numbers = #tpu.dot_dimension_numbers<[1], [0], [0], [1], [0, 0, 1, 1], [], []>} : vector<16x16xbf16>, vector<16x236xbf16>, vector<16x236xf32> -> vector<16x236xf32>
    %124 = vector.extract_strided_slice %118 {offsets = [0, 1], sizes = [16, 118], strides = [1, 1]} : vector<16x240xbf16> to vector<16x118xbf16>
    %125 = vector.extract_strided_slice %118 {offsets = [0, 121], sizes = [16, 118], strides = [1, 1]} : vector<16x240xbf16> to vector<16x118xbf16>
    %126 = tpu.concatenate %124, %125 in 1 : vector<16x118xbf16>, vector<16x118xbf16> -> vector<16x236xbf16>
    %c64_42 = arith.constant 64 : index
    %c16_43 = arith.constant 16 : index
    %127 = vector.load %arg2[%c64_42, %c16_43] : memref<240x128xbf16, #tpu.memory_space<vmem>>, vector<16x16xbf16>
    %cst_44 = arith.constant dense<0.000000e+00> : vector<16x236xf32>
    %128 = tpu.matmul %127, %126, %cst_44 {dimension_numbers = #tpu.dot_dimension_numbers<[1], [0], [0], [1], [0, 0, 1, 1], [], []>} : vector<16x16xbf16>, vector<16x236xbf16>, vector<16x236xf32> -> vector<16x236xf32>
    %129 = arith.addf %123, %128 : vector<16x236xf32>
    %130 = vector.extract_strided_slice %118 {offsets = [0, 2], sizes = [16, 118], strides = [1, 1]} : vector<16x240xbf16> to vector<16x118xbf16>
    %131 = vector.extract_strided_slice %118 {offsets = [0, 122], sizes = [16, 118], strides = [1, 1]} : vector<16x240xbf16> to vector<16x118xbf16>
    %132 = tpu.concatenate %130, %131 in 1 : vector<16x118xbf16>, vector<16x118xbf16> -> vector<16x236xbf16>
    %c64_45 = arith.constant 64 : index
    %c32_46 = arith.constant 32 : index
    %133 = vector.load %arg2[%c64_45, %c32_46] : memref<240x128xbf16, #tpu.memory_space<vmem>>, vector<16x16xbf16>
    %cst_47 = arith.constant dense<0.000000e+00> : vector<16x236xf32>
    %134 = tpu.matmul %133, %132, %cst_47 {dimension_numbers = #tpu.dot_dimension_numbers<[1], [0], [0], [1], [0, 0, 1, 1], [], []>} : vector<16x16xbf16>, vector<16x236xbf16>, vector<16x236xf32> -> vector<16x236xf32>
    %135 = arith.addf %129, %134 : vector<16x236xf32>
    %136 = tpu.iota {dimensions = array<i32: 0>} : vector<118x59xi32>
    %137 = tpu.iota {dimensions = array<i32: 1>} : vector<118x59xi32>
    %c2_i32 = arith.constant 2 : i32
    %138 = vector.broadcast %c2_i32 : i32 to vector<118x59xi32>
    %139 = arith.muli %138, %137 : vector<118x59xi32>
    %140 = arith.cmpi eq, %136, %139 : vector<118x59xi32>
    %141 = arith.extui %140 : vector<118x59xi1> to vector<118x59xi32>
    %142 = arith.sitofp %141 : vector<118x59xi32> to vector<118x59xf32>
    %143 = vector.extract_strided_slice %135 {offsets = [0, 0], sizes = [16, 118], strides = [1, 1]} : vector<16x236xf32> to vector<16x118xf32>
    %cst_48 = arith.constant dense<0.000000e+00> : vector<16x59xf32>
    %144 = tpu.matmul %143, %142, %cst_48 {dimension_numbers = #tpu.dot_dimension_numbers<[1], [0], [0], [1], [0, 0, 1, 1], [], []>} : vector<16x118xf32>, vector<118x59xf32>, vector<16x59xf32> -> vector<16x59xf32>
    %145 = vector.extract_strided_slice %135 {offsets = [0, 118], sizes = [16, 118], strides = [1, 1]} : vector<16x236xf32> to vector<16x118xf32>
    %cst_49 = arith.constant dense<0.000000e+00> : vector<16x59xf32>
    %146 = tpu.matmul %145, %142, %cst_49 {dimension_numbers = #tpu.dot_dimension_numbers<[1], [0], [0], [1], [0, 0, 1, 1], [], []>} : vector<16x118xf32>, vector<118x59xf32>, vector<16x59xf32> -> vector<16x59xf32>
    %147 = tpu.concatenate %144, %146 in 1 : vector<16x59xf32>, vector<16x59xf32> -> vector<16x118xf32>
    %c0_50 = arith.constant 0 : index
    %c4 = arith.constant 4 : index
    %148 = vector.load %arg3[%c0_50, %c4] : memref<32x13xf32, #tpu.memory_space<vmem>>, vector<16x1xf32>
    %149 = vector.broadcast %148 : vector<16x1xf32> to vector<16x118xf32>
    %150 = arith.addf %147, %149 : vector<16x118xf32>
    %151 = arith.negf %150 : vector<16x118xf32>
    %152 = math.exp %151 : vector<16x118xf32>
    %cst_51 = arith.constant 1.000000e+00 : f32
    %153 = vector.broadcast %cst_51 : f32 to vector<16x118xf32>
    %154 = arith.addf %153, %152 : vector<16x118xf32>
    %155 = arith.divf %153, %154 : vector<16x118xf32>
    %156 = arith.mulf %150, %155 : vector<16x118xf32>
    %157 = arith.truncf %156 : vector<16x118xf32> to vector<16x118xbf16>
    %158 = vector.extract_strided_slice %157 {offsets = [0, 0], sizes = [16, 57], strides = [1, 1]} : vector<16x118xbf16> to vector<16x57xbf16>
    %159 = vector.extract_strided_slice %157 {offsets = [0, 59], sizes = [16, 57], strides = [1, 1]} : vector<16x118xbf16> to vector<16x57xbf16>
    %160 = tpu.concatenate %158, %159 in 1 : vector<16x57xbf16>, vector<16x57xbf16> -> vector<16x114xbf16>
    %c80 = arith.constant 80 : index
    %c0_52 = arith.constant 0 : index
    %161 = vector.load %arg2[%c80, %c0_52] : memref<240x128xbf16, #tpu.memory_space<vmem>>, vector<32x16xbf16>
    %cst_53 = arith.constant dense<0.000000e+00> : vector<32x114xf32>
    %162 = tpu.matmul %161, %160, %cst_53 {dimension_numbers = #tpu.dot_dimension_numbers<[1], [0], [0], [1], [0, 0, 1, 1], [], []>} : vector<32x16xbf16>, vector<16x114xbf16>, vector<32x114xf32> -> vector<32x114xf32>
    %163 = vector.extract_strided_slice %157 {offsets = [0, 1], sizes = [16, 57], strides = [1, 1]} : vector<16x118xbf16> to vector<16x57xbf16>
    %164 = vector.extract_strided_slice %157 {offsets = [0, 60], sizes = [16, 57], strides = [1, 1]} : vector<16x118xbf16> to vector<16x57xbf16>
    %165 = tpu.concatenate %163, %164 in 1 : vector<16x57xbf16>, vector<16x57xbf16> -> vector<16x114xbf16>
    %c80_54 = arith.constant 80 : index
    %c16_55 = arith.constant 16 : index
    %166 = vector.load %arg2[%c80_54, %c16_55] : memref<240x128xbf16, #tpu.memory_space<vmem>>, vector<32x16xbf16>
    %cst_56 = arith.constant dense<0.000000e+00> : vector<32x114xf32>
    %167 = tpu.matmul %166, %165, %cst_56 {dimension_numbers = #tpu.dot_dimension_numbers<[1], [0], [0], [1], [0, 0, 1, 1], [], []>} : vector<32x16xbf16>, vector<16x114xbf16>, vector<32x114xf32> -> vector<32x114xf32>
    %168 = arith.addf %162, %167 : vector<32x114xf32>
    %169 = vector.extract_strided_slice %157 {offsets = [0, 2], sizes = [16, 57], strides = [1, 1]} : vector<16x118xbf16> to vector<16x57xbf16>
    %170 = vector.extract_strided_slice %157 {offsets = [0, 61], sizes = [16, 57], strides = [1, 1]} : vector<16x118xbf16> to vector<16x57xbf16>
    %171 = tpu.concatenate %169, %170 in 1 : vector<16x57xbf16>, vector<16x57xbf16> -> vector<16x114xbf16>
    %c80_57 = arith.constant 80 : index
    %c32_58 = arith.constant 32 : index
    %172 = vector.load %arg2[%c80_57, %c32_58] : memref<240x128xbf16, #tpu.memory_space<vmem>>, vector<32x16xbf16>
    %cst_59 = arith.constant dense<0.000000e+00> : vector<32x114xf32>
    %173 = tpu.matmul %172, %171, %cst_59 {dimension_numbers = #tpu.dot_dimension_numbers<[1], [0], [0], [1], [0, 0, 1, 1], [], []>} : vector<32x16xbf16>, vector<16x114xbf16>, vector<32x114xf32> -> vector<32x114xf32>
    %174 = arith.addf %168, %173 : vector<32x114xf32>
    %c0_60 = arith.constant 0 : index
    %c5 = arith.constant 5 : index
    %175 = vector.load %arg3[%c0_60, %c5] : memref<32x13xf32, #tpu.memory_space<vmem>>, vector<32x1xf32>
    %176 = vector.broadcast %175 : vector<32x1xf32> to vector<32x114xf32>
    %177 = arith.addf %174, %176 : vector<32x114xf32>
    %178 = arith.negf %177 : vector<32x114xf32>
    %179 = math.exp %178 : vector<32x114xf32>
    %cst_61 = arith.constant 1.000000e+00 : f32
    %180 = vector.broadcast %cst_61 : f32 to vector<32x114xf32>
    %181 = arith.addf %180, %179 : vector<32x114xf32>
    %182 = arith.divf %180, %181 : vector<32x114xf32>
    %183 = arith.mulf %177, %182 : vector<32x114xf32>
    %184 = arith.truncf %183 : vector<32x114xf32> to vector<32x114xbf16>
    %185 = vector.extract_strided_slice %184 {offsets = [0, 0], sizes = [32, 55], strides = [1, 1]} : vector<32x114xbf16> to vector<32x55xbf16>
    %186 = vector.extract_strided_slice %184 {offsets = [0, 57], sizes = [32, 55], strides = [1, 1]} : vector<32x114xbf16> to vector<32x55xbf16>
    %187 = tpu.concatenate %185, %186 in 1 : vector<32x55xbf16>, vector<32x55xbf16> -> vector<32x110xbf16>
    %c112 = arith.constant 112 : index
    %c0_62 = arith.constant 0 : index
    %188 = vector.load %arg2[%c112, %c0_62] : memref<240x128xbf16, #tpu.memory_space<vmem>>, vector<32x32xbf16>
    %cst_63 = arith.constant dense<0.000000e+00> : vector<32x110xf32>
    %189 = tpu.matmul %188, %187, %cst_63 {dimension_numbers = #tpu.dot_dimension_numbers<[1], [0], [0], [1], [0, 0, 1, 1], [], []>} : vector<32x32xbf16>, vector<32x110xbf16>, vector<32x110xf32> -> vector<32x110xf32>
    %190 = vector.extract_strided_slice %184 {offsets = [0, 1], sizes = [32, 55], strides = [1, 1]} : vector<32x114xbf16> to vector<32x55xbf16>
    %191 = vector.extract_strided_slice %184 {offsets = [0, 58], sizes = [32, 55], strides = [1, 1]} : vector<32x114xbf16> to vector<32x55xbf16>
    %192 = tpu.concatenate %190, %191 in 1 : vector<32x55xbf16>, vector<32x55xbf16> -> vector<32x110xbf16>
    %c112_64 = arith.constant 112 : index
    %c32_65 = arith.constant 32 : index
    %193 = vector.load %arg2[%c112_64, %c32_65] : memref<240x128xbf16, #tpu.memory_space<vmem>>, vector<32x32xbf16>
    %cst_66 = arith.constant dense<0.000000e+00> : vector<32x110xf32>
    %194 = tpu.matmul %193, %192, %cst_66 {dimension_numbers = #tpu.dot_dimension_numbers<[1], [0], [0], [1], [0, 0, 1, 1], [], []>} : vector<32x32xbf16>, vector<32x110xbf16>, vector<32x110xf32> -> vector<32x110xf32>
    %195 = arith.addf %189, %194 : vector<32x110xf32>
    %196 = vector.extract_strided_slice %184 {offsets = [0, 2], sizes = [32, 55], strides = [1, 1]} : vector<32x114xbf16> to vector<32x55xbf16>
    %197 = vector.extract_strided_slice %184 {offsets = [0, 59], sizes = [32, 55], strides = [1, 1]} : vector<32x114xbf16> to vector<32x55xbf16>
    %198 = tpu.concatenate %196, %197 in 1 : vector<32x55xbf16>, vector<32x55xbf16> -> vector<32x110xbf16>
    %c112_67 = arith.constant 112 : index
    %c64_68 = arith.constant 64 : index
    %199 = vector.load %arg2[%c112_67, %c64_68] : memref<240x128xbf16, #tpu.memory_space<vmem>>, vector<32x32xbf16>
    %cst_69 = arith.constant dense<0.000000e+00> : vector<32x110xf32>
    %200 = tpu.matmul %199, %198, %cst_69 {dimension_numbers = #tpu.dot_dimension_numbers<[1], [0], [0], [1], [0, 0, 1, 1], [], []>} : vector<32x32xbf16>, vector<32x110xbf16>, vector<32x110xf32> -> vector<32x110xf32>
    %201 = arith.addf %195, %200 : vector<32x110xf32>
    %c0_70 = arith.constant 0 : index
    %c6 = arith.constant 6 : index
    %202 = vector.load %arg3[%c0_70, %c6] : memref<32x13xf32, #tpu.memory_space<vmem>>, vector<32x1xf32>
    %203 = vector.broadcast %202 : vector<32x1xf32> to vector<32x110xf32>
    %204 = arith.addf %201, %203 : vector<32x110xf32>
    %205 = arith.negf %204 : vector<32x110xf32>
    %206 = math.exp %205 : vector<32x110xf32>
    %cst_71 = arith.constant 1.000000e+00 : f32
    %207 = vector.broadcast %cst_71 : f32 to vector<32x110xf32>
    %208 = arith.addf %207, %206 : vector<32x110xf32>
    %209 = arith.divf %207, %208 : vector<32x110xf32>
    %210 = arith.mulf %204, %209 : vector<32x110xf32>
    %211 = arith.truncf %210 : vector<32x110xf32> to vector<32x110xbf16>
    %212 = vector.extract_strided_slice %211 {offsets = [0, 0], sizes = [32, 53], strides = [1, 1]} : vector<32x110xbf16> to vector<32x53xbf16>
    %213 = vector.extract_strided_slice %211 {offsets = [0, 55], sizes = [32, 53], strides = [1, 1]} : vector<32x110xbf16> to vector<32x53xbf16>
    %214 = tpu.concatenate %212, %213 in 1 : vector<32x53xbf16>, vector<32x53xbf16> -> vector<32x106xbf16>
    %c144 = arith.constant 144 : index
    %c0_72 = arith.constant 0 : index
    %215 = vector.load %arg2[%c144, %c0_72] : memref<240x128xbf16, #tpu.memory_space<vmem>>, vector<16x32xbf16>
    %cst_73 = arith.constant dense<0.000000e+00> : vector<16x106xf32>
    %216 = tpu.matmul %215, %214, %cst_73 {dimension_numbers = #tpu.dot_dimension_numbers<[1], [0], [0], [1], [0, 0, 1, 1], [], []>} : vector<16x32xbf16>, vector<32x106xbf16>, vector<16x106xf32> -> vector<16x106xf32>
    %217 = vector.extract_strided_slice %211 {offsets = [0, 1], sizes = [32, 53], strides = [1, 1]} : vector<32x110xbf16> to vector<32x53xbf16>
    %218 = vector.extract_strided_slice %211 {offsets = [0, 56], sizes = [32, 53], strides = [1, 1]} : vector<32x110xbf16> to vector<32x53xbf16>
    %219 = tpu.concatenate %217, %218 in 1 : vector<32x53xbf16>, vector<32x53xbf16> -> vector<32x106xbf16>
    %c144_74 = arith.constant 144 : index
    %c32_75 = arith.constant 32 : index
    %220 = vector.load %arg2[%c144_74, %c32_75] : memref<240x128xbf16, #tpu.memory_space<vmem>>, vector<16x32xbf16>
    %cst_76 = arith.constant dense<0.000000e+00> : vector<16x106xf32>
    %221 = tpu.matmul %220, %219, %cst_76 {dimension_numbers = #tpu.dot_dimension_numbers<[1], [0], [0], [1], [0, 0, 1, 1], [], []>} : vector<16x32xbf16>, vector<32x106xbf16>, vector<16x106xf32> -> vector<16x106xf32>
    %222 = arith.addf %216, %221 : vector<16x106xf32>
    %223 = vector.extract_strided_slice %211 {offsets = [0, 2], sizes = [32, 53], strides = [1, 1]} : vector<32x110xbf16> to vector<32x53xbf16>
    %224 = vector.extract_strided_slice %211 {offsets = [0, 57], sizes = [32, 53], strides = [1, 1]} : vector<32x110xbf16> to vector<32x53xbf16>
    %225 = tpu.concatenate %223, %224 in 1 : vector<32x53xbf16>, vector<32x53xbf16> -> vector<32x106xbf16>
    %c144_77 = arith.constant 144 : index
    %c64_78 = arith.constant 64 : index
    %226 = vector.load %arg2[%c144_77, %c64_78] : memref<240x128xbf16, #tpu.memory_space<vmem>>, vector<16x32xbf16>
    %cst_79 = arith.constant dense<0.000000e+00> : vector<16x106xf32>
    %227 = tpu.matmul %226, %225, %cst_79 {dimension_numbers = #tpu.dot_dimension_numbers<[1], [0], [0], [1], [0, 0, 1, 1], [], []>} : vector<16x32xbf16>, vector<32x106xbf16>, vector<16x106xf32> -> vector<16x106xf32>
    %228 = arith.addf %222, %227 : vector<16x106xf32>
    %229 = tpu.iota {dimensions = array<i32: 0>} : vector<53x27xi32>
    %230 = tpu.iota {dimensions = array<i32: 1>} : vector<53x27xi32>
    %c2_i32_80 = arith.constant 2 : i32
    %231 = vector.broadcast %c2_i32_80 : i32 to vector<53x27xi32>
    %232 = arith.muli %231, %230 : vector<53x27xi32>
    %233 = arith.cmpi eq, %229, %232 : vector<53x27xi32>
    %234 = arith.extui %233 : vector<53x27xi1> to vector<53x27xi32>
    %235 = arith.sitofp %234 : vector<53x27xi32> to vector<53x27xf32>
    %236 = vector.extract_strided_slice %228 {offsets = [0, 0], sizes = [16, 53], strides = [1, 1]} : vector<16x106xf32> to vector<16x53xf32>
    %cst_81 = arith.constant dense<0.000000e+00> : vector<16x27xf32>
    %237 = tpu.matmul %236, %235, %cst_81 {dimension_numbers = #tpu.dot_dimension_numbers<[1], [0], [0], [1], [0, 0, 1, 1], [], []>} : vector<16x53xf32>, vector<53x27xf32>, vector<16x27xf32> -> vector<16x27xf32>
    %238 = vector.extract_strided_slice %228 {offsets = [0, 53], sizes = [16, 53], strides = [1, 1]} : vector<16x106xf32> to vector<16x53xf32>
    %cst_82 = arith.constant dense<0.000000e+00> : vector<16x27xf32>
    %239 = tpu.matmul %238, %235, %cst_82 {dimension_numbers = #tpu.dot_dimension_numbers<[1], [0], [0], [1], [0, 0, 1, 1], [], []>} : vector<16x53xf32>, vector<53x27xf32>, vector<16x27xf32> -> vector<16x27xf32>
    %240 = tpu.concatenate %237, %239 in 1 : vector<16x27xf32>, vector<16x27xf32> -> vector<16x54xf32>
    %c0_83 = arith.constant 0 : index
    %c7 = arith.constant 7 : index
    %241 = vector.load %arg3[%c0_83, %c7] : memref<32x13xf32, #tpu.memory_space<vmem>>, vector<16x1xf32>
    %242 = vector.broadcast %241 : vector<16x1xf32> to vector<16x54xf32>
    %243 = arith.addf %240, %242 : vector<16x54xf32>
    %244 = arith.negf %243 : vector<16x54xf32>
    %245 = math.exp %244 : vector<16x54xf32>
    %cst_84 = arith.constant 1.000000e+00 : f32
    %246 = vector.broadcast %cst_84 : f32 to vector<16x54xf32>
    %247 = arith.addf %246, %245 : vector<16x54xf32>
    %248 = arith.divf %246, %247 : vector<16x54xf32>
    %249 = arith.mulf %243, %248 : vector<16x54xf32>
    %250 = arith.truncf %249 : vector<16x54xf32> to vector<16x54xbf16>
    %251 = vector.extract_strided_slice %250 {offsets = [0, 0], sizes = [16, 25], strides = [1, 1]} : vector<16x54xbf16> to vector<16x25xbf16>
    %252 = vector.extract_strided_slice %250 {offsets = [0, 27], sizes = [16, 25], strides = [1, 1]} : vector<16x54xbf16> to vector<16x25xbf16>
    %253 = tpu.concatenate %251, %252 in 1 : vector<16x25xbf16>, vector<16x25xbf16> -> vector<16x50xbf16>
    %c160 = arith.constant 160 : index
    %c0_85 = arith.constant 0 : index
    %254 = vector.load %arg2[%c160, %c0_85] : memref<240x128xbf16, #tpu.memory_space<vmem>>, vector<8x16xbf16>
    %cst_86 = arith.constant dense<0.000000e+00> : vector<8x50xf32>
    %255 = tpu.matmul %254, %253, %cst_86 {dimension_numbers = #tpu.dot_dimension_numbers<[1], [0], [0], [1], [0, 0, 1, 1], [], []>} : vector<8x16xbf16>, vector<16x50xbf16>, vector<8x50xf32> -> vector<8x50xf32>
    %256 = vector.extract_strided_slice %250 {offsets = [0, 1], sizes = [16, 25], strides = [1, 1]} : vector<16x54xbf16> to vector<16x25xbf16>
    %257 = vector.extract_strided_slice %250 {offsets = [0, 28], sizes = [16, 25], strides = [1, 1]} : vector<16x54xbf16> to vector<16x25xbf16>
    %258 = tpu.concatenate %256, %257 in 1 : vector<16x25xbf16>, vector<16x25xbf16> -> vector<16x50xbf16>
    %c160_87 = arith.constant 160 : index
    %c16_88 = arith.constant 16 : index
    %259 = vector.load %arg2[%c160_87, %c16_88] : memref<240x128xbf16, #tpu.memory_space<vmem>>, vector<8x16xbf16>
    %cst_89 = arith.constant dense<0.000000e+00> : vector<8x50xf32>
    %260 = tpu.matmul %259, %258, %cst_89 {dimension_numbers = #tpu.dot_dimension_numbers<[1], [0], [0], [1], [0, 0, 1, 1], [], []>} : vector<8x16xbf16>, vector<16x50xbf16>, vector<8x50xf32> -> vector<8x50xf32>
    %261 = arith.addf %255, %260 : vector<8x50xf32>
    %262 = vector.extract_strided_slice %250 {offsets = [0, 2], sizes = [16, 25], strides = [1, 1]} : vector<16x54xbf16> to vector<16x25xbf16>
    %263 = vector.extract_strided_slice %250 {offsets = [0, 29], sizes = [16, 25], strides = [1, 1]} : vector<16x54xbf16> to vector<16x25xbf16>
    %264 = tpu.concatenate %262, %263 in 1 : vector<16x25xbf16>, vector<16x25xbf16> -> vector<16x50xbf16>
    %c160_90 = arith.constant 160 : index
    %c32_91 = arith.constant 32 : index
    %265 = vector.load %arg2[%c160_90, %c32_91] : memref<240x128xbf16, #tpu.memory_space<vmem>>, vector<8x16xbf16>
    %cst_92 = arith.constant dense<0.000000e+00> : vector<8x50xf32>
    %266 = tpu.matmul %265, %264, %cst_92 {dimension_numbers = #tpu.dot_dimension_numbers<[1], [0], [0], [1], [0, 0, 1, 1], [], []>} : vector<8x16xbf16>, vector<16x50xbf16>, vector<8x50xf32> -> vector<8x50xf32>
    %267 = arith.addf %261, %266 : vector<8x50xf32>
    %c0_93 = arith.constant 0 : index
    %c8 = arith.constant 8 : index
    %268 = vector.load %arg3[%c0_93, %c8] : memref<32x13xf32, #tpu.memory_space<vmem>>, vector<8x1xf32>
    %269 = vector.broadcast %268 : vector<8x1xf32> to vector<8x50xf32>
    %270 = arith.addf %267, %269 : vector<8x50xf32>
    %271 = arith.negf %270 : vector<8x50xf32>
    %272 = math.exp %271 : vector<8x50xf32>
    %cst_94 = arith.constant 1.000000e+00 : f32
    %273 = vector.broadcast %cst_94 : f32 to vector<8x50xf32>
    %274 = arith.addf %273, %272 : vector<8x50xf32>
    %275 = arith.divf %273, %274 : vector<8x50xf32>
    %276 = arith.mulf %270, %275 : vector<8x50xf32>
    %277 = arith.truncf %276 : vector<8x50xf32> to vector<8x50xbf16>
    %278 = vector.extract_strided_slice %277 {offsets = [0, 0], sizes = [8, 23], strides = [1, 1]} : vector<8x50xbf16> to vector<8x23xbf16>
    %279 = vector.extract_strided_slice %277 {offsets = [0, 25], sizes = [8, 23], strides = [1, 1]} : vector<8x50xbf16> to vector<8x23xbf16>
    %280 = tpu.concatenate %278, %279 in 1 : vector<8x23xbf16>, vector<8x23xbf16> -> vector<8x46xbf16>
    %c176 = arith.constant 176 : index
    %c0_95 = arith.constant 0 : index
    %281 = vector.load %arg2[%c176, %c0_95] : memref<240x128xbf16, #tpu.memory_space<vmem>>, vector<4x8xbf16>
    %cst_96 = arith.constant dense<0.000000e+00> : vector<4x46xf32>
    %282 = tpu.matmul %281, %280, %cst_96 {dimension_numbers = #tpu.dot_dimension_numbers<[1], [0], [0], [1], [0, 0, 1, 1], [], []>} : vector<4x8xbf16>, vector<8x46xbf16>, vector<4x46xf32> -> vector<4x46xf32>
    %283 = vector.extract_strided_slice %277 {offsets = [0, 1], sizes = [8, 23], strides = [1, 1]} : vector<8x50xbf16> to vector<8x23xbf16>
    %284 = vector.extract_strided_slice %277 {offsets = [0, 26], sizes = [8, 23], strides = [1, 1]} : vector<8x50xbf16> to vector<8x23xbf16>
    %285 = tpu.concatenate %283, %284 in 1 : vector<8x23xbf16>, vector<8x23xbf16> -> vector<8x46xbf16>
    %c176_97 = arith.constant 176 : index
    %c8_98 = arith.constant 8 : index
    %286 = vector.load %arg2[%c176_97, %c8_98] : memref<240x128xbf16, #tpu.memory_space<vmem>>, vector<4x8xbf16>
    %cst_99 = arith.constant dense<0.000000e+00> : vector<4x46xf32>
    %287 = tpu.matmul %286, %285, %cst_99 {dimension_numbers = #tpu.dot_dimension_numbers<[1], [0], [0], [1], [0, 0, 1, 1], [], []>} : vector<4x8xbf16>, vector<8x46xbf16>, vector<4x46xf32> -> vector<4x46xf32>
    %288 = arith.addf %282, %287 : vector<4x46xf32>
    %289 = vector.extract_strided_slice %277 {offsets = [0, 2], sizes = [8, 23], strides = [1, 1]} : vector<8x50xbf16> to vector<8x23xbf16>
    %290 = vector.extract_strided_slice %277 {offsets = [0, 27], sizes = [8, 23], strides = [1, 1]} : vector<8x50xbf16> to vector<8x23xbf16>
    %291 = tpu.concatenate %289, %290 in 1 : vector<8x23xbf16>, vector<8x23xbf16> -> vector<8x46xbf16>
    %c176_100 = arith.constant 176 : index
    %c16_101 = arith.constant 16 : index
    %292 = vector.load %arg2[%c176_100, %c16_101] : memref<240x128xbf16, #tpu.memory_space<vmem>>, vector<4x8xbf16>
    %cst_102 = arith.constant dense<0.000000e+00> : vector<4x46xf32>
    %293 = tpu.matmul %292, %291, %cst_102 {dimension_numbers = #tpu.dot_dimension_numbers<[1], [0], [0], [1], [0, 0, 1, 1], [], []>} : vector<4x8xbf16>, vector<8x46xbf16>, vector<4x46xf32> -> vector<4x46xf32>
    %294 = arith.addf %288, %293 : vector<4x46xf32>
    %c0_103 = arith.constant 0 : index
    %c9 = arith.constant 9 : index
    %295 = vector.load %arg3[%c0_103, %c9] : memref<32x13xf32, #tpu.memory_space<vmem>>, vector<4x1xf32>
    %296 = vector.broadcast %295 : vector<4x1xf32> to vector<4x46xf32>
    %297 = arith.addf %294, %296 : vector<4x46xf32>
    %298 = arith.negf %297 : vector<4x46xf32>
    %299 = math.exp %298 : vector<4x46xf32>
    %cst_104 = arith.constant 1.000000e+00 : f32
    %300 = vector.broadcast %cst_104 : f32 to vector<4x46xf32>
    %301 = arith.addf %300, %299 : vector<4x46xf32>
    %302 = arith.divf %300, %301 : vector<4x46xf32>
    %303 = arith.mulf %297, %302 : vector<4x46xf32>
    %304 = arith.truncf %303 : vector<4x46xf32> to vector<4x46xbf16>
    %305 = vector.extract_strided_slice %304 {offsets = [0, 0], sizes = [4, 21], strides = [1, 1]} : vector<4x46xbf16> to vector<4x21xbf16>
    %306 = vector.extract_strided_slice %304 {offsets = [0, 23], sizes = [4, 21], strides = [1, 1]} : vector<4x46xbf16> to vector<4x21xbf16>
    %307 = tpu.concatenate %305, %306 in 1 : vector<4x21xbf16>, vector<4x21xbf16> -> vector<4x42xbf16>
    %c192 = arith.constant 192 : index
    %c0_105 = arith.constant 0 : index
    %308 = vector.load %arg2[%c192, %c0_105] : memref<240x128xbf16, #tpu.memory_space<vmem>>, vector<2x4xbf16>
    %cst_106 = arith.constant dense<0.000000e+00> : vector<2x42xf32>
    %309 = tpu.matmul %308, %307, %cst_106 {dimension_numbers = #tpu.dot_dimension_numbers<[1], [0], [0], [1], [0, 0, 1, 1], [], []>} : vector<2x4xbf16>, vector<4x42xbf16>, vector<2x42xf32> -> vector<2x42xf32>
    %310 = vector.extract_strided_slice %304 {offsets = [0, 1], sizes = [4, 21], strides = [1, 1]} : vector<4x46xbf16> to vector<4x21xbf16>
    %311 = vector.extract_strided_slice %304 {offsets = [0, 24], sizes = [4, 21], strides = [1, 1]} : vector<4x46xbf16> to vector<4x21xbf16>
    %312 = tpu.concatenate %310, %311 in 1 : vector<4x21xbf16>, vector<4x21xbf16> -> vector<4x42xbf16>
    %c192_107 = arith.constant 192 : index
    %c4_108 = arith.constant 4 : index
    %313 = vector.load %arg2[%c192_107, %c4_108] : memref<240x128xbf16, #tpu.memory_space<vmem>>, vector<2x4xbf16>
    %cst_109 = arith.constant dense<0.000000e+00> : vector<2x42xf32>
    %314 = tpu.matmul %313, %312, %cst_109 {dimension_numbers = #tpu.dot_dimension_numbers<[1], [0], [0], [1], [0, 0, 1, 1], [], []>} : vector<2x4xbf16>, vector<4x42xbf16>, vector<2x42xf32> -> vector<2x42xf32>
    %315 = arith.addf %309, %314 : vector<2x42xf32>
    %316 = vector.extract_strided_slice %304 {offsets = [0, 2], sizes = [4, 21], strides = [1, 1]} : vector<4x46xbf16> to vector<4x21xbf16>
    %317 = vector.extract_strided_slice %304 {offsets = [0, 25], sizes = [4, 21], strides = [1, 1]} : vector<4x46xbf16> to vector<4x21xbf16>
    %318 = tpu.concatenate %316, %317 in 1 : vector<4x21xbf16>, vector<4x21xbf16> -> vector<4x42xbf16>
    %c192_110 = arith.constant 192 : index
    %c8_111 = arith.constant 8 : index
    %319 = vector.load %arg2[%c192_110, %c8_111] : memref<240x128xbf16, #tpu.memory_space<vmem>>, vector<2x4xbf16>
    %cst_112 = arith.constant dense<0.000000e+00> : vector<2x42xf32>
    %320 = tpu.matmul %319, %318, %cst_112 {dimension_numbers = #tpu.dot_dimension_numbers<[1], [0], [0], [1], [0, 0, 1, 1], [], []>} : vector<2x4xbf16>, vector<4x42xbf16>, vector<2x42xf32> -> vector<2x42xf32>
    %321 = arith.addf %315, %320 : vector<2x42xf32>
    %c0_113 = arith.constant 0 : index
    %c10 = arith.constant 10 : index
    %322 = vector.load %arg3[%c0_113, %c10] : memref<32x13xf32, #tpu.memory_space<vmem>>, vector<2x1xf32>
    %323 = vector.broadcast %322 : vector<2x1xf32> to vector<2x42xf32>
    %324 = arith.addf %321, %323 : vector<2x42xf32>
    %325 = arith.negf %324 : vector<2x42xf32>
    %326 = math.exp %325 : vector<2x42xf32>
    %cst_114 = arith.constant 1.000000e+00 : f32
    %327 = vector.broadcast %cst_114 : f32 to vector<2x42xf32>
    %328 = arith.addf %327, %326 : vector<2x42xf32>
    %329 = arith.divf %327, %328 : vector<2x42xf32>
    %330 = arith.mulf %324, %329 : vector<2x42xf32>
    %331 = arith.truncf %330 : vector<2x42xf32> to vector<2x42xbf16>
    %332 = vector.extract_strided_slice %331 {offsets = [0, 0], sizes = [2, 19], strides = [1, 1]} : vector<2x42xbf16> to vector<2x19xbf16>
    %333 = vector.extract_strided_slice %331 {offsets = [0, 21], sizes = [2, 19], strides = [1, 1]} : vector<2x42xbf16> to vector<2x19xbf16>
    %334 = tpu.concatenate %332, %333 in 1 : vector<2x19xbf16>, vector<2x19xbf16> -> vector<2x38xbf16>
    %c208 = arith.constant 208 : index
    %c0_115 = arith.constant 0 : index
    %335 = vector.load %arg2[%c208, %c0_115] : memref<240x128xbf16, #tpu.memory_space<vmem>>, vector<1x2xbf16>
    %cst_116 = arith.constant dense<0.000000e+00> : vector<1x38xf32>
    %336 = tpu.matmul %335, %334, %cst_116 {dimension_numbers = #tpu.dot_dimension_numbers<[1], [0], [0], [1], [0, 0, 1, 1], [], []>} : vector<1x2xbf16>, vector<2x38xbf16>, vector<1x38xf32> -> vector<1x38xf32>
    %337 = vector.extract_strided_slice %331 {offsets = [0, 1], sizes = [2, 19], strides = [1, 1]} : vector<2x42xbf16> to vector<2x19xbf16>
    %338 = vector.extract_strided_slice %331 {offsets = [0, 22], sizes = [2, 19], strides = [1, 1]} : vector<2x42xbf16> to vector<2x19xbf16>
    %339 = tpu.concatenate %337, %338 in 1 : vector<2x19xbf16>, vector<2x19xbf16> -> vector<2x38xbf16>
    %c208_117 = arith.constant 208 : index
    %c2_118 = arith.constant 2 : index
    %340 = vector.load %arg2[%c208_117, %c2_118] : memref<240x128xbf16, #tpu.memory_space<vmem>>, vector<1x2xbf16>
    %cst_119 = arith.constant dense<0.000000e+00> : vector<1x38xf32>
    %341 = tpu.matmul %340, %339, %cst_119 {dimension_numbers = #tpu.dot_dimension_numbers<[1], [0], [0], [1], [0, 0, 1, 1], [], []>} : vector<1x2xbf16>, vector<2x38xbf16>, vector<1x38xf32> -> vector<1x38xf32>
    %342 = arith.addf %336, %341 : vector<1x38xf32>
    %343 = vector.extract_strided_slice %331 {offsets = [0, 2], sizes = [2, 19], strides = [1, 1]} : vector<2x42xbf16> to vector<2x19xbf16>
    %344 = vector.extract_strided_slice %331 {offsets = [0, 23], sizes = [2, 19], strides = [1, 1]} : vector<2x42xbf16> to vector<2x19xbf16>
    %345 = tpu.concatenate %343, %344 in 1 : vector<2x19xbf16>, vector<2x19xbf16> -> vector<2x38xbf16>
    %c208_120 = arith.constant 208 : index
    %c4_121 = arith.constant 4 : index
    %346 = vector.load %arg2[%c208_120, %c4_121] : memref<240x128xbf16, #tpu.memory_space<vmem>>, vector<1x2xbf16>
    %cst_122 = arith.constant dense<0.000000e+00> : vector<1x38xf32>
    %347 = tpu.matmul %346, %345, %cst_122 {dimension_numbers = #tpu.dot_dimension_numbers<[1], [0], [0], [1], [0, 0, 1, 1], [], []>} : vector<1x2xbf16>, vector<2x38xbf16>, vector<1x38xf32> -> vector<1x38xf32>
    %348 = arith.addf %342, %347 : vector<1x38xf32>
    %c0_123 = arith.constant 0 : index
    %c11 = arith.constant 11 : index
    %349 = vector.load %arg3[%c0_123, %c11] : memref<32x13xf32, #tpu.memory_space<vmem>>, vector<1x1xf32>
    %350 = vector.broadcast %349 : vector<1x1xf32> to vector<1x38xf32>
    %351 = arith.addf %348, %350 : vector<1x38xf32>
    %352 = arith.negf %351 : vector<1x38xf32>
    %353 = math.exp %352 : vector<1x38xf32>
    %cst_124 = arith.constant 1.000000e+00 : f32
    %354 = vector.broadcast %cst_124 : f32 to vector<1x38xf32>
    %355 = arith.addf %354, %353 : vector<1x38xf32>
    %356 = arith.divf %354, %355 : vector<1x38xf32>
    %357 = arith.mulf %351, %356 : vector<1x38xf32>
    %358 = arith.truncf %357 : vector<1x38xf32> to vector<1x38xbf16>
    %359 = vector.extract_strided_slice %358 {offsets = [0, 0], sizes = [1, 17], strides = [1, 1]} : vector<1x38xbf16> to vector<1x17xbf16>
    %360 = vector.extract_strided_slice %358 {offsets = [0, 19], sizes = [1, 17], strides = [1, 1]} : vector<1x38xbf16> to vector<1x17xbf16>
    %361 = tpu.concatenate %359, %360 in 1 : vector<1x17xbf16>, vector<1x17xbf16> -> vector<1x34xbf16>
    %c224 = arith.constant 224 : index
    %c0_125 = arith.constant 0 : index
    %362 = vector.load %arg2[%c224, %c0_125] : memref<240x128xbf16, #tpu.memory_space<vmem>>, vector<2x1xbf16>
    %363 = arith.extf %362 : vector<2x1xbf16> to vector<2x1xf32>
    %364 = arith.extf %361 : vector<1x34xbf16> to vector<1x34xf32>
    %365 = vector.broadcast %363 : vector<2x1xf32> to vector<2x34xf32>
    %366 = vector.broadcast %364 : vector<1x34xf32> to vector<2x34xf32>
    %367 = arith.mulf %365, %366 : vector<2x34xf32>
    %368 = vector.extract_strided_slice %358 {offsets = [0, 1], sizes = [1, 17], strides = [1, 1]} : vector<1x38xbf16> to vector<1x17xbf16>
    %369 = vector.extract_strided_slice %358 {offsets = [0, 20], sizes = [1, 17], strides = [1, 1]} : vector<1x38xbf16> to vector<1x17xbf16>
    %370 = tpu.concatenate %368, %369 in 1 : vector<1x17xbf16>, vector<1x17xbf16> -> vector<1x34xbf16>
    %c224_126 = arith.constant 224 : index
    %c1_127 = arith.constant 1 : index
    %371 = vector.load %arg2[%c224_126, %c1_127] : memref<240x128xbf16, #tpu.memory_space<vmem>>, vector<2x1xbf16>
    %372 = arith.extf %371 : vector<2x1xbf16> to vector<2x1xf32>
    %373 = arith.extf %370 : vector<1x34xbf16> to vector<1x34xf32>
    %374 = vector.broadcast %372 : vector<2x1xf32> to vector<2x34xf32>
    %375 = vector.broadcast %373 : vector<1x34xf32> to vector<2x34xf32>
    %376 = arith.mulf %374, %375 : vector<2x34xf32>
    %377 = arith.addf %367, %376 : vector<2x34xf32>
    %378 = vector.extract_strided_slice %358 {offsets = [0, 2], sizes = [1, 17], strides = [1, 1]} : vector<1x38xbf16> to vector<1x17xbf16>
    %379 = vector.extract_strided_slice %358 {offsets = [0, 21], sizes = [1, 17], strides = [1, 1]} : vector<1x38xbf16> to vector<1x17xbf16>
    %380 = tpu.concatenate %378, %379 in 1 : vector<1x17xbf16>, vector<1x17xbf16> -> vector<1x34xbf16>
    %c224_128 = arith.constant 224 : index
    %c2_129 = arith.constant 2 : index
    %381 = vector.load %arg2[%c224_128, %c2_129] : memref<240x128xbf16, #tpu.memory_space<vmem>>, vector<2x1xbf16>
    %382 = arith.extf %381 : vector<2x1xbf16> to vector<2x1xf32>
    %383 = arith.extf %380 : vector<1x34xbf16> to vector<1x34xf32>
    %384 = vector.broadcast %382 : vector<2x1xf32> to vector<2x34xf32>
    %385 = vector.broadcast %383 : vector<1x34xf32> to vector<2x34xf32>
    %386 = arith.mulf %384, %385 : vector<2x34xf32>
    %387 = arith.addf %377, %386 : vector<2x34xf32>
    %388 = tpu.iota {dimensions = array<i32: 0>} : vector<17x9xi32>
    %389 = tpu.iota {dimensions = array<i32: 1>} : vector<17x9xi32>
    %c2_i32_130 = arith.constant 2 : i32
    %390 = vector.broadcast %c2_i32_130 : i32 to vector<17x9xi32>
    %391 = arith.muli %390, %389 : vector<17x9xi32>
    %392 = arith.cmpi eq, %388, %391 : vector<17x9xi32>
    %393 = arith.extui %392 : vector<17x9xi1> to vector<17x9xi32>
    %394 = arith.sitofp %393 : vector<17x9xi32> to vector<17x9xf32>
    %395 = vector.extract_strided_slice %387 {offsets = [0, 0], sizes = [2, 17], strides = [1, 1]} : vector<2x34xf32> to vector<2x17xf32>
    %cst_131 = arith.constant dense<0.000000e+00> : vector<2x9xf32>
    %396 = tpu.matmul %395, %394, %cst_131 {dimension_numbers = #tpu.dot_dimension_numbers<[1], [0], [0], [1], [0, 0, 1, 1], [], []>} : vector<2x17xf32>, vector<17x9xf32>, vector<2x9xf32> -> vector<2x9xf32>
    %397 = vector.extract_strided_slice %387 {offsets = [0, 17], sizes = [2, 17], strides = [1, 1]} : vector<2x34xf32> to vector<2x17xf32>
    %cst_132 = arith.constant dense<0.000000e+00> : vector<2x9xf32>
    %398 = tpu.matmul %397, %394, %cst_132 {dimension_numbers = #tpu.dot_dimension_numbers<[1], [0], [0], [1], [0, 0, 1, 1], [], []>} : vector<2x17xf32>, vector<17x9xf32>, vector<2x9xf32> -> vector<2x9xf32>
    %399 = tpu.concatenate %396, %398 in 1 : vector<2x9xf32>, vector<2x9xf32> -> vector<2x18xf32>
    %c0_133 = arith.constant 0 : index
    %c12 = arith.constant 12 : index
    %400 = vector.load %arg3[%c0_133, %c12] : memref<32x13xf32, #tpu.memory_space<vmem>>, vector<2x1xf32>
    %401 = vector.broadcast %400 : vector<2x1xf32> to vector<2x18xf32>
    %402 = arith.addf %399, %401 : vector<2x18xf32>
    %403 = arith.negf %402 : vector<2x18xf32>
    %404 = math.exp %403 : vector<2x18xf32>
    %cst_134 = arith.constant 1.000000e+00 : f32
    %405 = vector.broadcast %cst_134 : f32 to vector<2x18xf32>
    %406 = arith.addf %405, %404 : vector<2x18xf32>
    %407 = arith.divf %405, %406 : vector<2x18xf32>
    %408 = arith.mulf %402, %407 : vector<2x18xf32>
    %409 = vector.extract_strided_slice %408 {offsets = [0, 0], sizes = [2, 9], strides = [1, 1]} : vector<2x18xf32> to vector<2x9xf32>
    %c0_135 = arith.constant 0 : index
    %c0_136 = arith.constant 0 : index
    %c0_137 = arith.constant 0 : index
    %410 = vector.load %arg4[%c0_135, %c0_136, %c0_137] : memref<2x2x9xf32, #tpu.memory_space<vmem>>, vector<1x2x9xf32>
    %411 = vector.shape_cast %410 : vector<1x2x9xf32> to vector<2x9xf32>
    %412 = vector.shape_cast %409 : vector<2x9xf32> to vector<1x2x9xf32>
    tpu.vector_store %arg4[%c0_135, %c0_136, %c0_137], %412 {strides = array<i32>} : memref<2x2x9xf32, #tpu.memory_space<vmem>>, vector<1x2x9xf32>,
    %413 = vector.extract_strided_slice %408 {offsets = [0, 9], sizes = [2, 9], strides = [1, 1]} : vector<2x18xf32> to vector<2x9xf32>
    %c1_138 = arith.constant 1 : index
    %c0_139 = arith.constant 0 : index
    %c0_140 = arith.constant 0 : index
    %414 = vector.load %arg4[%c1_138, %c0_139, %c0_140] : memref<2x2x9xf32, #tpu.memory_space<vmem>>, vector<1x2x9xf32>
    %415 = vector.shape_cast %414 : vector<1x2x9xf32> to vector<2x9xf32>
    %416 = vector.shape_cast %413 : vector<2x9xf32> to vector<1x2x9xf32>
    tpu.vector_store %arg4[%c1_138, %c0_139, %c0_140], %416 {strides = array<i32>} : memref<2x2x9xf32, #tpu.memory_space<vmem>>, vector<1x2x9xf32>,
    return
  }
  func.func @transform_0(%arg0: i32) -> (i32, i32, i32) {
    %c0_i32 = arith.constant 0 : i32
    %c0_i32_0 = arith.constant 0 : i32
    %c0_i32_1 = arith.constant 0 : i32
    return %arg0, %c0_i32, %c0_i32_0 : i32, i32, i32
  }
  func.func @transform_1(%arg0: i32) -> (i32, i32) {
    %c0_i32 = arith.constant 0 : i32
    %c0_i32_0 = arith.constant 0 : i32
    %c0_i32_1 = arith.constant 0 : i32
    return %c0_i32, %c0_i32_0 : i32, i32
  }
  func.func @transform_2(%arg0: i32) -> (i32, i32) {
    %c0_i32 = arith.constant 0 : i32
    %c0_i32_0 = arith.constant 0 : i32
    %c0_i32_1 = arith.constant 0 : i32
    return %c0_i32, %c0_i32_0 : i32, i32
  }
  func.func @transform_3(%arg0: i32) -> (i32, i32, i32) {
    %c0_i32 = arith.constant 0 : i32
    %c0_i32_0 = arith.constant 0 : i32
    %c0_i32_1 = arith.constant 0 : i32
    return %arg0, %c0_i32, %c0_i32_0 : i32, i32, i32
  }
}

</mosaic_0001>

<llo_original>
// kernel: tpu_custom_call.1
$region0: #{tpu_custom_call.1}
  #allocation0 [shape = 'u32[]', space=smem, size = 0x4, offset = 0x4, fixed_abs, tag = 'smem constant byte address 0x4 - core index']
  #allocation1 [shape = 'u32[144,128]{1,0:T(1,128)}', space=vmem, size = 0x12000, scoped, tag = 'internal scratch']
  %s0 = inlined_call_operand.vmem [shape: f32[1,1,256], index: 0, kind: input, shape index: {}]
  %s1 = inlined_call_operand.hbm [shape: bf16[240,128], index: 1, kind: input, shape index: {}]
  %s2 = inlined_call_operand.vmem [shape: f32[32,13], index: 2, kind: input, shape index: {}]
  %s3 = inlined_call_operand.hbm [shape: f32[2,2,9], index: 3, kind: output, shape index: {}]
  %s4 = sld [smem:[#allocation0]]
  $region26: #{tpu_custom_call.1} parent=0
    _
  %s6 = ssub.s32 1, %s4
  %s7 = scalar_select 0, %s6, %s4
  $region1: #{tpu_custom_call.1} parent=0
    #allocation2 [shape = 'u8[61440]{0}', space=vmem, size = 0xf000, scoped, tag = 'input window, operand 1, single buffered']
    #allocation3 [shape = 's32[1]{0}', space=sflag, size = 0x4, scoped, tag = 'scoped memory for tpu_custom_call.1']
    #allocation4 [shape = 's32[1]{0}', space=sflag, size = 0x4, scoped, tag = 'scoped memory for tpu_custom_call.1']
    #allocation5 [shape = 'u8[2048]{0}', space=vmem, size = 0x800, scoped, tag = 'output window, operand 0, single buffered']
    %8 = vsyncpa [#allocation3], 0
    %9 = vsyncpa [#allocation4], 0
    // Predicated region
    $region2: #{tpu_custom_call.1} parent=1 // pred_check
      _
    $region3: #{tpu_custom_call.1} parent=1 // pred_check_branch
      %11 = sbr.rel (0) target = $region5
    $region4: #{tpu_custom_call.1} parent=1 // pred_region
      _
    $region5: #{tpu_custom_call.1} parent=1 // pred_fallthru
      _
    // Predicated region
    $region6: #{tpu_custom_call.1} parent=1 // pred_check
      _
    $region7: #{tpu_custom_call.1} parent=1 // pred_check_branch
      %13 = sbr.rel (0) target = $region9
    $region8: #{tpu_custom_call.1} parent=1 // pred_region
      %s15 = ssub.s32 1920, 1920
      %16 = vsyncadd [#allocation3], %s15
      %s17 = sshll.u32 [#allocation2], 4
      %s18 = int_to_ptr.vmem [resolvable:$true] %s17
      %23 = dma.hbm_to_vmem [thread:$0]  %s1, 1920, %s18, [#allocation3], 64, 64, 4
    $region9: #{tpu_custom_call.1} parent=1 // pred_fallthru
      _
    // Predicated region
    $region10: #{tpu_custom_call.1} parent=1 // pred_check
      _
    $region11: #{tpu_custom_call.1} parent=1 // pred_check_branch
      %25 = sbr.rel (0) target = $region13
    $region12: #{tpu_custom_call.1} parent=1 // pred_region
      _
    $region13: #{tpu_custom_call.1} parent=1 // pred_fallthru
      _
    // Predicated region
    $region14: #{tpu_custom_call.1} parent=1 // pred_check
      _
    $region15: #{tpu_custom_call.1} parent=1 // pred_check_branch
      %27 = sbr.rel (0) target = $region17
    $region16: #{tpu_custom_call.1} parent=1 // pred_region
      %28 = dma.done [#allocation3], 1920
    $region17: #{tpu_custom_call.1} parent=1 // pred_fallthru
      _
    %v30 = vld [vmem:[%s0] sm:$0x3]
    %v32 = vlaneseq
    %v33 = vshrl.u32 %v32, 7
    %v34 = vsub.s32 1, %v33
    %v35 = vrot.slane %v30, %v34
    %36 = vrot.lane.b32.xlu0 %v35, 126
    %v37 = vpop.permute.xlu0 %36
    %vm39 = vcmask 1031168
    %v40 = vsel %vm39, %v30, %v37
    %v41 = vld [vmem:[#allocation2] sm:$0xf]
    %v42 = vld [vmem:[#allocation2 + $0x4] sm:$0xf]
    %v43 = vunpack.c.l.bf16 %v41
    %v44 = vunpack.c.l.bf16 %v42
    %46 = vset.pattern.permute.xlu0 0
    %47 = vperm.xlu0 %46, %v43
    %v48 = vpop.permute.xlu0 %47
    %51 = vset.pattern.permute.xlu0 0
    %52 = vperm.xlu0 %51, %v44
    %v53 = vpop.permute.xlu0 %52
    %v55 = vlaneseq
    %v56 = vshrl.u32 %v55, 7
    %v57 = vsub.s32 0, %v56
    %v58 = vrot.slane %v40, %v57
    %v59 = vlaneseq
    %v60 = vshrl.u32 %v59, 7
    %v61 = vsub.s32 0, %v60
    %v62 = vrot.slane %v37, %v61
    %v63 = vmul.f32 %v48, %v58
    %v64 = vmul.f32 %v48, %v62
    %v65 = vmul.f32 %v53, %v58
    %v66 = vmul.f32 %v53, %v62
    %v67 = vlaneseq
    %v68 = vshrl.u32 %v67, 7
    %v69 = vsub.s32 0, %v68
    %v70 = vrot.slane %v30, %v69
    %71 = vrot.lane.b32.xlu0 %v70, 127
    %v72 = vpop.permute.xlu0 %71
    %74 = vrot.lane.b32.xlu0 %v35, 125
    %v75 = vpop.permute.xlu0 %74
    %v77 = vsel %vm39, %v72, %v75
    %78 = vset.pattern.permute.xlu0 1
    %79 = vperm.xlu0 %78, %v43
    %v80 = vpop.permute.xlu0 %79
    %82 = vset.pattern.permute.xlu0 1
    %83 = vperm.xlu0 %82, %v44
    %v84 = vpop.permute.xlu0 %83
    %v86 = vlaneseq
    %v87 = vshrl.u32 %v86, 7
    %v88 = vsub.s32 0, %v87
    %v89 = vrot.slane %v77, %v88
    %v90 = vlaneseq
    %v91 = vshrl.u32 %v90, 7
    %v92 = vsub.s32 0, %v91
    %v93 = vrot.slane %v75, %v92
    %v94 = vmul.f32 %v80, %v89
    %v95 = vmul.f32 %v80, %v93
    %v96 = vmul.f32 %v84, %v89
    %v97 = vmul.f32 %v84, %v93
    %v98 = vadd.f32 %v63, %v94
    %v99 = vadd.f32 %v64, %v95
    %v100 = vadd.f32 %v65, %v96
    %v101 = vadd.f32 %v66, %v97
    %102 = vrot.lane.b32.xlu0 %v70, 126
    %v103 = vpop.permute.xlu0 %102
    %105 = vrot.lane.b32.xlu0 %v35, 124
    %v106 = vpop.permute.xlu0 %105
    %v108 = vsel %vm39, %v103, %v106
    %109 = vset.pattern.permute.xlu0 2
    %110 = vperm.xlu0 %109, %v43
    %v111 = vpop.permute.xlu0 %110
    %113 = vset.pattern.permute.xlu0 2
    %114 = vperm.xlu0 %113, %v44
    %v115 = vpop.permute.xlu0 %114
    %v117 = vlaneseq
    %v118 = vshrl.u32 %v117, 7
    %v119 = vsub.s32 0, %v118
    %v120 = vrot.slane %v108, %v119
    %v121 = vlaneseq
    %v122 = vshrl.u32 %v121, 7
    %v123 = vsub.s32 0, %v122
    %v124 = vrot.slane %v106, %v123
    %v125 = vmul.f32 %v111, %v120
    %v126 = vmul.f32 %v111, %v124
    %v127 = vmul.f32 %v115, %v120
    %v128 = vmul.f32 %v115, %v124
    %v129 = vadd.f32 %v98, %v125
    %v130 = vadd.f32 %v99, %v126
    %v131 = vadd.f32 %v100, %v127
    %v132 = vadd.f32 %v101, %v128
    %v133 = vld [vmem:[%s2] sm:$0xff]
    %v134 = vld [vmem:[%s2 + $0x8] sm:$0xff]
    %136 = vset.pattern.permute.xlu0 0
    %137 = vperm.xlu0 %136, %v133
    %v138 = vpop.permute.xlu0 %137
    %141 = vset.pattern.permute.xlu0 0
    %142 = vperm.xlu0 %141, %v134
    %v143 = vpop.permute.xlu0 %142
    %v145 = vadd.f32 %v129, %v138
    %v146 = vadd.f32 %v130, %v138
    %v147 = vadd.f32 %v131, %v143
    %v148 = vadd.f32 %v132, %v143
    %v149 = vxor.u32 %v145, 2147483648
    %v150 = vxor.u32 %v146, 2147483648
    %v151 = vxor.u32 %v147, 2147483648
    %v152 = vxor.u32 %v148, 2147483648
    %v153 = vmul.f32 %v149, 1.442695
    %v154 = vpow.pop %v153
    %v155 = vmul.f32 %v150, 1.442695
    %v156 = vpow.pop %v155
    %v157 = vmul.f32 %v151, 1.442695
    %v158 = vpow.pop %v157
    %v159 = vmul.f32 %v152, 1.442695
    %v160 = vpow.pop %v159
    %v161 = vadd.f32 %v154, 1.0
    %v162 = vadd.f32 %v156, 1.0
    %v163 = vadd.f32 %v158, 1.0
    %v164 = vadd.f32 %v160, 1.0
    %v165 = vrcp.pop %v161
    %v166 = vmul.f32 1.0, %v165
    %v167 = vrcp.pop %v162
    %v168 = vmul.f32 1.0, %v167
    %v169 = vrcp.pop %v163
    %v170 = vmul.f32 1.0, %v169
    %v171 = vrcp.pop %v164
    %v172 = vmul.f32 1.0, %v171
    %v173 = vmul.f32 %v145, %v166
    %v174 = vmul.f32 %v146, %v168
    %v175 = vmul.f32 %v147, %v170
    %v176 = vmul.f32 %v148, %v172
    %v177 = vpack.c.bf16 %v175, %v173
    %v178 = vpack.c.bf16 %v176, %v174
    %181 = vrot.lane.b32.xlu0 %v177, 126
    %v182 = vpop.permute.xlu0 %181
    %183 = vrot.lane.b32.xlu0 %v178, 126
    %v184 = vpop.permute.xlu0 %183
    %vm185 = vcmask 1031168
    %v186 = vsel %vm185, %v182, %v184
    %vm188 = vcmask 1014784
    %v191 = vsel %vm188, %v177, %v186
    %v193 = vld [vmem:[#allocation2 + $0x8] sm:$0xf]
    %v194 = vld [vmem:[#allocation2 + $0xc] sm:$0xf]
    %195 = vrot.lane.b32.xlu0 %v177, 127
    %v196 = vpop.permute.xlu0 %195
    %197 = vrot.lane.b32.xlu0 %v177, 125
    %v198 = vpop.permute.xlu0 %197
    %199 = vrot.lane.b32.xlu0 %v178, 125
    %v200 = vpop.permute.xlu0 %199
    %vm201 = vcmask 1022976
    %v202 = vsel %vm201, %v198, %v200
    %v206 = vsel %vm188, %v196, %v202
    %v210 = vunpack.c.l.b16 %v193
    %v211 = vunpack.c.l.b16 %v194
    %v212 = vpack.c.b16 %v211, %v210
    %213 = vrot.lane.b32.xlu0 %v212, 112
    %v214 = vpop.permute.xlu0 %213
    %vm215 = vcmask 130048
    %v217 = vsel %vm215, %v214, 0
    %219 = vmatprep.subr.bf16.mxu0 %v200
    %220 = vmatpush1.bf16.msra.mxu0 %v206
    %221 = vmatprep.subr.bf16.mxu0 0
    %222 = vmatpush1.bf16.msra.mxu0 0
    %223 = vmatprep.subr.bf16.mxu0 0
    %224 = vmatpush1.bf16.msra.mxu0 0
    %225 = vmatprep.subr.bf16.mxu0 0
    %226 = vmatpush1.bf16.msra.mxu0 0
    %227 = vmatprep.subr.bf16.mxu0 0
    %228 = vmatpush1.bf16.msra.mxu0 0
    %229 = vmatprep.subr.bf16.mxu0 0
    %230 = vmatpush1.bf16.msra.mxu0 0
    %231 = vmatprep.subr.bf16.mxu0 0
    %232 = vmatpush1.bf16.msra.mxu0 0
    %233 = vmatprep.subr.bf16.mxu0 0
    %234 = vmatpush1.bf16.msra.mxu0 0
    %235 = vmatprep.subr.bf16.mxu0 0
    %236 = vmatpush1.bf16.msra.mxu0 0
    %237 = vmatprep.subr.bf16.mxu0 0
    %238 = vmatpush1.bf16.msra.mxu0 0
    %239 = vmatprep.subr.bf16.mxu0 0
    %240 = vmatpush1.bf16.msra.mxu0 0
    %241 = vmatprep.subr.bf16.mxu0 0
    %242 = vmatpush1.bf16.msra.mxu0 0
    %243 = vmatprep.subr.bf16.mxu0 0
    %244 = vmatpush1.bf16.msra.mxu0 0
    %245 = vmatprep.subr.bf16.mxu0 0
    %246 = vmatpush1.bf16.msra.mxu0 0
    %247 = vmatprep.subr.bf16.mxu0 0
    %248 = vmatpush1.bf16.msra.mxu0 0
    %249 = vmatprep.subr.bf16.mxu0 0
    %250 = vmatpush1.bf16.msra.mxu0 0
    %251 = vmatprep.mubr.bf16.mxu0 0
    %252 = vmatmul.mubr.bf16.gmra.mrb[0].mxu0 %v217
    %v253 = vpop.f32.mrb[0].mxu0
    %v254 = vadd.f32 0.0, %v253
    %v255 = vpop.f32.mrb[0].mxu0
    %v256 = vadd.f32 0.0, %v255
    %v257 = vpop.f32.mrb[0].mxu0
    %v258 = vadd.f32 0.0, %v257
    %v259 = vpop.f32.mrb[0].mxu0
    %v260 = vadd.f32 0.0, %v259
    %261 = vdwg.mxu0
    %v263 = vsel %vm215, %v212, 0
    %265 = vmatprep.subr.bf16.mxu0 %v184
    %266 = vmatpush1.bf16.msra.mxu0 %v191
    %267 = vmatprep.subr.bf16.mxu0 0
    %268 = vmatpush1.bf16.msra.mxu0 0
    %269 = vmatprep.subr.bf16.mxu0 0
    %270 = vmatpush1.bf16.msra.mxu0 0
    %271 = vmatprep.subr.bf16.mxu0 0
    %272 = vmatpush1.bf16.msra.mxu0 0
    %273 = vmatprep.subr.bf16.mxu0 0
    %274 = vmatpush1.bf16.msra.mxu0 0
    %275 = vmatprep.subr.bf16.mxu0 0
    %276 = vmatpush1.bf16.msra.mxu0 0
    %277 = vmatprep.subr.bf16.mxu0 0
    %278 = vmatpush1.bf16.msra.mxu0 0
    %279 = vmatprep.subr.bf16.mxu0 0
    %280 = vmatpush1.bf16.msra.mxu0 0
    %281 = vmatprep.subr.bf16.mxu0 0
    %282 = vmatpush1.bf16.msra.mxu0 0
    %283 = vmatprep.subr.bf16.mxu0 0
    %284 = vmatpush1.bf16.msra.mxu0 0
    %285 = vmatprep.subr.bf16.mxu0 0
    %286 = vmatpush1.bf16.msra.mxu0 0
    %287 = vmatprep.subr.bf16.mxu0 0
    %288 = vmatpush1.bf16.msra.mxu0 0
    %289 = vmatprep.subr.bf16.mxu0 0
    %290 = vmatpush1.bf16.msra.mxu0 0
    %291 = vmatprep.subr.bf16.mxu0 0
    %292 = vmatpush1.bf16.msra.mxu0 0
    %293 = vmatprep.subr.bf16.mxu0 0
    %294 = vmatpush1.bf16.msra.mxu0 0
    %295 = vmatprep.subr.bf16.mxu0 0
    %296 = vmatpush1.bf16.msra.mxu0 0
    %297 = vmatprep.mubr.bf16.mxu0 0
    %298 = vmatmul.mubr.bf16.gmra.mrb[0].mxu0 %v263
    %v299 = vpop.f32.mrb[0].mxu0
    %v300 = vadd.f32 %v254, %v299
    %v301 = vpop.f32.mrb[0].mxu0
    %v302 = vadd.f32 %v256, %v301
    %v303 = vpop.f32.mrb[0].mxu0
    %v304 = vadd.f32 %v258, %v303
    %v305 = vpop.f32.mrb[0].mxu0
    %v306 = vadd.f32 %v260, %v305
    %307 = vdwg.mxu0
    %308 = vrot.lane.b32.xlu0 %v178, 124
    %v309 = vpop.permute.xlu0 %308
    %v313 = vsel %vm188, %v182, %v309
    %315 = vrot.lane.b32.xlu0 %v212, 96
    %v316 = vpop.permute.xlu0 %315
    %v318 = vsel %vm215, %v316, 0
    %320 = vmatprep.subr.bf16.mxu0 %v309
    %321 = vmatpush1.bf16.msra.mxu0 %v313
    %322 = vmatprep.subr.bf16.mxu0 0
    %323 = vmatpush1.bf16.msra.mxu0 0
    %324 = vmatprep.subr.bf16.mxu0 0
    %325 = vmatpush1.bf16.msra.mxu0 0
    %326 = vmatprep.subr.bf16.mxu0 0
    %327 = vmatpush1.bf16.msra.mxu0 0
    %328 = vmatprep.subr.bf16.mxu0 0
    %329 = vmatpush1.bf16.msra.mxu0 0
    %330 = vmatprep.subr.bf16.mxu0 0
    %331 = vmatpush1.bf16.msra.mxu0 0
    %332 = vmatprep.subr.bf16.mxu0 0
    %333 = vmatpush1.bf16.msra.mxu0 0
    %334 = vmatprep.subr.bf16.mxu0 0
    %335 = vmatpush1.bf16.msra.mxu0 0
    %336 = vmatprep.subr.bf16.mxu0 0
    %337 = vmatpush1.bf16.msra.mxu0 0
    %338 = vmatprep.subr.bf16.mxu0 0
    %339 = vmatpush1.bf16.msra.mxu0 0
    %340 = vmatprep.subr.bf16.mxu0 0
    %341 = vmatpush1.bf16.msra.mxu0 0
    %342 = vmatprep.subr.bf16.mxu0 0
    %343 = vmatpush1.bf16.msra.mxu0 0
    %344 = vmatprep.subr.bf16.mxu0 0
    %345 = vmatpush1.bf16.msra.mxu0 0
    %346 = vmatprep.subr.bf16.mxu0 0
    %347 = vmatpush1.bf16.msra.mxu0 0
    %348 = vmatprep.subr.bf16.mxu0 0
    %349 = vmatpush1.bf16.msra.mxu0 0
    %350 = vmatprep.subr.bf16.mxu0 0
    %351 = vmatpush1.bf16.msra.mxu0 0
    %352 = vmatprep.mubr.bf16.mxu0 0
    %353 = vmatmul.mubr.bf16.gmra.mrb[0].mxu0 %v318
    %v354 = vpop.f32.mrb[0].mxu0
    %v355 = vadd.f32 0.0, %v354
    %v356 = vpop.f32.mrb[0].mxu0
    %v357 = vadd.f32 0.0, %v356
    %v358 = vpop.f32.mrb[0].mxu0
    %v359 = vadd.f32 0.0, %v358
    %v360 = vpop.f32.mrb[0].mxu0
    %v361 = vadd.f32 0.0, %v360
    %362 = vdwg.mxu0
    %v363 = vadd.f32 %v300, %v355
    %v364 = vadd.f32 %v302, %v357
    %v365 = vadd.f32 %v304, %v359
    %v366 = vadd.f32 %v306, %v361
    %367 = vset.pattern.permute.xlu0 1
    %368 = vperm.xlu0 %367, %v133
    %v369 = vpop.permute.xlu0 %368
    %371 = vset.pattern.permute.xlu0 1
    %372 = vperm.xlu0 %371, %v134
    %v373 = vpop.permute.xlu0 %372
    %v375 = vadd.f32 %v363, %v369
    %v376 = vadd.f32 %v364, %v369
    %v377 = vadd.f32 %v365, %v373
    %v378 = vadd.f32 %v366, %v373
    %v379 = vxor.u32 %v375, 2147483648
    %v380 = vxor.u32 %v376, 2147483648
    %v381 = vxor.u32 %v377, 2147483648
    %v382 = vxor.u32 %v378, 2147483648
    %v383 = vmul.f32 %v379, 1.442695
    %v384 = vpow.pop %v383
    %v385 = vmul.f32 %v380, 1.442695
    %v386 = vpow.pop %v385
    %v387 = vmul.f32 %v381, 1.442695
    %v388 = vpow.pop %v387
    %v389 = vmul.f32 %v382, 1.442695
    %v390 = vpow.pop %v389
    %v391 = vadd.f32 %v384, 1.0
    %v392 = vadd.f32 %v386, 1.0
    %v393 = vadd.f32 %v388, 1.0
    %v394 = vadd.f32 %v390, 1.0
    %v395 = vrcp.pop %v391
    %v396 = vmul.f32 1.0, %v395
    %v397 = vrcp.pop %v392
    %v398 = vmul.f32 1.0, %v397
    %v399 = vrcp.pop %v393
    %v400 = vmul.f32 1.0, %v399
    %v401 = vrcp.pop %v394
    %v402 = vmul.f32 1.0, %v401
    %v403 = vmul.f32 %v375, %v396
    %v404 = vmul.f32 %v376, %v398
    %v405 = vmul.f32 %v377, %v400
    %v406 = vmul.f32 %v378, %v402
    %v407 = vpack.c.bf16 %v405, %v403
    %v408 = vpack.c.bf16 %v406, %v404
    %411 = vrot.lane.b32.xlu0 %v407, 126
    %v412 = vpop.permute.xlu0 %411
    %413 = vrot.lane.b32.xlu0 %v408, 126
    %v414 = vpop.permute.xlu0 %413
    %v415 = vsel %vm185, %v412, %v414
    %vm417 = vcmask 998400
    %v420 = vsel %vm417, %v407, %v415
    %v422 = vld [vmem:[#allocation2 + $0x10] sm:$0xf]
    %v423 = vld [vmem:[#allocation2 + $0x14] sm:$0xf]
    %424 = vrot.lane.b32.xlu0 %v407, 127
    %v425 = vpop.permute.xlu0 %424
    %426 = vrot.lane.b32.xlu0 %v407, 125
    %v427 = vpop.permute.xlu0 %426
    %428 = vrot.lane.b32.xlu0 %v408, 125
    %v429 = vpop.permute.xlu0 %428
    %v430 = vsel %vm201, %v427, %v429
    %v434 = vsel %vm417, %v425, %v430
    %v438 = vunpack.c.l.b16 %v422
    %v439 = vunpack.c.l.b16 %v423
    %v440 = vpack.c.b16 %v439, %v438
    %441 = vrot.lane.b32.xlu0 %v440, 112
    %v442 = vpop.permute.xlu0 %441
    %v444 = vsel %vm215, %v442, 0
    %446 = vmatprep.subr.bf16.mxu0 %v429
    %447 = vmatpush1.bf16.msra.mxu0 %v434
    %448 = vmatprep.subr.bf16.mxu0 0
    %449 = vmatpush1.bf16.msra.mxu0 0
    %450 = vmatprep.subr.bf16.mxu0 0
    %451 = vmatpush1.bf16.msra.mxu0 0
    %452 = vmatprep.subr.bf16.mxu0 0
    %453 = vmatpush1.bf16.msra.mxu0 0
    %454 = vmatprep.subr.bf16.mxu0 0
    %455 = vmatpush1.bf16.msra.mxu0 0
    %456 = vmatprep.subr.bf16.mxu0 0
    %457 = vmatpush1.bf16.msra.mxu0 0
    %458 = vmatprep.subr.bf16.mxu0 0
    %459 = vmatpush1.bf16.msra.mxu0 0
    %460 = vmatprep.subr.bf16.mxu0 0
    %461 = vmatpush1.bf16.msra.mxu0 0
    %462 = vmatprep.subr.bf16.mxu0 0
    %463 = vmatpush1.bf16.msra.mxu0 0
    %464 = vmatprep.subr.bf16.mxu0 0
    %465 = vmatpush1.bf16.msra.mxu0 0
    %466 = vmatprep.subr.bf16.mxu0 0
    %467 = vmatpush1.bf16.msra.mxu0 0
    %468 = vmatprep.subr.bf16.mxu0 0
    %469 = vmatpush1.bf16.msra.mxu0 0
    %470 = vmatprep.subr.bf16.mxu0 0
    %471 = vmatpush1.bf16.msra.mxu0 0
    %472 = vmatprep.subr.bf16.mxu0 0
    %473 = vmatpush1.bf16.msra.mxu0 0
    %474 = vmatprep.subr.bf16.mxu0 0
    %475 = vmatpush1.bf16.msra.mxu0 0
    %476 = vmatprep.subr.bf16.mxu0 0
    %477 = vmatpush1.bf16.msra.mxu0 0
    %478 = vmatprep.mubr.bf16.mxu0 0
    %479 = vmatmul.mubr.bf16.gmra.mrb[0].mxu0 %v444
    %v480 = vpop.f32.mrb[0].mxu0
    %v481 = vadd.f32 0.0, %v480
    %v482 = vpop.f32.mrb[0].mxu0
    %v483 = vadd.f32 0.0, %v482
    %v484 = vpop.f32.mrb[0].mxu0
    %v485 = vadd.f32 0.0, %v484
    %v486 = vpop.f32.mrb[0].mxu0
    %v487 = vadd.f32 0.0, %v486
    %488 = vdwg.mxu0
    %v490 = vsel %vm215, %v440, 0
    %492 = vmatprep.subr.bf16.mxu0 %v414
    %493 = vmatpush1.bf16.msra.mxu0 %v420
    %494 = vmatprep.subr.bf16.mxu0 0
    %495 = vmatpush1.bf16.msra.mxu0 0
    %496 = vmatprep.subr.bf16.mxu0 0
    %497 = vmatpush1.bf16.msra.mxu0 0
    %498 = vmatprep.subr.bf16.mxu0 0
    %499 = vmatpush1.bf16.msra.mxu0 0
    %500 = vmatprep.subr.bf16.mxu0 0
    %501 = vmatpush1.bf16.msra.mxu0 0
    %502 = vmatprep.subr.bf16.mxu0 0
    %503 = vmatpush1.bf16.msra.mxu0 0
    %504 = vmatprep.subr.bf16.mxu0 0
    %505 = vmatpush1.bf16.msra.mxu0 0
    %506 = vmatprep.subr.bf16.mxu0 0
    %507 = vmatpush1.bf16.msra.mxu0 0
    %508 = vmatprep.subr.bf16.mxu0 0
    %509 = vmatpush1.bf16.msra.mxu0 0
    %510 = vmatprep.subr.bf16.mxu0 0
    %511 = vmatpush1.bf16.msra.mxu0 0
    %512 = vmatprep.subr.bf16.mxu0 0
    %513 = vmatpush1.bf16.msra.mxu0 0
    %514 = vmatprep.subr.bf16.mxu0 0
    %515 = vmatpush1.bf16.msra.mxu0 0
    %516 = vmatprep.subr.bf16.mxu0 0
    %517 = vmatpush1.bf16.msra.mxu0 0
    %518 = vmatprep.subr.bf16.mxu0 0
    %519 = vmatpush1.bf16.msra.mxu0 0
    %520 = vmatprep.subr.bf16.mxu0 0
    %521 = vmatpush1.bf16.msra.mxu0 0
    %522 = vmatprep.subr.bf16.mxu0 0
    %523 = vmatpush1.bf16.msra.mxu0 0
    %524 = vmatprep.mubr.bf16.mxu0 0
    %525 = vmatmul.mubr.bf16.gmra.mrb[0].mxu0 %v490
    %v526 = vpop.f32.mrb[0].mxu0
    %v527 = vadd.f32 %v481, %v526
    %v528 = vpop.f32.mrb[0].mxu0
    %v529 = vadd.f32 %v483, %v528
    %v530 = vpop.f32.mrb[0].mxu0
    %v531 = vadd.f32 %v485, %v530
    %v532 = vpop.f32.mrb[0].mxu0
    %v533 = vadd.f32 %v487, %v532
    %534 = vdwg.mxu0
    %535 = vrot.lane.b32.xlu0 %v407, 124
    %v536 = vpop.permute.xlu0 %535
    %537 = vrot.lane.b32.xlu0 %v408, 124
    %v538 = vpop.permute.xlu0 %537
    %vm539 = vcmask 1014784
    %v540 = vsel %vm539, %v536, %v538
    %v544 = vsel %vm417, %v412, %v540
    %546 = vrot.lane.b32.xlu0 %v440, 96
    %v547 = vpop.permute.xlu0 %546
    %v549 = vsel %vm215, %v547, 0
    %551 = vmatprep.subr.bf16.mxu0 %v538
    %552 = vmatpush1.bf16.msra.mxu0 %v544
    %553 = vmatprep.subr.bf16.mxu0 0
    %554 = vmatpush1.bf16.msra.mxu0 0
    %555 = vmatprep.subr.bf16.mxu0 0
    %556 = vmatpush1.bf16.msra.mxu0 0
    %557 = vmatprep.subr.bf16.mxu0 0
    %558 = vmatpush1.bf16.msra.mxu0 0
    %559 = vmatprep.subr.bf16.mxu0 0
    %560 = vmatpush1.bf16.msra.mxu0 0
    %561 = vmatprep.subr.bf16.mxu0 0
    %562 = vmatpush1.bf16.msra.mxu0 0
    %563 = vmatprep.subr.bf16.mxu0 0
    %564 = vmatpush1.bf16.msra.mxu0 0
    %565 = vmatprep.subr.bf16.mxu0 0
    %566 = vmatpush1.bf16.msra.mxu0 0
    %567 = vmatprep.subr.bf16.mxu0 0
    %568 = vmatpush1.bf16.msra.mxu0 0
    %569 = vmatprep.subr.bf16.mxu0 0
    %570 = vmatpush1.bf16.msra.mxu0 0
    %571 = vmatprep.subr.bf16.mxu0 0
    %572 = vmatpush1.bf16.msra.mxu0 0
    %573 = vmatprep.subr.bf16.mxu0 0
    %574 = vmatpush1.bf16.msra.mxu0 0
    %575 = vmatprep.subr.bf16.mxu0 0
    %576 = vmatpush1.bf16.msra.mxu0 0
    %577 = vmatprep.subr.bf16.mxu0 0
    %578 = vmatpush1.bf16.msra.mxu0 0
    %579 = vmatprep.subr.bf16.mxu0 0
    %580 = vmatpush1.bf16.msra.mxu0 0
    %581 = vmatprep.subr.bf16.mxu0 0
    %582 = vmatpush1.bf16.msra.mxu0 0
    %583 = vmatprep.mubr.bf16.mxu0 0
    %584 = vmatmul.mubr.bf16.gmra.mrb[0].mxu0 %v549
    %v585 = vpop.f32.mrb[0].mxu0
    %v586 = vadd.f32 0.0, %v585
    %v587 = vpop.f32.mrb[0].mxu0
    %v588 = vadd.f32 0.0, %v587
    %v589 = vpop.f32.mrb[0].mxu0
    %v590 = vadd.f32 0.0, %v589
    %v591 = vpop.f32.mrb[0].mxu0
    %v592 = vadd.f32 0.0, %v591
    %593 = vdwg.mxu0
    %v594 = vadd.f32 %v527, %v586
    %v595 = vadd.f32 %v529, %v588
    %v596 = vadd.f32 %v531, %v590
    %v597 = vadd.f32 %v533, %v592
    %598 = vset.pattern.permute.xlu0 2
    %599 = vperm.xlu0 %598, %v133
    %v600 = vpop.permute.xlu0 %599
    %602 = vset.pattern.permute.xlu0 2
    %603 = vperm.xlu0 %602, %v134
    %v604 = vpop.permute.xlu0 %603
    %v606 = vadd.f32 %v594, %v600
    %v607 = vadd.f32 %v595, %v600
    %v608 = vadd.f32 %v596, %v604
    %v609 = vadd.f32 %v597, %v604
    %v610 = vxor.u32 %v606, 2147483648
    %v611 = vxor.u32 %v607, 2147483648
    %v612 = vxor.u32 %v608, 2147483648
    %v613 = vxor.u32 %v609, 2147483648
    %v614 = vmul.f32 %v610, 1.442695
    %v615 = vpow.pop %v614
    %v616 = vmul.f32 %v611, 1.442695
    %v617 = vpow.pop %v616
    %v618 = vmul.f32 %v612, 1.442695
    %v619 = vpow.pop %v618
    %v620 = vmul.f32 %v613, 1.442695
    %v621 = vpow.pop %v620
    %v622 = vadd.f32 %v615, 1.0
    %v623 = vadd.f32 %v617, 1.0
    %v624 = vadd.f32 %v619, 1.0
    %v625 = vadd.f32 %v621, 1.0
    %v626 = vrcp.pop %v622
    %v627 = vmul.f32 1.0, %v626
    %v628 = vrcp.pop %v623
    %v629 = vmul.f32 1.0, %v628
    %v630 = vrcp.pop %v624
    %v631 = vmul.f32 1.0, %v630
    %v632 = vrcp.pop %v625
    %v633 = vmul.f32 1.0, %v632
    %v634 = vmul.f32 %v606, %v627
    %v635 = vmul.f32 %v607, %v629
    %v636 = vmul.f32 %v608, %v631
    %v637 = vmul.f32 %v609, %v633
    %v638 = vpack.c.bf16 %v636, %v634
    %v639 = vpack.c.bf16 %v637, %v635
    %642 = vrot.lane.b32.xlu0 %v638, 126
    %v643 = vpop.permute.xlu0 %642
    %644 = vrot.lane.b32.xlu0 %v639, 126
    %v645 = vpop.permute.xlu0 %644
    %v646 = vsel %vm185, %v643, %v645
    %vm648 = vcmask 982016
    %v651 = vsel %vm648, %v638, %v646
    %v653 = vld [vmem:[#allocation2 + $0x18] sm:$0xf]
    %v654 = vld [vmem:[#allocation2 + $0x1c] sm:$0xf]
    %655 = vrot.lane.b32.xlu0 %v638, 127
    %v656 = vpop.permute.xlu0 %655
    %657 = vrot.lane.b32.xlu0 %v638, 125
    %v658 = vpop.permute.xlu0 %657
    %659 = vrot.lane.b32.xlu0 %v639, 125
    %v660 = vpop.permute.xlu0 %659
    %v661 = vsel %vm201, %v658, %v660
    %v665 = vsel %vm648, %v656, %v661
    %v669 = vunpack.c.l.b16 %v653
    %v670 = vunpack.c.l.b16 %v654
    %v671 = vpack.c.b16 %v670, %v669
    %672 = vrot.lane.b32.xlu0 %v671, 112
    %v673 = vpop.permute.xlu0 %672
    %v675 = vsel %vm215, %v673, 0
    %677 = vmatprep.subr.bf16.mxu0 %v660
    %678 = vmatpush1.bf16.msra.mxu0 %v665
    %679 = vmatprep.subr.bf16.mxu0 0
    %680 = vmatpush1.bf16.msra.mxu0 0
    %681 = vmatprep.subr.bf16.mxu0 0
    %682 = vmatpush1.bf16.msra.mxu0 0
    %683 = vmatprep.subr.bf16.mxu0 0
    %684 = vmatpush1.bf16.msra.mxu0 0
    %685 = vmatprep.subr.bf16.mxu0 0
    %686 = vmatpush1.bf16.msra.mxu0 0
    %687 = vmatprep.subr.bf16.mxu0 0
    %688 = vmatpush1.bf16.msra.mxu0 0
    %689 = vmatprep.subr.bf16.mxu0 0
    %690 = vmatpush1.bf16.msra.mxu0 0
    %691 = vmatprep.subr.bf16.mxu0 0
    %692 = vmatpush1.bf16.msra.mxu0 0
    %693 = vmatprep.subr.bf16.mxu0 0
    %694 = vmatpush1.bf16.msra.mxu0 0
    %695 = vmatprep.subr.bf16.mxu0 0
    %696 = vmatpush1.bf16.msra.mxu0 0
    %697 = vmatprep.subr.bf16.mxu0 0
    %698 = vmatpush1.bf16.msra.mxu0 0
    %699 = vmatprep.subr.bf16.mxu0 0
    %700 = vmatpush1.bf16.msra.mxu0 0
    %701 = vmatprep.subr.bf16.mxu0 0
    %702 = vmatpush1.bf16.msra.mxu0 0
    %703 = vmatprep.subr.bf16.mxu0 0
    %704 = vmatpush1.bf16.msra.mxu0 0
    %705 = vmatprep.subr.bf16.mxu0 0
    %706 = vmatpush1.bf16.msra.mxu0 0
    %707 = vmatprep.subr.bf16.mxu0 0
    %708 = vmatpush1.bf16.msra.mxu0 0
    %709 = vmatprep.mubr.bf16.mxu0 0
    %710 = vmatmul.mubr.bf16.gmra.mrb[0].mxu0 %v675
    %v711 = vpop.f32.mrb[0].mxu0
    %v712 = vadd.f32 0.0, %v711
    %v713 = vpop.f32.mrb[0].mxu0
    %v714 = vadd.f32 0.0, %v713
    %v715 = vpop.f32.mrb[0].mxu0
    %v716 = vadd.f32 0.0, %v715
    %v717 = vpop.f32.mrb[0].mxu0
    %v718 = vadd.f32 0.0, %v717
    %719 = vdwg.mxu0
    %v721 = vsel %vm215, %v671, 0
    %723 = vmatprep.subr.bf16.mxu0 %v645
    %724 = vmatpush1.bf16.msra.mxu0 %v651
    %725 = vmatprep.subr.bf16.mxu0 0
    %726 = vmatpush1.bf16.msra.mxu0 0
    %727 = vmatprep.subr.bf16.mxu0 0
    %728 = vmatpush1.bf16.msra.mxu0 0
    %729 = vmatprep.subr.bf16.mxu0 0
    %730 = vmatpush1.bf16.msra.mxu0 0
    %731 = vmatprep.subr.bf16.mxu0 0
    %732 = vmatpush1.bf16.msra.mxu0 0
    %733 = vmatprep.subr.bf16.mxu0 0
    %734 = vmatpush1.bf16.msra.mxu0 0
    %735 = vmatprep.subr.bf16.mxu0 0
    %736 = vmatpush1.bf16.msra.mxu0 0
    %737 = vmatprep.subr.bf16.mxu0 0
    %738 = vmatpush1.bf16.msra.mxu0 0
    %739 = vmatprep.subr.bf16.mxu0 0
    %740 = vmatpush1.bf16.msra.mxu0 0
    %741 = vmatprep.subr.bf16.mxu0 0
    %742 = vmatpush1.bf16.msra.mxu0 0
    %743 = vmatprep.subr.bf16.mxu0 0
    %744 = vmatpush1.bf16.msra.mxu0 0
    %745 = vmatprep.subr.bf16.mxu0 0
    %746 = vmatpush1.bf16.msra.mxu0 0
    %747 = vmatprep.subr.bf16.mxu0 0
    %748 = vmatpush1.bf16.msra.mxu0 0
    %749 = vmatprep.subr.bf16.mxu0 0
    %750 = vmatpush1.bf16.msra.mxu0 0
    %751 = vmatprep.subr.bf16.mxu0 0
    %752 = vmatpush1.bf16.msra.mxu0 0
    %753 = vmatprep.subr.bf16.mxu0 0
    %754 = vmatpush1.bf16.msra.mxu0 0
    %755 = vmatprep.mubr.bf16.mxu0 0
    %756 = vmatmul.mubr.bf16.gmra.mrb[0].mxu0 %v721
    %v757 = vpop.f32.mrb[0].mxu0
    %v758 = vadd.f32 %v712, %v757
    %v759 = vpop.f32.mrb[0].mxu0
    %v760 = vadd.f32 %v714, %v759
    %v761 = vpop.f32.mrb[0].mxu0
    %v762 = vadd.f32 %v716, %v761
    %v763 = vpop.f32.mrb[0].mxu0
    %v764 = vadd.f32 %v718, %v763
    %765 = vdwg.mxu0
    %766 = vrot.lane.b32.xlu0 %v638, 124
    %v767 = vpop.permute.xlu0 %766
    %768 = vrot.lane.b32.xlu0 %v639, 124
    %v769 = vpop.permute.xlu0 %768
    %v770 = vsel %vm539, %v767, %v769
    %v774 = vsel %vm648, %v643, %v770
    %776 = vrot.lane.b32.xlu0 %v671, 96
    %v777 = vpop.permute.xlu0 %776
    %v779 = vsel %vm215, %v777, 0
    %781 = vmatprep.subr.bf16.mxu0 %v769
    %782 = vmatpush1.bf16.msra.mxu0 %v774
    %783 = vmatprep.subr.bf16.mxu0 0
    %784 = vmatpush1.bf16.msra.mxu0 0
    %785 = vmatprep.subr.bf16.mxu0 0
    %786 = vmatpush1.bf16.msra.mxu0 0
    %787 = vmatprep.subr.bf16.mxu0 0
    %788 = vmatpush1.bf16.msra.mxu0 0
    %789 = vmatprep.subr.bf16.mxu0 0
    %790 = vmatpush1.bf16.msra.mxu0 0
    %791 = vmatprep.subr.bf16.mxu0 0
    %792 = vmatpush1.bf16.msra.mxu0 0
    %793 = vmatprep.subr.bf16.mxu0 0
    %794 = vmatpush1.bf16.msra.mxu0 0
    %795 = vmatprep.subr.bf16.mxu0 0
    %796 = vmatpush1.bf16.msra.mxu0 0
    %797 = vmatprep.subr.bf16.mxu0 0
    %798 = vmatpush1.bf16.msra.mxu0 0
    %799 = vmatprep.subr.bf16.mxu0 0
    %800 = vmatpush1.bf16.msra.mxu0 0
    %801 = vmatprep.subr.bf16.mxu0 0
    %802 = vmatpush1.bf16.msra.mxu0 0
    %803 = vmatprep.subr.bf16.mxu0 0
    %804 = vmatpush1.bf16.msra.mxu0 0
    %805 = vmatprep.subr.bf16.mxu0 0
    %806 = vmatpush1.bf16.msra.mxu0 0
    %807 = vmatprep.subr.bf16.mxu0 0
    %808 = vmatpush1.bf16.msra.mxu0 0
    %809 = vmatprep.subr.bf16.mxu0 0
    %810 = vmatpush1.bf16.msra.mxu0 0
    %811 = vmatprep.subr.bf16.mxu0 0
    %812 = vmatpush1.bf16.msra.mxu0 0
    %813 = vmatprep.mubr.bf16.mxu0 0
    %814 = vmatmul.mubr.bf16.gmra.mrb[0].mxu0 %v779
    %v815 = vpop.f32.mrb[0].mxu0
    %v816 = vadd.f32 0.0, %v815
    %v817 = vpop.f32.mrb[0].mxu0
    %v818 = vadd.f32 0.0, %v817
    %v819 = vpop.f32.mrb[0].mxu0
    %v820 = vadd.f32 0.0, %v819
    %v821 = vpop.f32.mrb[0].mxu0
    %v822 = vadd.f32 0.0, %v821
    %823 = vdwg.mxu0
    %v824 = vadd.f32 %v758, %v816
    %v825 = vadd.f32 %v760, %v818
    %v826 = vadd.f32 %v762, %v820
    %v827 = vadd.f32 %v764, %v822
    %828 = vset.pattern.permute.xlu0 3
    %829 = vperm.xlu0 %828, %v133
    %v830 = vpop.permute.xlu0 %829
    %832 = vset.pattern.permute.xlu0 3
    %833 = vperm.xlu0 %832, %v134
    %v834 = vpop.permute.xlu0 %833
    %v836 = vadd.f32 %v824, %v830
    %v837 = vadd.f32 %v825, %v830
    %v838 = vadd.f32 %v826, %v834
    %v839 = vadd.f32 %v827, %v834
    %v840 = vxor.u32 %v836, 2147483648
    %v841 = vxor.u32 %v837, 2147483648
    %v842 = vxor.u32 %v838, 2147483648
    %v843 = vxor.u32 %v839, 2147483648
    %v844 = vmul.f32 %v840, 1.442695
    %v845 = vpow.pop %v844
    %v846 = vmul.f32 %v841, 1.442695
    %v847 = vpow.pop %v846
    %v848 = vmul.f32 %v842, 1.442695
    %v849 = vpow.pop %v848
    %v850 = vmul.f32 %v843, 1.442695
    %v851 = vpow.pop %v850
    %v852 = vadd.f32 %v845, 1.0
    %v853 = vadd.f32 %v847, 1.0
    %v854 = vadd.f32 %v849, 1.0
    %v855 = vadd.f32 %v851, 1.0
    %v856 = vrcp.pop %v852
    %v857 = vmul.f32 1.0, %v856
    %v858 = vrcp.pop %v853
    %v859 = vmul.f32 1.0, %v858
    %v860 = vrcp.pop %v854
    %v861 = vmul.f32 1.0, %v860
    %v862 = vrcp.pop %v855
    %v863 = vmul.f32 1.0, %v862
    %v864 = vmul.f32 %v836, %v857
    %v865 = vmul.f32 %v837, %v859
    %v866 = vmul.f32 %v838, %v861
    %v867 = vmul.f32 %v839, %v863
    %v868 = vpack.c.bf16 %v866, %v864
    %v869 = vpack.c.bf16 %v867, %v865
    %872 = vrot.lane.b32.xlu0 %v868, 126
    %v873 = vpop.permute.xlu0 %872
    %874 = vrot.lane.b32.xlu0 %v869, 126
    %v875 = vpop.permute.xlu0 %874
    %v876 = vsel %vm185, %v873, %v875
    %vm878 = vcmask 965632
    %v881 = vsel %vm878, %v868, %v876
    %v883 = vld [vmem:[#allocation2 + $0x20] sm:$0xf]
    %v884 = vld [vmem:[#allocation2 + $0x24] sm:$0xf]
    %885 = vrot.lane.b32.xlu0 %v868, 127
    %v886 = vpop.permute.xlu0 %885
    %887 = vrot.lane.b32.xlu0 %v868, 125
    %v888 = vpop.permute.xlu0 %887
    %889 = vrot.lane.b32.xlu0 %v869, 125
    %v890 = vpop.permute.xlu0 %889
    %v891 = vsel %vm201, %v888, %v890
    %v895 = vsel %vm878, %v886, %v891
    %v899 = vunpack.c.l.b16 %v883
    %v900 = vunpack.c.l.b16 %v884
    %v901 = vpack.c.b16 %v900, %v899
    %902 = vrot.lane.b32.xlu0 %v901, 112
    %v903 = vpop.permute.xlu0 %902
    %v905 = vsel %vm215, %v903, 0
    %907 = vmatprep.subr.bf16.mxu0 %v890
    %908 = vmatpush1.bf16.msra.mxu0 %v895
    %909 = vmatprep.subr.bf16.mxu0 0
    %910 = vmatpush1.bf16.msra.mxu0 0
    %911 = vmatprep.subr.bf16.mxu0 0
    %912 = vmatpush1.bf16.msra.mxu0 0
    %913 = vmatprep.subr.bf16.mxu0 0
    %914 = vmatpush1.bf16.msra.mxu0 0
    %915 = vmatprep.subr.bf16.mxu0 0
    %916 = vmatpush1.bf16.msra.mxu0 0
    %917 = vmatprep.subr.bf16.mxu0 0
    %918 = vmatpush1.bf16.msra.mxu0 0
    %919 = vmatprep.subr.bf16.mxu0 0
    %920 = vmatpush1.bf16.msra.mxu0 0
    %921 = vmatprep.subr.bf16.mxu0 0
    %922 = vmatpush1.bf16.msra.mxu0 0
    %923 = vmatprep.subr.bf16.mxu0 0
    %924 = vmatpush1.bf16.msra.mxu0 0
    %925 = vmatprep.subr.bf16.mxu0 0
    %926 = vmatpush1.bf16.msra.mxu0 0
    %927 = vmatprep.subr.bf16.mxu0 0
    %928 = vmatpush1.bf16.msra.mxu0 0
    %929 = vmatprep.subr.bf16.mxu0 0
    %930 = vmatpush1.bf16.msra.mxu0 0
    %931 = vmatprep.subr.bf16.mxu0 0
    %932 = vmatpush1.bf16.msra.mxu0 0
    %933 = vmatprep.subr.bf16.mxu0 0
    %934 = vmatpush1.bf16.msra.mxu0 0
    %935 = vmatprep.subr.bf16.mxu0 0
    %936 = vmatpush1.bf16.msra.mxu0 0
    %937 = vmatprep.subr.bf16.mxu0 0
    %938 = vmatpush1.bf16.msra.mxu0 0
    %939 = vmatprep.mubr.bf16.mxu0 0
    %940 = vmatmul.mubr.bf16.gmra.mrb[0].mxu0 %v905
    %v941 = vpop.f32.mrb[0].mxu0
    %v942 = vadd.f32 0.0, %v941
    %v943 = vpop.f32.mrb[0].mxu0
    %v944 = vadd.f32 0.0, %v943
    %v945 = vpop.f32.mrb[0].mxu0
    %v946 = vadd.f32 0.0, %v945
    %v947 = vpop.f32.mrb[0].mxu0
    %v948 = vadd.f32 0.0, %v947
    %949 = vdwg.mxu0
    %v951 = vsel %vm215, %v901, 0
    %953 = vmatprep.subr.bf16.mxu0 %v875
    %954 = vmatpush1.bf16.msra.mxu0 %v881
    %955 = vmatprep.subr.bf16.mxu0 0
    %956 = vmatpush1.bf16.msra.mxu0 0
    %957 = vmatprep.subr.bf16.mxu0 0
    %958 = vmatpush1.bf16.msra.mxu0 0
    %959 = vmatprep.subr.bf16.mxu0 0
    %960 = vmatpush1.bf16.msra.mxu0 0
    %961 = vmatprep.subr.bf16.mxu0 0
    %962 = vmatpush1.bf16.msra.mxu0 0
    %963 = vmatprep.subr.bf16.mxu0 0
    %964 = vmatpush1.bf16.msra.mxu0 0
    %965 = vmatprep.subr.bf16.mxu0 0
    %966 = vmatpush1.bf16.msra.mxu0 0
    %967 = vmatprep.subr.bf16.mxu0 0
    %968 = vmatpush1.bf16.msra.mxu0 0
    %969 = vmatprep.subr.bf16.mxu0 0
    %970 = vmatpush1.bf16.msra.mxu0 0
    %971 = vmatprep.subr.bf16.mxu0 0
    %972 = vmatpush1.bf16.msra.mxu0 0
    %973 = vmatprep.subr.bf16.mxu0 0
    %974 = vmatpush1.bf16.msra.mxu0 0
    %975 = vmatprep.subr.bf16.mxu0 0
    %976 = vmatpush1.bf16.msra.mxu0 0
    %977 = vmatprep.subr.bf16.mxu0 0
    %978 = vmatpush1.bf16.msra.mxu0 0
    %979 = vmatprep.subr.bf16.mxu0 0
    %980 = vmatpush1.bf16.msra.mxu0 0
    %981 = vmatprep.subr.bf16.mxu0 0
    %982 = vmatpush1.bf16.msra.mxu0 0
    %983 = vmatprep.subr.bf16.mxu0 0
    %984 = vmatpush1.bf16.msra.mxu0 0
    %985 = vmatprep.mubr.bf16.mxu0 0
    %986 = vmatmul.mubr.bf16.gmra.mrb[0].mxu0 %v951
    %v987 = vpop.f32.mrb[0].mxu0
    %v988 = vadd.f32 %v942, %v987
    %v989 = vpop.f32.mrb[0].mxu0
    %v990 = vadd.f32 %v944, %v989
    %v991 = vpop.f32.mrb[0].mxu0
    %v992 = vadd.f32 %v946, %v991
    %v993 = vpop.f32.mrb[0].mxu0
    %v994 = vadd.f32 %v948, %v993
    %995 = vdwg.mxu0
    %996 = vrot.lane.b32.xlu0 %v868, 124
    %v997 = vpop.permute.xlu0 %996
    %998 = vrot.lane.b32.xlu0 %v869, 124
    %v999 = vpop.permute.xlu0 %998
    %v1000 = vsel %vm539, %v997, %v999
    %v1004 = vsel %vm878, %v873, %v1000
    %1006 = vrot.lane.b32.xlu0 %v901, 96
    %v1007 = vpop.permute.xlu0 %1006
    %v1009 = vsel %vm215, %v1007, 0
    %1011 = vmatprep.subr.bf16.mxu0 %v999
    %1012 = vmatpush1.bf16.msra.mxu0 %v1004
    %1013 = vmatprep.subr.bf16.mxu0 0
    %1014 = vmatpush1.bf16.msra.mxu0 0
    %1015 = vmatprep.subr.bf16.mxu0 0
    %1016 = vmatpush1.bf16.msra.mxu0 0
    %1017 = vmatprep.subr.bf16.mxu0 0
    %1018 = vmatpush1.bf16.msra.mxu0 0
    %1019 = vmatprep.subr.bf16.mxu0 0
    %1020 = vmatpush1.bf16.msra.mxu0 0
    %1021 = vmatprep.subr.bf16.mxu0 0
    %1022 = vmatpush1.bf16.msra.mxu0 0
    %1023 = vmatprep.subr.bf16.mxu0 0
    %1024 = vmatpush1.bf16.msra.mxu0 0
    %1025 = vmatprep.subr.bf16.mxu0 0
    %1026 = vmatpush1.bf16.msra.mxu0 0
    %1027 = vmatprep.subr.bf16.mxu0 0
    %1028 = vmatpush1.bf16.msra.mxu0 0
    %1029 = vmatprep.subr.bf16.mxu0 0
    %1030 = vmatpush1.bf16.msra.mxu0 0
    %1031 = vmatprep.subr.bf16.mxu0 0
    %1032 = vmatpush1.bf16.msra.mxu0 0
    %1033 = vmatprep.subr.bf16.mxu0 0
    %1034 = vmatpush1.bf16.msra.mxu0 0
    %1035 = vmatprep.subr.bf16.mxu0 0
    %1036 = vmatpush1.bf16.msra.mxu0 0
    %1037 = vmatprep.subr.bf16.mxu0 0
    %1038 = vmatpush1.bf16.msra.mxu0 0
    %1039 = vmatprep.subr.bf16.mxu0 0
    %1040 = vmatpush1.bf16.msra.mxu0 0
    %1041 = vmatprep.subr.bf16.mxu0 0
    %1042 = vmatpush1.bf16.msra.mxu0 0
    %1043 = vmatprep.mubr.bf16.mxu0 0
    %1044 = vmatmul.mubr.bf16.gmra.mrb[0].mxu0 %v1009
    %v1045 = vpop.f32.mrb[0].mxu0
    %v1046 = vadd.f32 0.0, %v1045
    %v1047 = vpop.f32.mrb[0].mxu0
    %v1048 = vadd.f32 0.0, %v1047
    %v1049 = vpop.f32.mrb[0].mxu0
    %v1050 = vadd.f32 0.0, %v1049
    %v1051 = vpop.f32.mrb[0].mxu0
    %v1052 = vadd.f32 0.0, %v1051
    %1053 = vdwg.mxu0
    %v1054 = vadd.f32 %v988, %v1046
    %v1055 = vadd.f32 %v990, %v1048
    %v1056 = vadd.f32 %v992, %v1050
    %v1057 = vadd.f32 %v994, %v1052
    %v1058 = vlaneseq
    %v1059 = vshrl.u32 %v1058, 7
    %v1060 = vadd.s32 %v1059, 8
    %v1061 = vadd.s32 %v1059, 16
    %v1062 = vadd.s32 %v1059, 24
    %v1063 = vadd.s32 %v1059, 32
    %v1064 = vadd.s32 %v1059, 40
    %v1065 = vadd.s32 %v1059, 48
    %v1066 = vadd.s32 %v1059, 56
    %v1067 = vadd.s32 %v1059, 64
    %v1068 = vadd.s32 %v1059, 72
    %v1069 = vadd.s32 %v1059, 80
    %v1070 = vadd.s32 %v1059, 88
    %v1071 = vadd.s32 %v1059, 96
    %v1072 = vadd.s32 %v1059, 104
    %v1073 = vadd.s32 %v1059, 112
    %v1074 = vlaneseq
    %v1075 = vand.u32 %v1074, 127
    %v1076 = vmul.u32 %v1075, 2
    %vm1077 = vcmp.eq.s32.totalorder %v1059, %v1076
    %vm1078 = vcmp.eq.s32.totalorder %v1060, %v1076
    %vm1079 = vcmp.eq.s32.totalorder %v1061, %v1076
    %vm1080 = vcmp.eq.s32.totalorder %v1062, %v1076
    %vm1081 = vcmp.eq.s32.totalorder %v1063, %v1076
    %vm1082 = vcmp.eq.s32.totalorder %v1064, %v1076
    %vm1083 = vcmp.eq.s32.totalorder %v1065, %v1076
    %vm1084 = vcmp.eq.s32.totalorder %v1066, %v1076
    %vm1085 = vcmp.eq.s32.totalorder %v1067, %v1076
    %vm1086 = vcmp.eq.s32.totalorder %v1068, %v1076
    %vm1087 = vcmp.eq.s32.totalorder %v1069, %v1076
    %vm1088 = vcmp.eq.s32.totalorder %v1070, %v1076
    %vm1089 = vcmp.eq.s32.totalorder %v1071, %v1076
    %vm1090 = vcmp.eq.s32.totalorder %v1072, %v1076
    %vm1091 = vcmp.eq.s32.totalorder %v1073, %v1076
    %v1092 = vsel %vm1077, 1, 0
    %v1093 = vsel %vm1078, 1, 0
    %v1094 = vsel %vm1079, 1, 0
    %v1095 = vsel %vm1080, 1, 0
    %v1096 = vsel %vm1081, 1, 0
    %v1097 = vsel %vm1082, 1, 0
    %v1098 = vsel %vm1083, 1, 0
    %v1099 = vsel %vm1084, 1, 0
    %v1100 = vsel %vm1085, 1, 0
    %v1101 = vsel %vm1086, 1, 0
    %v1102 = vsel %vm1087, 1, 0
    %v1103 = vsel %vm1088, 1, 0
    %v1104 = vsel %vm1089, 1, 0
    %v1105 = vsel %vm1090, 1, 0
    %v1106 = vsel %vm1091, 1, 0
    %v1107 = vcvt.s32.f32 %v1092
    %v1108 = vcvt.s32.f32 %v1093
    %v1109 = vcvt.s32.f32 %v1094
    %v1110 = vcvt.s32.f32 %v1095
    %v1111 = vcvt.s32.f32 %v1096
    %v1112 = vcvt.s32.f32 %v1097
    %v1113 = vcvt.s32.f32 %v1098
    %v1114 = vcvt.s32.f32 %v1099
    %v1115 = vcvt.s32.f32 %v1100
    %v1116 = vcvt.s32.f32 %v1101
    %v1117 = vcvt.s32.f32 %v1102
    %v1118 = vcvt.s32.f32 %v1103
    %v1119 = vcvt.s32.f32 %v1104
    %v1120 = vcvt.s32.f32 %v1105
    %v1121 = vcvt.s32.f32 %v1106
    %v1123 = vsel %vm878, %v1054, 0
    %v1126 = vsel %vm878, %v1056, 0
    %vm1128 = vcmask 1045504
    %v1130 = vsel %vm1128, %v1121, 0
    %1132 = vmatprep.subr.mxu0 0.0
    %1133 = vmatpush1.msra.mxu0 %v1107
    %1134 = vmatprep.subr.mxu0 0.0
    %1135 = vmatpush1.msra.mxu0 %v1108
    %1136 = vmatprep.subr.mxu0 0.0
    %1137 = vmatpush1.msra.mxu0 %v1109
    %1138 = vmatprep.subr.mxu0 0.0
    %1139 = vmatpush1.msra.mxu0 %v1110
    %1140 = vmatprep.subr.mxu0 0.0
    %1141 = vmatpush1.msra.mxu0 %v1111
    %1142 = vmatprep.subr.mxu0 0.0
    %1143 = vmatpush1.msra.mxu0 %v1112
    %1144 = vmatprep.subr.mxu0 0.0
    %1145 = vmatpush1.msra.mxu0 %v1113
    %1146 = vmatprep.subr.mxu0 0.0
    %1147 = vmatpush1.msra.mxu0 %v1114
    %1148 = vmatprep.subr.mxu0 0.0
    %1149 = vmatpush1.msra.mxu0 %v1115
    %1150 = vmatprep.subr.mxu0 0.0
    %1151 = vmatpush1.msra.mxu0 %v1116
    %1152 = vmatprep.subr.mxu0 0.0
    %1153 = vmatpush1.msra.mxu0 %v1117
    %1154 = vmatprep.subr.mxu0 0.0
    %1155 = vmatpush1.msra.mxu0 %v1118
    %1156 = vmatprep.subr.mxu0 0.0
    %1157 = vmatpush1.msra.mxu0 %v1119
    %1158 = vmatprep.subr.mxu0 0.0
    %1159 = vmatpush1.msra.mxu0 %v1120
    %1160 = vmatprep.subr.mxu0 0.0
    %1161 = vmatpush1.msra.mxu0 %v1130
    %1162 = vmatprep.subr.mxu0 0.0
    %1163 = vmatpush1.msra.mxu0 0.0
    %1164 = vmatprep.subr.mxu0 0.0
    %1165 = vmatpush1.msra.mxu0 0.0
    %1166 = vmatprep.subr.mxu0 0.0
    %1167 = vmatpush1.msra.mxu0 0.0
    %1168 = vmatprep.subr.mxu0 0.0
    %1169 = vmatpush1.msra.mxu0 0.0
    %1170 = vmatprep.subr.mxu0 0.0
    %1171 = vmatpush1.msra.mxu0 0.0
    %1172 = vmatprep.subr.mxu0 0.0
    %1173 = vmatpush1.msra.mxu0 0.0
    %1174 = vmatprep.subr.mxu0 0.0
    %1175 = vmatpush1.msra.mxu0 0.0
    %1176 = vmatprep.subr.mxu0 0.0
    %1177 = vmatpush1.msra.mxu0 0.0
    %1178 = vmatprep.subr.mxu0 0.0
    %1179 = vmatpush1.msra.mxu0 0.0
    %1180 = vmatprep.subr.mxu0 0.0
    %1181 = vmatpush1.msra.mxu0 0.0
    %1182 = vmatprep.subr.mxu0 0.0
    %1183 = vmatpush1.msra.mxu0 0.0
    %1184 = vmatprep.subr.mxu0 0.0
    %1185 = vmatpush1.msra.mxu0 0.0
    %1186 = vmatprep.subr.mxu0 0.0
    %1187 = vmatpush1.msra.mxu0 0.0
    %1188 = vmatprep.subr.mxu0 0.0
    %1189 = vmatpush1.msra.mxu0 0.0
    %1190 = vmatprep.subr.mxu0 0.0
    %1191 = vmatpush1.msra.mxu0 0.0
    %1192 = vmatprep.subr.mxu0 0.0
    %1193 = vmatpush1.msra.mxu0 0.0
    %1194 = vmatprep.subr.mxu0 0.0
    %1195 = vmatpush1.msra.mxu0 0.0
    %1196 = vmatprep.mubr.f32.mxu0 0.0
    %1197 = vmatmul.mubr.f32.gmra.mrb[0].mxu0 %v1123
    %v1198 = vpop.f32.mrb[0].mxu0
    %v1199 = vadd.f32 0.0, %v1198
    %v1200 = vpop.f32.mrb[0].mxu0
    %1201 = vmatprep.mubr.f32.mxu0 0.0
    %1202 = vmatmul.mubr.f32.gmra.mrb[0].mxu0 %v1126
    %v1203 = vpop.f32.mrb[0].mxu0
    %v1204 = vadd.f32 0.0, %v1203
    %v1205 = vpop.f32.mrb[0].mxu0
    %1206 = vdwg.mxu0
    %1209 = vrot.lane.b32.xlu0 %v1054, 10
    %v1210 = vpop.permute.xlu0 %1209
    %1211 = vrot.lane.b32.xlu0 %v1055, 10
    %v1212 = vpop.permute.xlu0 %1211
    %1213 = vrot.lane.b32.xlu0 %v1056, 10
    %v1214 = vpop.permute.xlu0 %1213
    %1215 = vrot.lane.b32.xlu0 %v1057, 10
    %v1216 = vpop.permute.xlu0 %1215
    %vm1217 = vcmask 80896
    %v1218 = vsel %vm1217, %v1210, %v1212
    %v1219 = vsel %vm1217, %v1214, %v1216
    %v1220 = vsel %vm878, %v1218, 0
    %v1222 = vsel %vm878, %v1219, 0
    %1224 = vmatprep.subr.mxu0 0.0
    %1225 = vmatpush1.msra.mxu0 %v1107
    %1226 = vmatprep.subr.mxu0 0.0
    %1227 = vmatpush1.msra.mxu0 %v1108
    %1228 = vmatprep.subr.mxu0 0.0
    %1229 = vmatpush1.msra.mxu0 %v1109
    %1230 = vmatprep.subr.mxu0 0.0
    %1231 = vmatpush1.msra.mxu0 %v1110
    %1232 = vmatprep.subr.mxu0 0.0
    %1233 = vmatpush1.msra.mxu0 %v1111
    %1234 = vmatprep.subr.mxu0 0.0
    %1235 = vmatpush1.msra.mxu0 %v1112
    %1236 = vmatprep.subr.mxu0 0.0
    %1237 = vmatpush1.msra.mxu0 %v1113
    %1238 = vmatprep.subr.mxu0 0.0
    %1239 = vmatpush1.msra.mxu0 %v1114
    %1240 = vmatprep.subr.mxu0 0.0
    %1241 = vmatpush1.msra.mxu0 %v1115
    %1242 = vmatprep.subr.mxu0 0.0
    %1243 = vmatpush1.msra.mxu0 %v1116
    %1244 = vmatprep.subr.mxu0 0.0
    %1245 = vmatpush1.msra.mxu0 %v1117
    %1246 = vmatprep.subr.mxu0 0.0
    %1247 = vmatpush1.msra.mxu0 %v1118
    %1248 = vmatprep.subr.mxu0 0.0
    %1249 = vmatpush1.msra.mxu0 %v1119
    %1250 = vmatprep.subr.mxu0 0.0
    %1251 = vmatpush1.msra.mxu0 %v1120
    %1252 = vmatprep.subr.mxu0 0.0
    %1253 = vmatpush1.msra.mxu0 %v1130
    %1254 = vmatprep.subr.mxu0 0.0
    %1255 = vmatpush1.msra.mxu0 0.0
    %1256 = vmatprep.subr.mxu0 0.0
    %1257 = vmatpush1.msra.mxu0 0.0
    %1258 = vmatprep.subr.mxu0 0.0
    %1259 = vmatpush1.msra.mxu0 0.0
    %1260 = vmatprep.subr.mxu0 0.0
    %1261 = vmatpush1.msra.mxu0 0.0
    %1262 = vmatprep.subr.mxu0 0.0
    %1263 = vmatpush1.msra.mxu0 0.0
    %1264 = vmatprep.subr.mxu0 0.0
    %1265 = vmatpush1.msra.mxu0 0.0
    %1266 = vmatprep.subr.mxu0 0.0
    %1267 = vmatpush1.msra.mxu0 0.0
    %1268 = vmatprep.subr.mxu0 0.0
    %1269 = vmatpush1.msra.mxu0 0.0
    %1270 = vmatprep.subr.mxu0 0.0
    %1271 = vmatpush1.msra.mxu0 0.0
    %1272 = vmatprep.subr.mxu0 0.0
    %1273 = vmatpush1.msra.mxu0 0.0
    %1274 = vmatprep.subr.mxu0 0.0
    %1275 = vmatpush1.msra.mxu0 0.0
    %1276 = vmatprep.subr.mxu0 0.0
    %1277 = vmatpush1.msra.mxu0 0.0
    %1278 = vmatprep.subr.mxu0 0.0
    %1279 = vmatpush1.msra.mxu0 0.0
    %1280 = vmatprep.subr.mxu0 0.0
    %1281 = vmatpush1.msra.mxu0 0.0
    %1282 = vmatprep.subr.mxu0 0.0
    %1283 = vmatpush1.msra.mxu0 0.0
    %1284 = vmatprep.subr.mxu0 0.0
    %1285 = vmatpush1.msra.mxu0 0.0
    %1286 = vmatprep.subr.mxu0 0.0
    %1287 = vmatpush1.msra.mxu0 0.0
    %1288 = vmatprep.mubr.f32.mxu0 0.0
    %1289 = vmatmul.mubr.f32.gmra.mrb[0].mxu0 %v1220
    %v1290 = vpop.f32.mrb[0].mxu0
    %v1291 = vadd.f32 0.0, %v1290
    %v1292 = vpop.f32.mrb[0].mxu0
    %1293 = vmatprep.mubr.f32.mxu0 0.0
    %1294 = vmatmul.mubr.f32.gmra.mrb[0].mxu0 %v1222
    %v1295 = vpop.f32.mrb[0].mxu0
    %v1296 = vadd.f32 0.0, %v1295
    %v1297 = vpop.f32.mrb[0].mxu0
    %1298 = vdwg.mxu0
    %1301 = vrot.lane.b32.xlu0 %v1291, 59
    %v1302 = vpop.permute.xlu0 %1301
    %1303 = vrot.lane.b32.xlu0 %v1296, 59
    %v1304 = vpop.permute.xlu0 %1303
    %vm1307 = vcmask 482304
    %v1308 = vsel %vm1307, %v1199, %v1302
    %v1309 = vsel %vm1307, %v1204, %v1304
    %1310 = vset.pattern.permute.xlu0 4
    %1311 = vperm.xlu0 %1310, %v133
    %v1312 = vpop.permute.xlu0 %1311
    %1314 = vset.pattern.permute.xlu0 4
    %1315 = vperm.xlu0 %1314, %v134
    %v1316 = vpop.permute.xlu0 %1315
    %v1318 = vadd.f32 %v1308, %v1312
    %v1319 = vadd.f32 %v1309, %v1316
    %v1320 = vxor.u32 %v1318, 2147483648
    %v1321 = vxor.u32 %v1319, 2147483648
    %v1322 = vmul.f32 %v1320, 1.442695
    %v1323 = vpow.pop %v1322
    %v1324 = vmul.f32 %v1321, 1.442695
    %v1325 = vpow.pop %v1324
    %v1326 = vadd.f32 %v1323, 1.0
    %v1327 = vadd.f32 %v1325, 1.0
    %v1328 = vrcp.pop %v1326
    %v1329 = vmul.f32 1.0, %v1328
    %v1330 = vrcp.pop %v1327
    %v1331 = vmul.f32 1.0, %v1330
    %v1332 = vmul.f32 %v1318, %v1329
    %v1333 = vmul.f32 %v1319, %v1331
    %v1334 = vpack.c.bf16 %v1333, %v1332
    %1336 = vrot.lane.b32.xlu0 %v1334, 126
    %v1337 = vpop.permute.xlu0 %1336
    %vm1338 = vcmask 465920
    %v1341 = vsel %vm1338, %v1334, %v1337
    %v1343 = vld [vmem:[#allocation2 + $0x28] sm:$0xf]
    %v1344 = vld [vmem:[#allocation2 + $0x2c] sm:$0xf]
    %v1345 = vld [vmem:[#allocation2 + $0x30] sm:$0xf]
    %v1346 = vld [vmem:[#allocation2 + $0x34] sm:$0xf]
    %1347 = vrot.lane.b32.xlu0 %v1334, 127
    %v1348 = vpop.permute.xlu0 %1347
    %1349 = vrot.lane.b32.xlu0 %v1334, 125
    %v1350 = vpop.permute.xlu0 %1349
    %v1353 = vsel %vm1338, %v1348, %v1350
    %v1359 = vunpack.c.l.b16 %v1343
    %v1360 = vunpack.c.l.b16 %v1344
    %v1361 = vunpack.c.l.b16 %v1345
    %v1362 = vunpack.c.l.b16 %v1346
    %v1363 = vpack.c.b16 %v1360, %v1359
    %v1364 = vpack.c.b16 %v1362, %v1361
    %1365 = vrot.lane.b32.xlu0 %v1363, 112
    %v1366 = vpop.permute.xlu0 %1365
    %1367 = vrot.lane.b32.xlu0 %v1364, 112
    %v1368 = vpop.permute.xlu0 %1367
    %v1370 = vsel %vm215, %v1366, 0
    %v1373 = vsel %vm215, %v1368, 0
    %1375 = vmatprep.subr.bf16.mxu0 0
    %1376 = vmatpush1.bf16.msra.mxu0 %v1353
    %1377 = vmatprep.subr.bf16.mxu0 0
    %1378 = vmatpush1.bf16.msra.mxu0 0
    %1379 = vmatprep.subr.bf16.mxu0 0
    %1380 = vmatpush1.bf16.msra.mxu0 0
    %1381 = vmatprep.subr.bf16.mxu0 0
    %1382 = vmatpush1.bf16.msra.mxu0 0
    %1383 = vmatprep.subr.bf16.mxu0 0
    %1384 = vmatpush1.bf16.msra.mxu0 0
    %1385 = vmatprep.subr.bf16.mxu0 0
    %1386 = vmatpush1.bf16.msra.mxu0 0
    %1387 = vmatprep.subr.bf16.mxu0 0
    %1388 = vmatpush1.bf16.msra.mxu0 0
    %1389 = vmatprep.subr.bf16.mxu0 0
    %1390 = vmatpush1.bf16.msra.mxu0 0
    %1391 = vmatprep.subr.bf16.mxu0 0
    %1392 = vmatpush1.bf16.msra.mxu0 0
    %1393 = vmatprep.subr.bf16.mxu0 0
    %1394 = vmatpush1.bf16.msra.mxu0 0
    %1395 = vmatprep.subr.bf16.mxu0 0
    %1396 = vmatpush1.bf16.msra.mxu0 0
    %1397 = vmatprep.subr.bf16.mxu0 0
    %1398 = vmatpush1.bf16.msra.mxu0 0
    %1399 = vmatprep.subr.bf16.mxu0 0
    %1400 = vmatpush1.bf16.msra.mxu0 0
    %1401 = vmatprep.subr.bf16.mxu0 0
    %1402 = vmatpush1.bf16.msra.mxu0 0
    %1403 = vmatprep.subr.bf16.mxu0 0
    %1404 = vmatpush1.bf16.msra.mxu0 0
    %1405 = vmatprep.subr.bf16.mxu0 0
    %1406 = vmatpush1.bf16.msra.mxu0 0
    %1407 = vmatprep.mubr.bf16.mxu0 0
    %1408 = vmatmul.mubr.bf16.gmra.mrb[0].mxu0 %v1370
    %v1409 = vpop.f32.mrb[0].mxu0
    %v1410 = vadd.f32 0.0, %v1409
    %v1411 = vpop.f32.mrb[0].mxu0
    %v1412 = vpop.f32.mrb[0].mxu0
    %v1413 = vadd.f32 0.0, %v1412
    %v1414 = vpop.f32.mrb[0].mxu0
    %1415 = vmatprep.mubr.bf16.mxu0 0
    %1416 = vmatmul.mubr.bf16.gmra.mrb[0].mxu0 %v1373
    %v1417 = vpop.f32.mrb[0].mxu0
    %v1418 = vadd.f32 0.0, %v1417
    %v1419 = vpop.f32.mrb[0].mxu0
    %v1420 = vpop.f32.mrb[0].mxu0
    %v1421 = vadd.f32 0.0, %v1420
    %v1422 = vpop.f32.mrb[0].mxu0
    %1423 = vdwg.mxu0
    %v1425 = vsel %vm215, %v1363, 0
    %v1428 = vsel %vm215, %v1364, 0
    %1430 = vmatprep.subr.bf16.mxu0 0
    %1431 = vmatpush1.bf16.msra.mxu0 %v1341
    %1432 = vmatprep.subr.bf16.mxu0 0
    %1433 = vmatpush1.bf16.msra.mxu0 0
    %1434 = vmatprep.subr.bf16.mxu0 0
    %1435 = vmatpush1.bf16.msra.mxu0 0
    %1436 = vmatprep.subr.bf16.mxu0 0
    %1437 = vmatpush1.bf16.msra.mxu0 0
    %1438 = vmatprep.subr.bf16.mxu0 0
    %1439 = vmatpush1.bf16.msra.mxu0 0
    %1440 = vmatprep.subr.bf16.mxu0 0
    %1441 = vmatpush1.bf16.msra.mxu0 0
    %1442 = vmatprep.subr.bf16.mxu0 0
    %1443 = vmatpush1.bf16.msra.mxu0 0
    %1444 = vmatprep.subr.bf16.mxu0 0
    %1445 = vmatpush1.bf16.msra.mxu0 0
    %1446 = vmatprep.subr.bf16.mxu0 0
    %1447 = vmatpush1.bf16.msra.mxu0 0
    %1448 = vmatprep.subr.bf16.mxu0 0
    %1449 = vmatpush1.bf16.msra.mxu0 0
    %1450 = vmatprep.subr.bf16.mxu0 0
    %1451 = vmatpush1.bf16.msra.mxu0 0
    %1452 = vmatprep.subr.bf16.mxu0 0
    %1453 = vmatpush1.bf16.msra.mxu0 0
    %1454 = vmatprep.subr.bf16.mxu0 0
    %1455 = vmatpush1.bf16.msra.mxu0 0
    %1456 = vmatprep.subr.bf16.mxu0 0
    %1457 = vmatpush1.bf16.msra.mxu0 0
    %1458 = vmatprep.subr.bf16.mxu0 0
    %1459 = vmatpush1.bf16.msra.mxu0 0
    %1460 = vmatprep.subr.bf16.mxu0 0
    %1461 = vmatpush1.bf16.msra.mxu0 0
    %1462 = vmatprep.mubr.bf16.mxu0 0
    %1463 = vmatmul.mubr.bf16.gmra.mrb[0].mxu0 %v1425
    %v1464 = vpop.f32.mrb[0].mxu0
    %v1465 = vadd.f32 %v1410, %v1464
    %v1466 = vpop.f32.mrb[0].mxu0
    %v1467 = vpop.f32.mrb[0].mxu0
    %v1468 = vadd.f32 %v1413, %v1467
    %v1469 = vpop.f32.mrb[0].mxu0
    %1470 = vmatprep.mubr.bf16.mxu0 0
    %1471 = vmatmul.mubr.bf16.gmra.mrb[0].mxu0 %v1428
    %v1472 = vpop.f32.mrb[0].mxu0
    %v1473 = vadd.f32 %v1418, %v1472
    %v1474 = vpop.f32.mrb[0].mxu0
    %v1475 = vpop.f32.mrb[0].mxu0
    %v1476 = vadd.f32 %v1421, %v1475
    %v1477 = vpop.f32.mrb[0].mxu0
    %1478 = vdwg.mxu0
    %1479 = vrot.lane.b32.xlu0 %v1334, 124
    %v1480 = vpop.permute.xlu0 %1479
    %v1482 = vsel %vm1338, %v1337, %v1480
    %1484 = vrot.lane.b32.xlu0 %v1363, 96
    %v1485 = vpop.permute.xlu0 %1484
    %1486 = vrot.lane.b32.xlu0 %v1364, 96
    %v1487 = vpop.permute.xlu0 %1486
    %v1489 = vsel %vm215, %v1485, 0
    %v1492 = vsel %vm215, %v1487, 0
    %1494 = vmatprep.subr.bf16.mxu0 0
    %1495 = vmatpush1.bf16.msra.mxu0 %v1482
    %1496 = vmatprep.subr.bf16.mxu0 0
    %1497 = vmatpush1.bf16.msra.mxu0 0
    %1498 = vmatprep.subr.bf16.mxu0 0
    %1499 = vmatpush1.bf16.msra.mxu0 0
    %1500 = vmatprep.subr.bf16.mxu0 0
    %1501 = vmatpush1.bf16.msra.mxu0 0
    %1502 = vmatprep.subr.bf16.mxu0 0
    %1503 = vmatpush1.bf16.msra.mxu0 0
    %1504 = vmatprep.subr.bf16.mxu0 0
    %1505 = vmatpush1.bf16.msra.mxu0 0
    %1506 = vmatprep.subr.bf16.mxu0 0
    %1507 = vmatpush1.bf16.msra.mxu0 0
    %1508 = vmatprep.subr.bf16.mxu0 0
    %1509 = vmatpush1.bf16.msra.mxu0 0
    %1510 = vmatprep.subr.bf16.mxu0 0
    %1511 = vmatpush1.bf16.msra.mxu0 0
    %1512 = vmatprep.subr.bf16.mxu0 0
    %1513 = vmatpush1.bf16.msra.mxu0 0
    %1514 = vmatprep.subr.bf16.mxu0 0
    %1515 = vmatpush1.bf16.msra.mxu0 0
    %1516 = vmatprep.subr.bf16.mxu0 0
    %1517 = vmatpush1.bf16.msra.mxu0 0
    %1518 = vmatprep.subr.bf16.mxu0 0
    %1519 = vmatpush1.bf16.msra.mxu0 0
    %1520 = vmatprep.subr.bf16.mxu0 0
    %1521 = vmatpush1.bf16.msra.mxu0 0
    %1522 = vmatprep.subr.bf16.mxu0 0
    %1523 = vmatpush1.bf16.msra.mxu0 0
    %1524 = vmatprep.subr.bf16.mxu0 0
    %1525 = vmatpush1.bf16.msra.mxu0 0
    %1526 = vmatprep.mubr.bf16.mxu0 0
    %1527 = vmatmul.mubr.bf16.gmra.mrb[0].mxu0 %v1489
    %v1528 = vpop.f32.mrb[0].mxu0
    %v1529 = vadd.f32 0.0, %v1528
    %v1530 = vpop.f32.mrb[0].mxu0
    %v1531 = vpop.f32.mrb[0].mxu0
    %v1532 = vadd.f32 0.0, %v1531
    %v1533 = vpop.f32.mrb[0].mxu0
    %1534 = vmatprep.mubr.bf16.mxu0 0
    %1535 = vmatmul.mubr.bf16.gmra.mrb[0].mxu0 %v1492
    %v1536 = vpop.f32.mrb[0].mxu0
    %v1537 = vadd.f32 0.0, %v1536
    %v1538 = vpop.f32.mrb[0].mxu0
    %v1539 = vpop.f32.mrb[0].mxu0
    %v1540 = vadd.f32 0.0, %v1539
    %v1541 = vpop.f32.mrb[0].mxu0
    %1542 = vdwg.mxu0
    %v1543 = vadd.f32 %v1465, %v1529
    %v1544 = vadd.f32 %v1468, %v1532
    %v1545 = vadd.f32 %v1473, %v1537
    %v1546 = vadd.f32 %v1476, %v1540
    %v1547 = vld [vmem:[%s2] sm:$0xff]
    %v1548 = vld [vmem:[%s2 + $0x8] sm:$0xff]
    %v1549 = vld [vmem:[%s2 + $0x10] sm:$0xff]
    %v1550 = vld [vmem:[%s2 + $0x18] sm:$0xff]
    %1552 = vset.pattern.permute.xlu0 5
    %1553 = vperm.xlu0 %1552, %v1547
    %v1554 = vpop.permute.xlu0 %1553
    %1557 = vset.pattern.permute.xlu0 5
    %1558 = vperm.xlu0 %1557, %v1548
    %v1559 = vpop.permute.xlu0 %1558
    %1562 = vset.pattern.permute.xlu0 5
    %1563 = vperm.xlu0 %1562, %v1549
    %v1564 = vpop.permute.xlu0 %1563
    %1567 = vset.pattern.permute.xlu0 5
    %1568 = vperm.xlu0 %1567, %v1550
    %v1569 = vpop.permute.xlu0 %1568
    %v1571 = vadd.f32 %v1543, %v1554
    %v1572 = vadd.f32 %v1544, %v1559
    %v1573 = vadd.f32 %v1545, %v1564
    %v1574 = vadd.f32 %v1546, %v1569
    %v1575 = vxor.u32 %v1571, 2147483648
    %v1576 = vxor.u32 %v1572, 2147483648
    %v1577 = vxor.u32 %v1573, 2147483648
    %v1578 = vxor.u32 %v1574, 2147483648
    %v1579 = vmul.f32 %v1575, 1.442695
    %v1580 = vpow.pop %v1579
    %v1581 = vmul.f32 %v1576, 1.442695
    %v1582 = vpow.pop %v1581
    %v1583 = vmul.f32 %v1577, 1.442695
    %v1584 = vpow.pop %v1583
    %v1585 = vmul.f32 %v1578, 1.442695
    %v1586 = vpow.pop %v1585
    %v1587 = vadd.f32 %v1580, 1.0
    %v1588 = vadd.f32 %v1582, 1.0
    %v1589 = vadd.f32 %v1584, 1.0
    %v1590 = vadd.f32 %v1586, 1.0
    %v1591 = vrcp.pop %v1587
    %v1592 = vmul.f32 1.0, %v1591
    %v1593 = vrcp.pop %v1588
    %v1594 = vmul.f32 1.0, %v1593
    %v1595 = vrcp.pop %v1589
    %v1596 = vmul.f32 1.0, %v1595
    %v1597 = vrcp.pop %v1590
    %v1598 = vmul.f32 1.0, %v1597
    %v1599 = vmul.f32 %v1571, %v1592
    %v1600 = vmul.f32 %v1572, %v1594
    %v1601 = vmul.f32 %v1573, %v1596
    %v1602 = vmul.f32 %v1574, %v1598
    %v1603 = vpack.c.bf16 %v1600, %v1599
    %v1604 = vpack.c.bf16 %v1602, %v1601
    %1607 = vrot.lane.b32.xlu0 %v1603, 126
    %v1608 = vpop.permute.xlu0 %1607
    %1609 = vrot.lane.b32.xlu0 %v1604, 126
    %v1610 = vpop.permute.xlu0 %1609
    %vm1611 = vcmask 449536
    %v1614 = vsel %vm1611, %v1603, %v1608
    %v1618 = vsel %vm1611, %v1604, %v1610
    %v1620 = vld [vmem:[#allocation2 + $0x38] sm:$0xf]
    %v1621 = vld [vmem:[#allocation2 + $0x3c] sm:$0xf]
    %v1622 = vld [vmem:[#allocation2 + $0x40] sm:$0xf]
    %v1623 = vld [vmem:[#allocation2 + $0x44] sm:$0xf]
    %1624 = vrot.lane.b32.xlu0 %v1603, 127
    %v1625 = vpop.permute.xlu0 %1624
    %1626 = vrot.lane.b32.xlu0 %v1604, 127
    %v1627 = vpop.permute.xlu0 %1626
    %1628 = vrot.lane.b32.xlu0 %v1603, 125
    %v1629 = vpop.permute.xlu0 %1628
    %1630 = vrot.lane.b32.xlu0 %v1604, 125
    %v1631 = vpop.permute.xlu0 %1630
    %v1634 = vsel %vm1611, %v1625, %v1629
    %v1638 = vsel %vm1611, %v1627, %v1631
    %v1644 = vunpack.c.l.b16 %v1620
    %v1645 = vunpack.c.l.b16 %v1621
    %v1646 = vunpack.c.l.b16 %v1622
    %v1647 = vunpack.c.l.b16 %v1623
    %v1648 = vpack.c.b16 %v1645, %v1644
    %v1649 = vpack.c.b16 %v1647, %v1646
    %1650 = vrot.lane.b32.xlu0 %v1648, 96
    %v1651 = vpop.permute.xlu0 %1650
    %1652 = vrot.lane.b32.xlu0 %v1649, 96
    %v1653 = vpop.permute.xlu0 %1652
    %vm1654 = vcmask 261120
    %v1656 = vsel %vm1654, %v1651, 0
    %v1659 = vsel %vm1654, %v1653, 0
    %1661 = vmatprep.subr.bf16.mxu0 0
    %1662 = vmatpush1.bf16.msra.mxu0 %v1634
    %1663 = vmatprep.subr.bf16.mxu0 0
    %1664 = vmatpush1.bf16.msra.mxu0 %v1638
    %1665 = vmatprep.subr.bf16.mxu0 0
    %1666 = vmatpush1.bf16.msra.mxu0 0
    %1667 = vmatprep.subr.bf16.mxu0 0
    %1668 = vmatpush1.bf16.msra.mxu0 0
    %1669 = vmatprep.subr.bf16.mxu0 0
    %1670 = vmatpush1.bf16.msra.mxu0 0
    %1671 = vmatprep.subr.bf16.mxu0 0
    %1672 = vmatpush1.bf16.msra.mxu0 0
    %1673 = vmatprep.subr.bf16.mxu0 0
    %1674 = vmatpush1.bf16.msra.mxu0 0
    %1675 = vmatprep.subr.bf16.mxu0 0
    %1676 = vmatpush1.bf16.msra.mxu0 0
    %1677 = vmatprep.subr.bf16.mxu0 0
    %1678 = vmatpush1.bf16.msra.mxu0 0
    %1679 = vmatprep.subr.bf16.mxu0 0
    %1680 = vmatpush1.bf16.msra.mxu0 0
    %1681 = vmatprep.subr.bf16.mxu0 0
    %1682 = vmatpush1.bf16.msra.mxu0 0
    %1683 = vmatprep.subr.bf16.mxu0 0
    %1684 = vmatpush1.bf16.msra.mxu0 0
    %1685 = vmatprep.subr.bf16.mxu0 0
    %1686 = vmatpush1.bf16.msra.mxu0 0
    %1687 = vmatprep.subr.bf16.mxu0 0
    %1688 = vmatpush1.bf16.msra.mxu0 0
    %1689 = vmatprep.subr.bf16.mxu0 0
    %1690 = vmatpush1.bf16.msra.mxu0 0
    %1691 = vmatprep.subr.bf16.mxu0 0
    %1692 = vmatpush1.bf16.msra.mxu0 0
    %1693 = vmatprep.mubr.bf16.mxu0 0
    %1694 = vmatmul.mubr.bf16.gmra.mrb[0].mxu0 %v1656
    %v1695 = vpop.f32.mrb[0].mxu0
    %v1696 = vadd.f32 0.0, %v1695
    %v1697 = vpop.f32.mrb[0].mxu0
    %v1698 = vpop.f32.mrb[0].mxu0
    %v1699 = vadd.f32 0.0, %v1698
    %v1700 = vpop.f32.mrb[0].mxu0
    %1701 = vmatprep.mubr.bf16.mxu0 0
    %1702 = vmatmul.mubr.bf16.gmra.mrb[0].mxu0 %v1659
    %v1703 = vpop.f32.mrb[0].mxu0
    %v1704 = vadd.f32 0.0, %v1703
    %v1705 = vpop.f32.mrb[0].mxu0
    %v1706 = vpop.f32.mrb[0].mxu0
    %v1707 = vadd.f32 0.0, %v1706
    %v1708 = vpop.f32.mrb[0].mxu0
    %1709 = vdwg.mxu0
    %v1711 = vsel %vm1654, %v1648, 0
    %v1714 = vsel %vm1654, %v1649, 0
    %1716 = vmatprep.subr.bf16.mxu0 0
    %1717 = vmatpush1.bf16.msra.mxu0 %v1614
    %1718 = vmatprep.subr.bf16.mxu0 0
    %1719 = vmatpush1.bf16.msra.mxu0 %v1618
    %1720 = vmatprep.subr.bf16.mxu0 0
    %1721 = vmatpush1.bf16.msra.mxu0 0
    %1722 = vmatprep.subr.bf16.mxu0 0
    %1723 = vmatpush1.bf16.msra.mxu0 0
    %1724 = vmatprep.subr.bf16.mxu0 0
    %1725 = vmatpush1.bf16.msra.mxu0 0
    %1726 = vmatprep.subr.bf16.mxu0 0
    %1727 = vmatpush1.bf16.msra.mxu0 0
    %1728 = vmatprep.subr.bf16.mxu0 0
    %1729 = vmatpush1.bf16.msra.mxu0 0
    %1730 = vmatprep.subr.bf16.mxu0 0
    %1731 = vmatpush1.bf16.msra.mxu0 0
    %1732 = vmatprep.subr.bf16.mxu0 0
    %1733 = vmatpush1.bf16.msra.mxu0 0
    %1734 = vmatprep.subr.bf16.mxu0 0
    %1735 = vmatpush1.bf16.msra.mxu0 0
    %1736 = vmatprep.subr.bf16.mxu0 0
    %1737 = vmatpush1.bf16.msra.mxu0 0
    %1738 = vmatprep.subr.bf16.mxu0 0
    %1739 = vmatpush1.bf16.msra.mxu0 0
    %1740 = vmatprep.subr.bf16.mxu0 0
    %1741 = vmatpush1.bf16.msra.mxu0 0
    %1742 = vmatprep.subr.bf16.mxu0 0
    %1743 = vmatpush1.bf16.msra.mxu0 0
    %1744 = vmatprep.subr.bf16.mxu0 0
    %1745 = vmatpush1.bf16.msra.mxu0 0
    %1746 = vmatprep.subr.bf16.mxu0 0
    %1747 = vmatpush1.bf16.msra.mxu0 0
    %1748 = vmatprep.mubr.bf16.mxu0 0
    %1749 = vmatmul.mubr.bf16.gmra.mrb[0].mxu0 %v1711
    %v1750 = vpop.f32.mrb[0].mxu0
    %v1751 = vadd.f32 %v1696, %v1750
    %v1752 = vpop.f32.mrb[0].mxu0
    %v1753 = vpop.f32.mrb[0].mxu0
    %v1754 = vadd.f32 %v1699, %v1753
    %v1755 = vpop.f32.mrb[0].mxu0
    %1756 = vmatprep.mubr.bf16.mxu0 0
    %1757 = vmatmul.mubr.bf16.gmra.mrb[0].mxu0 %v1714
    %v1758 = vpop.f32.mrb[0].mxu0
    %v1759 = vadd.f32 %v1704, %v1758
    %v1760 = vpop.f32.mrb[0].mxu0
    %v1761 = vpop.f32.mrb[0].mxu0
    %v1762 = vadd.f32 %v1707, %v1761
    %v1763 = vpop.f32.mrb[0].mxu0
    %1764 = vdwg.mxu0
    %1765 = vrot.lane.b32.xlu0 %v1603, 124
    %v1766 = vpop.permute.xlu0 %1765
    %1767 = vrot.lane.b32.xlu0 %v1604, 124
    %v1768 = vpop.permute.xlu0 %1767
    %v1770 = vsel %vm1611, %v1608, %v1766
    %v1773 = vsel %vm1611, %v1610, %v1768
    %1775 = vrot.lane.b32.xlu0 %v1648, 64
    %v1776 = vpop.permute.xlu0 %1775
    %1777 = vrot.lane.b32.xlu0 %v1649, 64
    %v1778 = vpop.permute.xlu0 %1777
    %v1780 = vsel %vm1654, %v1776, 0
    %v1783 = vsel %vm1654, %v1778, 0
    %1785 = vmatprep.subr.bf16.mxu0 0
    %1786 = vmatpush1.bf16.msra.mxu0 %v1770
    %1787 = vmatprep.subr.bf16.mxu0 0
    %1788 = vmatpush1.bf16.msra.mxu0 %v1773
    %1789 = vmatprep.subr.bf16.mxu0 0
    %1790 = vmatpush1.bf16.msra.mxu0 0
    %1791 = vmatprep.subr.bf16.mxu0 0
    %1792 = vmatpush1.bf16.msra.mxu0 0
    %1793 = vmatprep.subr.bf16.mxu0 0
    %1794 = vmatpush1.bf16.msra.mxu0 0
    %1795 = vmatprep.subr.bf16.mxu0 0
    %1796 = vmatpush1.bf16.msra.mxu0 0
    %1797 = vmatprep.subr.bf16.mxu0 0
    %1798 = vmatpush1.bf16.msra.mxu0 0
    %1799 = vmatprep.subr.bf16.mxu0 0
    %1800 = vmatpush1.bf16.msra.mxu0 0
    %1801 = vmatprep.subr.bf16.mxu0 0
    %1802 = vmatpush1.bf16.msra.mxu0 0
    %1803 = vmatprep.subr.bf16.mxu0 0
    %1804 = vmatpush1.bf16.msra.mxu0 0
    %1805 = vmatprep.subr.bf16.mxu0 0
    %1806 = vmatpush1.bf16.msra.mxu0 0
    %1807 = vmatprep.subr.bf16.mxu0 0
    %1808 = vmatpush1.bf16.msra.mxu0 0
    %1809 = vmatprep.subr.bf16.mxu0 0
    %1810 = vmatpush1.bf16.msra.mxu0 0
    %1811 = vmatprep.subr.bf16.mxu0 0
    %1812 = vmatpush1.bf16.msra.mxu0 0
    %1813 = vmatprep.subr.bf16.mxu0 0
    %1814 = vmatpush1.bf16.msra.mxu0 0
    %1815 = vmatprep.subr.bf16.mxu0 0
    %1816 = vmatpush1.bf16.msra.mxu0 0
    %1817 = vmatprep.mubr.bf16.mxu0 0
    %1818 = vmatmul.mubr.bf16.gmra.mrb[0].mxu0 %v1780
    %v1819 = vpop.f32.mrb[0].mxu0
    %v1820 = vadd.f32 0.0, %v1819
    %v1821 = vpop.f32.mrb[0].mxu0
    %v1822 = vpop.f32.mrb[0].mxu0
    %v1823 = vadd.f32 0.0, %v1822
    %v1824 = vpop.f32.mrb[0].mxu0
    %1825 = vmatprep.mubr.bf16.mxu0 0
    %1826 = vmatmul.mubr.bf16.gmra.mrb[0].mxu0 %v1783
    %v1827 = vpop.f32.mrb[0].mxu0
    %v1828 = vadd.f32 0.0, %v1827
    %v1829 = vpop.f32.mrb[0].mxu0
    %v1830 = vpop.f32.mrb[0].mxu0
    %v1831 = vadd.f32 0.0, %v1830
    %v1832 = vpop.f32.mrb[0].mxu0
    %1833 = vdwg.mxu0
    %v1834 = vadd.f32 %v1751, %v1820
    %v1835 = vadd.f32 %v1754, %v1823
    %v1836 = vadd.f32 %v1759, %v1828
    %v1837 = vadd.f32 %v1762, %v1831
    %1838 = vset.pattern.permute.xlu0 6
    %1839 = vperm.xlu0 %1838, %v1547
    %v1840 = vpop.permute.xlu0 %1839
    %1842 = vset.pattern.permute.xlu0 6
    %1843 = vperm.xlu0 %1842, %v1548
    %v1844 = vpop.permute.xlu0 %1843
    %1846 = vset.pattern.permute.xlu0 6
    %1847 = vperm.xlu0 %1846, %v1549
    %v1848 = vpop.permute.xlu0 %1847
    %1850 = vset.pattern.permute.xlu0 6
    %1851 = vperm.xlu0 %1850, %v1550
    %v1852 = vpop.permute.xlu0 %1851
    %v1854 = vadd.f32 %v1834, %v1840
    %v1855 = vadd.f32 %v1835, %v1844
    %v1856 = vadd.f32 %v1836, %v1848
    %v1857 = vadd.f32 %v1837, %v1852
    %v1858 = vxor.u32 %v1854, 2147483648
    %v1859 = vxor.u32 %v1855, 2147483648
    %v1860 = vxor.u32 %v1856, 2147483648
    %v1861 = vxor.u32 %v1857, 2147483648
    %v1862 = vmul.f32 %v1858, 1.442695
    %v1863 = vpow.pop %v1862
    %v1864 = vmul.f32 %v1859, 1.442695
    %v1865 = vpow.pop %v1864
    %v1866 = vmul.f32 %v1860, 1.442695
    %v1867 = vpow.pop %v1866
    %v1868 = vmul.f32 %v1861, 1.442695
    %v1869 = vpow.pop %v1868
    %v1870 = vadd.f32 %v1863, 1.0
    %v1871 = vadd.f32 %v1865, 1.0
    %v1872 = vadd.f32 %v1867, 1.0
    %v1873 = vadd.f32 %v1869, 1.0
    %v1874 = vrcp.pop %v1870
    %v1875 = vmul.f32 1.0, %v1874
    %v1876 = vrcp.pop %v1871
    %v1877 = vmul.f32 1.0, %v1876
    %v1878 = vrcp.pop %v1872
    %v1879 = vmul.f32 1.0, %v1878
    %v1880 = vrcp.pop %v1873
    %v1881 = vmul.f32 1.0, %v1880
    %v1882 = vmul.f32 %v1854, %v1875
    %v1883 = vmul.f32 %v1855, %v1877
    %v1884 = vmul.f32 %v1856, %v1879
    %v1885 = vmul.f32 %v1857, %v1881
    %v1886 = vpack.c.bf16 %v1883, %v1882
    %v1887 = vpack.c.bf16 %v1885, %v1884
    %1890 = vrot.lane.b32.xlu0 %v1886, 126
    %v1891 = vpop.permute.xlu0 %1890
    %1892 = vrot.lane.b32.xlu0 %v1887, 126
    %v1893 = vpop.permute.xlu0 %1892
    %vm1894 = vcmask 433152
    %v1897 = vsel %vm1894, %v1886, %v1891
    %v1901 = vsel %vm1894, %v1887, %v1893
    %v1903 = vld [vmem:[#allocation2 + $0x48] sm:$0xf]
    %v1904 = vld [vmem:[#allocation2 + $0x4c] sm:$0xf]
    %1905 = vrot.lane.b32.xlu0 %v1886, 127
    %v1906 = vpop.permute.xlu0 %1905
    %1907 = vrot.lane.b32.xlu0 %v1887, 127
    %v1908 = vpop.permute.xlu0 %1907
    %1909 = vrot.lane.b32.xlu0 %v1886, 125
    %v1910 = vpop.permute.xlu0 %1909
    %1911 = vrot.lane.b32.xlu0 %v1887, 125
    %v1912 = vpop.permute.xlu0 %1911
    %v1915 = vsel %vm1894, %v1906, %v1910
    %v1919 = vsel %vm1894, %v1908, %v1912
    %v1923 = vunpack.c.l.b16 %v1903
    %v1924 = vunpack.c.l.b16 %v1904
    %v1925 = vpack.c.b16 %v1924, %v1923
    %1926 = vrot.lane.b32.xlu0 %v1925, 96
    %v1927 = vpop.permute.xlu0 %1926
    %v1929 = vsel %vm1654, %v1927, 0
    %1931 = vmatprep.subr.bf16.mxu0 0
    %1932 = vmatpush1.bf16.msra.mxu0 %v1915
    %1933 = vmatprep.subr.bf16.mxu0 0
    %1934 = vmatpush1.bf16.msra.mxu0 %v1919
    %1935 = vmatprep.subr.bf16.mxu0 0
    %1936 = vmatpush1.bf16.msra.mxu0 0
    %1937 = vmatprep.subr.bf16.mxu0 0
    %1938 = vmatpush1.bf16.msra.mxu0 0
    %1939 = vmatprep.subr.bf16.mxu0 0
    %1940 = vmatpush1.bf16.msra.mxu0 0
    %1941 = vmatprep.subr.bf16.mxu0 0
    %1942 = vmatpush1.bf16.msra.mxu0 0
    %1943 = vmatprep.subr.bf16.mxu0 0
    %1944 = vmatpush1.bf16.msra.mxu0 0
    %1945 = vmatprep.subr.bf16.mxu0 0
    %1946 = vmatpush1.bf16.msra.mxu0 0
    %1947 = vmatprep.subr.bf16.mxu0 0
    %1948 = vmatpush1.bf16.msra.mxu0 0
    %1949 = vmatprep.subr.bf16.mxu0 0
    %1950 = vmatpush1.bf16.msra.mxu0 0
    %1951 = vmatprep.subr.bf16.mxu0 0
    %1952 = vmatpush1.bf16.msra.mxu0 0
    %1953 = vmatprep.subr.bf16.mxu0 0
    %1954 = vmatpush1.bf16.msra.mxu0 0
    %1955 = vmatprep.subr.bf16.mxu0 0
    %1956 = vmatpush1.bf16.msra.mxu0 0
    %1957 = vmatprep.subr.bf16.mxu0 0
    %1958 = vmatpush1.bf16.msra.mxu0 0
    %1959 = vmatprep.subr.bf16.mxu0 0
    %1960 = vmatpush1.bf16.msra.mxu0 0
    %1961 = vmatprep.subr.bf16.mxu0 0
    %1962 = vmatpush1.bf16.msra.mxu0 0
    %1963 = vmatprep.mubr.bf16.mxu0 0
    %1964 = vmatmul.mubr.bf16.gmra.mrb[0].mxu0 %v1929
    %v1965 = vpop.f32.mrb[0].mxu0
    %v1966 = vadd.f32 0.0, %v1965
    %v1967 = vpop.f32.mrb[0].mxu0
    %v1968 = vpop.f32.mrb[0].mxu0
    %v1969 = vadd.f32 0.0, %v1968
    %v1970 = vpop.f32.mrb[0].mxu0
    %1971 = vdwg.mxu0
    %v1973 = vsel %vm1654, %v1925, 0
    %1975 = vmatprep.subr.bf16.mxu0 0
    %1976 = vmatpush1.bf16.msra.mxu0 %v1897
    %1977 = vmatprep.subr.bf16.mxu0 0
    %1978 = vmatpush1.bf16.msra.mxu0 %v1901
    %1979 = vmatprep.subr.bf16.mxu0 0
    %1980 = vmatpush1.bf16.msra.mxu0 0
    %1981 = vmatprep.subr.bf16.mxu0 0
    %1982 = vmatpush1.bf16.msra.mxu0 0
    %1983 = vmatprep.subr.bf16.mxu0 0
    %1984 = vmatpush1.bf16.msra.mxu0 0
    %1985 = vmatprep.subr.bf16.mxu0 0
    %1986 = vmatpush1.bf16.msra.mxu0 0
    %1987 = vmatprep.subr.bf16.mxu0 0
    %1988 = vmatpush1.bf16.msra.mxu0 0
    %1989 = vmatprep.subr.bf16.mxu0 0
    %1990 = vmatpush1.bf16.msra.mxu0 0
    %1991 = vmatprep.subr.bf16.mxu0 0
    %1992 = vmatpush1.bf16.msra.mxu0 0
    %1993 = vmatprep.subr.bf16.mxu0 0
    %1994 = vmatpush1.bf16.msra.mxu0 0
    %1995 = vmatprep.subr.bf16.mxu0 0
    %1996 = vmatpush1.bf16.msra.mxu0 0
    %1997 = vmatprep.subr.bf16.mxu0 0
    %1998 = vmatpush1.bf16.msra.mxu0 0
    %1999 = vmatprep.subr.bf16.mxu0 0
    %2000 = vmatpush1.bf16.msra.mxu0 0
    %2001 = vmatprep.subr.bf16.mxu0 0
    %2002 = vmatpush1.bf16.msra.mxu0 0
    %2003 = vmatprep.subr.bf16.mxu0 0
    %2004 = vmatpush1.bf16.msra.mxu0 0
    %2005 = vmatprep.subr.bf16.mxu0 0
    %2006 = vmatpush1.bf16.msra.mxu0 0
    %2007 = vmatprep.mubr.bf16.mxu0 0
    %2008 = vmatmul.mubr.bf16.gmra.mrb[0].mxu0 %v1973
    %v2009 = vpop.f32.mrb[0].mxu0
    %v2010 = vadd.f32 %v1966, %v2009
    %v2011 = vpop.f32.mrb[0].mxu0
    %v2012 = vpop.f32.mrb[0].mxu0
    %v2013 = vadd.f32 %v1969, %v2012
    %v2014 = vpop.f32.mrb[0].mxu0
    %2015 = vdwg.mxu0
    %2016 = vrot.lane.b32.xlu0 %v1886, 124
    %v2017 = vpop.permute.xlu0 %2016
    %2018 = vrot.lane.b32.xlu0 %v1887, 124
    %v2019 = vpop.permute.xlu0 %2018
    %v2021 = vsel %vm1894, %v1891, %v2017
    %v2024 = vsel %vm1894, %v1893, %v2019
    %2026 = vrot.lane.b32.xlu0 %v1925, 64
    %v2027 = vpop.permute.xlu0 %2026
    %v2029 = vsel %vm1654, %v2027, 0
    %2031 = vmatprep.subr.bf16.mxu0 0
    %2032 = vmatpush1.bf16.msra.mxu0 %v2021
    %2033 = vmatprep.subr.bf16.mxu0 0
    %2034 = vmatpush1.bf16.msra.mxu0 %v2024
    %2035 = vmatprep.subr.bf16.mxu0 0
    %2036 = vmatpush1.bf16.msra.mxu0 0
    %2037 = vmatprep.subr.bf16.mxu0 0
    %2038 = vmatpush1.bf16.msra.mxu0 0
    %2039 = vmatprep.subr.bf16.mxu0 0
    %2040 = vmatpush1.bf16.msra.mxu0 0
    %2041 = vmatprep.subr.bf16.mxu0 0
    %2042 = vmatpush1.bf16.msra.mxu0 0
    %2043 = vmatprep.subr.bf16.mxu0 0
    %2044 = vmatpush1.bf16.msra.mxu0 0
    %2045 = vmatprep.subr.bf16.mxu0 0
    %2046 = vmatpush1.bf16.msra.mxu0 0
    %2047 = vmatprep.subr.bf16.mxu0 0
    %2048 = vmatpush1.bf16.msra.mxu0 0
    %2049 = vmatprep.subr.bf16.mxu0 0
    %2050 = vmatpush1.bf16.msra.mxu0 0
    %2051 = vmatprep.subr.bf16.mxu0 0
    %2052 = vmatpush1.bf16.msra.mxu0 0
    %2053 = vmatprep.subr.bf16.mxu0 0
    %2054 = vmatpush1.bf16.msra.mxu0 0
    %2055 = vmatprep.subr.bf16.mxu0 0
    %2056 = vmatpush1.bf16.msra.mxu0 0
    %2057 = vmatprep.subr.bf16.mxu0 0
    %2058 = vmatpush1.bf16.msra.mxu0 0
    %2059 = vmatprep.subr.bf16.mxu0 0
    %2060 = vmatpush1.bf16.msra.mxu0 0
    %2061 = vmatprep.subr.bf16.mxu0 0
    %2062 = vmatpush1.bf16.msra.mxu0 0
    %2063 = vmatprep.mubr.bf16.mxu0 0
    %2064 = vmatmul.mubr.bf16.gmra.mrb[0].mxu0 %v2029
    %v2065 = vpop.f32.mrb[0].mxu0
    %v2066 = vadd.f32 0.0, %v2065
    %v2067 = vpop.f32.mrb[0].mxu0
    %v2068 = vpop.f32.mrb[0].mxu0
    %v2069 = vadd.f32 0.0, %v2068
    %v2070 = vpop.f32.mrb[0].mxu0
    %2071 = vdwg.mxu0
    %v2072 = vadd.f32 %v2010, %v2066
    %v2073 = vadd.f32 %v2013, %v2069
    %v2075 = vsel %vm1894, %v2072, 0
    %v2078 = vsel %vm1894, %v2073, 0
    %vm2080 = vcmask 1044480
    %v2082 = vsel %vm2080, %v1113, 0
    %2084 = vmatprep.subr.mxu0 0.0
    %2085 = vmatpush1.msra.mxu0 %v1107
    %2086 = vmatprep.subr.mxu0 0.0
    %2087 = vmatpush1.msra.mxu0 %v1108
    %2088 = vmatprep.subr.mxu0 0.0
    %2089 = vmatpush1.msra.mxu0 %v1109
    %2090 = vmatprep.subr.mxu0 0.0
    %2091 = vmatpush1.msra.mxu0 %v1110
    %2092 = vmatprep.subr.mxu0 0.0
    %2093 = vmatpush1.msra.mxu0 %v1111
    %2094 = vmatprep.subr.mxu0 0.0
    %2095 = vmatpush1.msra.mxu0 %v1112
    %2096 = vmatprep.subr.mxu0 0.0
    %2097 = vmatpush1.msra.mxu0 %v2082
    %2098 = vmatprep.subr.mxu0 0.0
    %2099 = vmatpush1.msra.mxu0 0.0
    %2100 = vmatprep.subr.mxu0 0.0
    %2101 = vmatpush1.msra.mxu0 0.0
    %2102 = vmatprep.subr.mxu0 0.0
    %2103 = vmatpush1.msra.mxu0 0.0
    %2104 = vmatprep.subr.mxu0 0.0
    %2105 = vmatpush1.msra.mxu0 0.0
    %2106 = vmatprep.subr.mxu0 0.0
    %2107 = vmatpush1.msra.mxu0 0.0
    %2108 = vmatprep.subr.mxu0 0.0
    %2109 = vmatpush1.msra.mxu0 0.0
    %2110 = vmatprep.subr.mxu0 0.0
    %2111 = vmatpush1.msra.mxu0 0.0
    %2112 = vmatprep.subr.mxu0 0.0
    %2113 = vmatpush1.msra.mxu0 0.0
    %2114 = vmatprep.subr.mxu0 0.0
    %2115 = vmatpush1.msra.mxu0 0.0
    %2116 = vmatprep.subr.mxu0 0.0
    %2117 = vmatpush1.msra.mxu0 0.0
    %2118 = vmatprep.subr.mxu0 0.0
    %2119 = vmatpush1.msra.mxu0 0.0
    %2120 = vmatprep.subr.mxu0 0.0
    %2121 = vmatpush1.msra.mxu0 0.0
    %2122 = vmatprep.subr.mxu0 0.0
    %2123 = vmatpush1.msra.mxu0 0.0
    %2124 = vmatprep.subr.mxu0 0.0
    %2125 = vmatpush1.msra.mxu0 0.0
    %2126 = vmatprep.subr.mxu0 0.0
    %2127 = vmatpush1.msra.mxu0 0.0
    %2128 = vmatprep.subr.mxu0 0.0
    %2129 = vmatpush1.msra.mxu0 0.0
    %2130 = vmatprep.subr.mxu0 0.0
    %2131 = vmatpush1.msra.mxu0 0.0
    %2132 = vmatprep.subr.mxu0 0.0
    %2133 = vmatpush1.msra.mxu0 0.0
    %2134 = vmatprep.subr.mxu0 0.0
    %2135 = vmatpush1.msra.mxu0 0.0
    %2136 = vmatprep.subr.mxu0 0.0
    %2137 = vmatpush1.msra.mxu0 0.0
    %2138 = vmatprep.subr.mxu0 0.0
    %2139 = vmatpush1.msra.mxu0 0.0
    %2140 = vmatprep.subr.mxu0 0.0
    %2141 = vmatpush1.msra.mxu0 0.0
    %2142 = vmatprep.subr.mxu0 0.0
    %2143 = vmatpush1.msra.mxu0 0.0
    %2144 = vmatprep.subr.mxu0 0.0
    %2145 = vmatpush1.msra.mxu0 0.0
    %2146 = vmatprep.subr.mxu0 0.0
    %2147 = vmatpush1.msra.mxu0 0.0
    %2148 = vmatprep.mubr.f32.mxu0 0.0
    %2149 = vmatmul.mubr.f32.gmra.mrb[0].mxu0 %v2075
    %v2150 = vpop.f32.mrb[0].mxu0
    %v2151 = vadd.f32 0.0, %v2150
    %v2152 = vpop.f32.mrb[0].mxu0
    %2153 = vmatprep.mubr.f32.mxu0 0.0
    %2154 = vmatmul.mubr.f32.gmra.mrb[0].mxu0 %v2078
    %v2155 = vpop.f32.mrb[0].mxu0
    %v2156 = vadd.f32 0.0, %v2155
    %v2157 = vpop.f32.mrb[0].mxu0
    %2158 = vdwg.mxu0
    %2159 = vrot.lane.b32.xlu0 %v2072, 75
    %v2160 = vpop.permute.xlu0 %2159
    %2161 = vrot.lane.b32.xlu0 %v2073, 75
    %v2162 = vpop.permute.xlu0 %2161
    %v2163 = vsel %vm1894, %v2160, 0
    %v2165 = vsel %vm1894, %v2162, 0
    %2167 = vmatprep.subr.mxu0 0.0
    %2168 = vmatpush1.msra.mxu0 %v1107
    %2169 = vmatprep.subr.mxu0 0.0
    %2170 = vmatpush1.msra.mxu0 %v1108
    %2171 = vmatprep.subr.mxu0 0.0
    %2172 = vmatpush1.msra.mxu0 %v1109
    %2173 = vmatprep.subr.mxu0 0.0
    %2174 = vmatpush1.msra.mxu0 %v1110
    %2175 = vmatprep.subr.mxu0 0.0
    %2176 = vmatpush1.msra.mxu0 %v1111
    %2177 = vmatprep.subr.mxu0 0.0
    %2178 = vmatpush1.msra.mxu0 %v1112
    %2179 = vmatprep.subr.mxu0 0.0
    %2180 = vmatpush1.msra.mxu0 %v2082
    %2181 = vmatprep.subr.mxu0 0.0
    %2182 = vmatpush1.msra.mxu0 0.0
    %2183 = vmatprep.subr.mxu0 0.0
    %2184 = vmatpush1.msra.mxu0 0.0
    %2185 = vmatprep.subr.mxu0 0.0
    %2186 = vmatpush1.msra.mxu0 0.0
    %2187 = vmatprep.subr.mxu0 0.0
    %2188 = vmatpush1.msra.mxu0 0.0
    %2189 = vmatprep.subr.mxu0 0.0
    %2190 = vmatpush1.msra.mxu0 0.0
    %2191 = vmatprep.subr.mxu0 0.0
    %2192 = vmatpush1.msra.mxu0 0.0
    %2193 = vmatprep.subr.mxu0 0.0
    %2194 = vmatpush1.msra.mxu0 0.0
    %2195 = vmatprep.subr.mxu0 0.0
    %2196 = vmatpush1.msra.mxu0 0.0
    %2197 = vmatprep.subr.mxu0 0.0
    %2198 = vmatpush1.msra.mxu0 0.0
    %2199 = vmatprep.subr.mxu0 0.0
    %2200 = vmatpush1.msra.mxu0 0.0
    %2201 = vmatprep.subr.mxu0 0.0
    %2202 = vmatpush1.msra.mxu0 0.0
    %2203 = vmatprep.subr.mxu0 0.0
    %2204 = vmatpush1.msra.mxu0 0.0
    %2205 = vmatprep.subr.mxu0 0.0
    %2206 = vmatpush1.msra.mxu0 0.0
    %2207 = vmatprep.subr.mxu0 0.0
    %2208 = vmatpush1.msra.mxu0 0.0
    %2209 = vmatprep.subr.mxu0 0.0
    %2210 = vmatpush1.msra.mxu0 0.0
    %2211 = vmatprep.subr.mxu0 0.0
    %2212 = vmatpush1.msra.mxu0 0.0
    %2213 = vmatprep.subr.mxu0 0.0
    %2214 = vmatpush1.msra.mxu0 0.0
    %2215 = vmatprep.subr.mxu0 0.0
    %2216 = vmatpush1.msra.mxu0 0.0
    %2217 = vmatprep.subr.mxu0 0.0
    %2218 = vmatpush1.msra.mxu0 0.0
    %2219 = vmatprep.subr.mxu0 0.0
    %2220 = vmatpush1.msra.mxu0 0.0
    %2221 = vmatprep.subr.mxu0 0.0
    %2222 = vmatpush1.msra.mxu0 0.0
    %2223 = vmatprep.subr.mxu0 0.0
    %2224 = vmatpush1.msra.mxu0 0.0
    %2225 = vmatprep.subr.mxu0 0.0
    %2226 = vmatpush1.msra.mxu0 0.0
    %2227 = vmatprep.subr.mxu0 0.0
    %2228 = vmatpush1.msra.mxu0 0.0
    %2229 = vmatprep.subr.mxu0 0.0
    %2230 = vmatpush1.msra.mxu0 0.0
    %2231 = vmatprep.mubr.f32.mxu0 0.0
    %2232 = vmatmul.mubr.f32.gmra.mrb[0].mxu0 %v2163
    %v2233 = vpop.f32.mrb[0].mxu0
    %v2234 = vadd.f32 0.0, %v2233
    %v2235 = vpop.f32.mrb[0].mxu0
    %2236 = vmatprep.mubr.f32.mxu0 0.0
    %2237 = vmatmul.mubr.f32.gmra.mrb[0].mxu0 %v2165
    %v2238 = vpop.f32.mrb[0].mxu0
    %v2239 = vadd.f32 0.0, %v2238
    %v2240 = vpop.f32.mrb[0].mxu0
    %2241 = vdwg.mxu0
    %2244 = vrot.lane.b32.xlu0 %v2234, 27
    %v2245 = vpop.permute.xlu0 %2244
    %2246 = vrot.lane.b32.xlu0 %v2239, 27
    %v2247 = vpop.permute.xlu0 %2246
    %vm2250 = vcmask 220160
    %v2251 = vsel %vm2250, %v2151, %v2245
    %v2252 = vsel %vm2250, %v2156, %v2247
    %2253 = vset.pattern.permute.xlu0 7
    %2254 = vperm.xlu0 %2253, %v133
    %v2255 = vpop.permute.xlu0 %2254
    %2257 = vset.pattern.permute.xlu0 7
    %2258 = vperm.xlu0 %2257, %v134
    %v2259 = vpop.permute.xlu0 %2258
    %v2261 = vadd.f32 %v2251, %v2255
    %v2262 = vadd.f32 %v2252, %v2259
    %v2263 = vxor.u32 %v2261, 2147483648
    %v2264 = vxor.u32 %v2262, 2147483648
    %v2265 = vmul.f32 %v2263, 1.442695
    %v2266 = vpow.pop %v2265
    %v2267 = vmul.f32 %v2264, 1.442695
    %v2268 = vpow.pop %v2267
    %v2269 = vadd.f32 %v2266, 1.0
    %v2270 = vadd.f32 %v2268, 1.0
    %v2271 = vrcp.pop %v2269
    %v2272 = vmul.f32 1.0, %v2271
    %v2273 = vrcp.pop %v2270
    %v2274 = vmul.f32 1.0, %v2273
    %v2275 = vmul.f32 %v2261, %v2272
    %v2276 = vmul.f32 %v2262, %v2274
    %v2277 = vpack.c.bf16 %v2276, %v2275
    %2279 = vrot.lane.b32.xlu0 %v2277, 126
    %v2280 = vpop.permute.xlu0 %2279
    %vm2281 = vcmask 203776
    %v2284 = vsel %vm2281, %v2277, %v2280
    %v2286 = vld [vmem:[#allocation2 + $0x50] sm:$0xf]
    %2287 = vrot.lane.b32.xlu0 %v2277, 127
    %v2288 = vpop.permute.xlu0 %2287
    %2289 = vrot.lane.b32.xlu0 %v2277, 125
    %v2290 = vpop.permute.xlu0 %2289
    %v2293 = vsel %vm2281, %v2288, %v2290
    %v2296 = vunpack.c.l.b16 %v2286
    %v2297 = vpack.c.b16 %v2296, %v2296
    %2298 = vrot.lane.b32.xlu0 %v2297, 112
    %v2299 = vpop.permute.xlu0 %2298
    %v2301 = vsel %vm215, %v2299, 0
    %2303 = vmatprep.subr.bf16.mxu0 0
    %2304 = vmatpush1.bf16.msra.mxu0 %v2293
    %2305 = vmatprep.subr.bf16.mxu0 0
    %2306 = vmatpush1.bf16.msra.mxu0 0
    %2307 = vmatprep.subr.bf16.mxu0 0
    %2308 = vmatpush1.bf16.msra.mxu0 0
    %2309 = vmatprep.subr.bf16.mxu0 0
    %2310 = vmatpush1.bf16.msra.mxu0 0
    %2311 = vmatprep.subr.bf16.mxu0 0
    %2312 = vmatpush1.bf16.msra.mxu0 0
    %2313 = vmatprep.subr.bf16.mxu0 0
    %2314 = vmatpush1.bf16.msra.mxu0 0
    %2315 = vmatprep.subr.bf16.mxu0 0
    %2316 = vmatpush1.bf16.msra.mxu0 0
    %2317 = vmatprep.subr.bf16.mxu0 0
    %2318 = vmatpush1.bf16.msra.mxu0 0
    %2319 = vmatprep.subr.bf16.mxu0 0
    %2320 = vmatpush1.bf16.msra.mxu0 0
    %2321 = vmatprep.subr.bf16.mxu0 0
    %2322 = vmatpush1.bf16.msra.mxu0 0
    %2323 = vmatprep.subr.bf16.mxu0 0
    %2324 = vmatpush1.bf16.msra.mxu0 0
    %2325 = vmatprep.subr.bf16.mxu0 0
    %2326 = vmatpush1.bf16.msra.mxu0 0
    %2327 = vmatprep.subr.bf16.mxu0 0
    %2328 = vmatpush1.bf16.msra.mxu0 0
    %2329 = vmatprep.subr.bf16.mxu0 0
    %2330 = vmatpush1.bf16.msra.mxu0 0
    %2331 = vmatprep.subr.bf16.mxu0 0
    %2332 = vmatpush1.bf16.msra.mxu0 0
    %2333 = vmatprep.subr.bf16.mxu0 0
    %2334 = vmatpush1.bf16.msra.mxu0 0
    %2335 = vmatprep.mubr.bf16.mxu0 0
    %2336 = vmatmul.mubr.bf16.gmra.mrb[0].mxu0 %v2301
    %v2337 = vpop.f32.mrb[0].mxu0
    %v2338 = vadd.f32 0.0, %v2337
    %v2339 = vpop.f32.mrb[0].mxu0
    %v2340 = vpop.f32.mrb[0].mxu0
    %v2341 = vpop.f32.mrb[0].mxu0
    %2342 = vdwg.mxu0
    %v2344 = vsel %vm215, %v2286, 0
    %2346 = vmatprep.subr.bf16.mxu0 0
    %2347 = vmatpush1.bf16.msra.mxu0 %v2284
    %2348 = vmatprep.subr.bf16.mxu0 0
    %2349 = vmatpush1.bf16.msra.mxu0 0
    %2350 = vmatprep.subr.bf16.mxu0 0
    %2351 = vmatpush1.bf16.msra.mxu0 0
    %2352 = vmatprep.subr.bf16.mxu0 0
    %2353 = vmatpush1.bf16.msra.mxu0 0
    %2354 = vmatprep.subr.bf16.mxu0 0
    %2355 = vmatpush1.bf16.msra.mxu0 0
    %2356 = vmatprep.subr.bf16.mxu0 0
    %2357 = vmatpush1.bf16.msra.mxu0 0
    %2358 = vmatprep.subr.bf16.mxu0 0
    %2359 = vmatpush1.bf16.msra.mxu0 0
    %2360 = vmatprep.subr.bf16.mxu0 0
    %2361 = vmatpush1.bf16.msra.mxu0 0
    %2362 = vmatprep.subr.bf16.mxu0 0
    %2363 = vmatpush1.bf16.msra.mxu0 0
    %2364 = vmatprep.subr.bf16.mxu0 0
    %2365 = vmatpush1.bf16.msra.mxu0 0
    %2366 = vmatprep.subr.bf16.mxu0 0
    %2367 = vmatpush1.bf16.msra.mxu0 0
    %2368 = vmatprep.subr.bf16.mxu0 0
    %2369 = vmatpush1.bf16.msra.mxu0 0
    %2370 = vmatprep.subr.bf16.mxu0 0
    %2371 = vmatpush1.bf16.msra.mxu0 0
    %2372 = vmatprep.subr.bf16.mxu0 0
    %2373 = vmatpush1.bf16.msra.mxu0 0
    %2374 = vmatprep.subr.bf16.mxu0 0
    %2375 = vmatpush1.bf16.msra.mxu0 0
    %2376 = vmatprep.subr.bf16.mxu0 0
    %2377 = vmatpush1.bf16.msra.mxu0 0
    %2378 = vmatprep.mubr.bf16.mxu0 0
    %2379 = vmatmul.mubr.bf16.gmra.mrb[0].mxu0 %v2344
    %v2380 = vpop.f32.mrb[0].mxu0
    %v2381 = vadd.f32 %v2338, %v2380
    %v2382 = vpop.f32.mrb[0].mxu0
    %v2383 = vpop.f32.mrb[0].mxu0
    %v2384 = vpop.f32.mrb[0].mxu0
    %2385 = vdwg.mxu0
    %2386 = vrot.lane.b32.xlu0 %v2277, 124
    %v2387 = vpop.permute.xlu0 %2386
    %v2389 = vsel %vm2281, %v2280, %v2387
    %2391 = vrot.lane.b32.xlu0 %v2297, 96
    %v2392 = vpop.permute.xlu0 %2391
    %v2394 = vsel %vm215, %v2392, 0
    %2396 = vmatprep.subr.bf16.mxu0 0
    %2397 = vmatpush1.bf16.msra.mxu0 %v2389
    %2398 = vmatprep.subr.bf16.mxu0 0
    %2399 = vmatpush1.bf16.msra.mxu0 0
    %2400 = vmatprep.subr.bf16.mxu0 0
    %2401 = vmatpush1.bf16.msra.mxu0 0
    %2402 = vmatprep.subr.bf16.mxu0 0
    %2403 = vmatpush1.bf16.msra.mxu0 0
    %2404 = vmatprep.subr.bf16.mxu0 0
    %2405 = vmatpush1.bf16.msra.mxu0 0
    %2406 = vmatprep.subr.bf16.mxu0 0
    %2407 = vmatpush1.bf16.msra.mxu0 0
    %2408 = vmatprep.subr.bf16.mxu0 0
    %2409 = vmatpush1.bf16.msra.mxu0 0
    %2410 = vmatprep.subr.bf16.mxu0 0
    %2411 = vmatpush1.bf16.msra.mxu0 0
    %2412 = vmatprep.subr.bf16.mxu0 0
    %2413 = vmatpush1.bf16.msra.mxu0 0
    %2414 = vmatprep.subr.bf16.mxu0 0
    %2415 = vmatpush1.bf16.msra.mxu0 0
    %2416 = vmatprep.subr.bf16.mxu0 0
    %2417 = vmatpush1.bf16.msra.mxu0 0
    %2418 = vmatprep.subr.bf16.mxu0 0
    %2419 = vmatpush1.bf16.msra.mxu0 0
    %2420 = vmatprep.subr.bf16.mxu0 0
    %2421 = vmatpush1.bf16.msra.mxu0 0
    %2422 = vmatprep.subr.bf16.mxu0 0
    %2423 = vmatpush1.bf16.msra.mxu0 0
    %2424 = vmatprep.subr.bf16.mxu0 0
    %2425 = vmatpush1.bf16.msra.mxu0 0
    %2426 = vmatprep.subr.bf16.mxu0 0
    %2427 = vmatpush1.bf16.msra.mxu0 0
    %2428 = vmatprep.mubr.bf16.mxu0 0
    %2429 = vmatmul.mubr.bf16.gmra.mrb[0].mxu0 %v2394
    %v2430 = vpop.f32.mrb[0].mxu0
    %v2431 = vadd.f32 0.0, %v2430
    %v2432 = vpop.f32.mrb[0].mxu0
    %v2433 = vpop.f32.mrb[0].mxu0
    %v2434 = vpop.f32.mrb[0].mxu0
    %2435 = vdwg.mxu0
    %v2436 = vadd.f32 %v2381, %v2431
    %v2437 = vld [vmem:[%s2] sm:$0xff]
    %2439 = vset.pattern.permute.xlu0 8
    %2440 = vperm.xlu0 %2439, %v2437
    %v2441 = vpop.permute.xlu0 %2440
    %v2443 = vadd.f32 %v2436, %v2441
    %v2444 = vxor.u32 %v2443, 2147483648
    %v2445 = vmul.f32 %v2444, 1.442695
    %v2446 = vpow.pop %v2445
    %v2447 = vadd.f32 %v2446, 1.0
    %v2448 = vrcp.pop %v2447
    %v2449 = vmul.f32 1.0, %v2448
    %v2450 = vmul.f32 %v2443, %v2449
    %v2451 = vpack.c.bf16 %v2450, %v2450
    %2453 = vrot.lane.b32.xlu0 %v2451, 126
    %v2454 = vpop.permute.xlu0 %2453
    %vm2455 = vcmask 187392
    %v2458 = vsel %vm2455, %v2451, %v2454
    %v2459 = vld [vmem:[#allocation2 + $0x58] sm:$0x3]
    %2460 = vrot.lane.b32.xlu0 %v2451, 127
    %v2461 = vpop.permute.xlu0 %2460
    %2462 = vrot.lane.b32.xlu0 %v2451, 125
    %v2463 = vpop.permute.xlu0 %2462
    %v2466 = vsel %vm2455, %v2461, %v2463
    %v2468 = vunpack.c.l.b16 %v2459
    %v2469 = vpack.c.b16 %v2468, %v2468
    %2470 = vrot.lane.b32.xlu0 %v2469, 120
    %v2471 = vpop.permute.xlu0 %2470
    %vm2472 = vcmask 64512
    %v2474 = vsel %vm2472, %v2471, 0
    %vm2476 = vcmask 1043456
    %v2477 = vsel %vm2476, %v2466, 0
    %2479 = vmatprep.subr.bf16.mxu0 0
    %2480 = vmatpush1.bf16.msra.mxu0 %v2477
    %2481 = vmatprep.subr.bf16.mxu0 0
    %2482 = vmatpush1.bf16.msra.mxu0 0
    %2483 = vmatprep.subr.bf16.mxu0 0
    %2484 = vmatpush1.bf16.msra.mxu0 0
    %2485 = vmatprep.subr.bf16.mxu0 0
    %2486 = vmatpush1.bf16.msra.mxu0 0
    %2487 = vmatprep.subr.bf16.mxu0 0
    %2488 = vmatpush1.bf16.msra.mxu0 0
    %2489 = vmatprep.subr.bf16.mxu0 0
    %2490 = vmatpush1.bf16.msra.mxu0 0
    %2491 = vmatprep.subr.bf16.mxu0 0
    %2492 = vmatpush1.bf16.msra.mxu0 0
    %2493 = vmatprep.subr.bf16.mxu0 0
    %2494 = vmatpush1.bf16.msra.mxu0 0
    %2495 = vmatprep.subr.bf16.mxu0 0
    %2496 = vmatpush1.bf16.msra.mxu0 0
    %2497 = vmatprep.subr.bf16.mxu0 0
    %2498 = vmatpush1.bf16.msra.mxu0 0
    %2499 = vmatprep.subr.bf16.mxu0 0
    %2500 = vmatpush1.bf16.msra.mxu0 0
    %2501 = vmatprep.subr.bf16.mxu0 0
    %2502 = vmatpush1.bf16.msra.mxu0 0
    %2503 = vmatprep.subr.bf16.mxu0 0
    %2504 = vmatpush1.bf16.msra.mxu0 0
    %2505 = vmatprep.subr.bf16.mxu0 0
    %2506 = vmatpush1.bf16.msra.mxu0 0
    %2507 = vmatprep.subr.bf16.mxu0 0
    %2508 = vmatpush1.bf16.msra.mxu0 0
    %2509 = vmatprep.subr.bf16.mxu0 0
    %2510 = vmatpush1.bf16.msra.mxu0 0
    %2511 = vmatprep.mubr.bf16.mxu0 0
    %2512 = vmatmul.mubr.bf16.gmra.mrb[0].mxu0 %v2474
    %v2513 = vpop.f32.mrb[0].mxu0
    %v2514 = vadd.f32 0.0, %v2513
    %v2515 = vpop.f32.mrb[0].mxu0
    %v2516 = vpop.f32.mrb[0].mxu0
    %v2517 = vpop.f32.mrb[0].mxu0
    %2518 = vdwg.mxu0
    %v2520 = vsel %vm2472, %v2459, 0
    %v2522 = vsel %vm2476, %v2458, 0
    %2524 = vmatprep.subr.bf16.mxu0 0
    %2525 = vmatpush1.bf16.msra.mxu0 %v2522
    %2526 = vmatprep.subr.bf16.mxu0 0
    %2527 = vmatpush1.bf16.msra.mxu0 0
    %2528 = vmatprep.subr.bf16.mxu0 0
    %2529 = vmatpush1.bf16.msra.mxu0 0
    %2530 = vmatprep.subr.bf16.mxu0 0
    %2531 = vmatpush1.bf16.msra.mxu0 0
    %2532 = vmatprep.subr.bf16.mxu0 0
    %2533 = vmatpush1.bf16.msra.mxu0 0
    %2534 = vmatprep.subr.bf16.mxu0 0
    %2535 = vmatpush1.bf16.msra.mxu0 0
    %2536 = vmatprep.subr.bf16.mxu0 0
    %2537 = vmatpush1.bf16.msra.mxu0 0
    %2538 = vmatprep.subr.bf16.mxu0 0
    %2539 = vmatpush1.bf16.msra.mxu0 0
    %2540 = vmatprep.subr.bf16.mxu0 0
    %2541 = vmatpush1.bf16.msra.mxu0 0
    %2542 = vmatprep.subr.bf16.mxu0 0
    %2543 = vmatpush1.bf16.msra.mxu0 0
    %2544 = vmatprep.subr.bf16.mxu0 0
    %2545 = vmatpush1.bf16.msra.mxu0 0
    %2546 = vmatprep.subr.bf16.mxu0 0
    %2547 = vmatpush1.bf16.msra.mxu0 0
    %2548 = vmatprep.subr.bf16.mxu0 0
    %2549 = vmatpush1.bf16.msra.mxu0 0
    %2550 = vmatprep.subr.bf16.mxu0 0
    %2551 = vmatpush1.bf16.msra.mxu0 0
    %2552 = vmatprep.subr.bf16.mxu0 0
    %2553 = vmatpush1.bf16.msra.mxu0 0
    %2554 = vmatprep.subr.bf16.mxu0 0
    %2555 = vmatpush1.bf16.msra.mxu0 0
    %2556 = vmatprep.mubr.bf16.mxu0 0
    %2557 = vmatmul.mubr.bf16.gmra.mrb[0].mxu0 %v2520
    %v2558 = vpop.f32.mrb[0].mxu0
    %v2559 = vadd.f32 %v2514, %v2558
    %v2560 = vpop.f32.mrb[0].mxu0
    %v2561 = vpop.f32.mrb[0].mxu0
    %v2562 = vpop.f32.mrb[0].mxu0
    %2563 = vdwg.mxu0
    %2564 = vrot.lane.b32.xlu0 %v2451, 124
    %v2565 = vpop.permute.xlu0 %2564
    %v2567 = vsel %vm2455, %v2454, %v2565
    %2568 = vrot.lane.b32.xlu0 %v2469, 112
    %v2569 = vpop.permute.xlu0 %2568
    %v2571 = vsel %vm2472, %v2569, 0
    %v2573 = vsel %vm2476, %v2567, 0
    %2575 = vmatprep.subr.bf16.mxu0 0
    %2576 = vmatpush1.bf16.msra.mxu0 %v2573
    %2577 = vmatprep.subr.bf16.mxu0 0
    %2578 = vmatpush1.bf16.msra.mxu0 0
    %2579 = vmatprep.subr.bf16.mxu0 0
    %2580 = vmatpush1.bf16.msra.mxu0 0
    %2581 = vmatprep.subr.bf16.mxu0 0
    %2582 = vmatpush1.bf16.msra.mxu0 0
    %2583 = vmatprep.subr.bf16.mxu0 0
    %2584 = vmatpush1.bf16.msra.mxu0 0
    %2585 = vmatprep.subr.bf16.mxu0 0
    %2586 = vmatpush1.bf16.msra.mxu0 0
    %2587 = vmatprep.subr.bf16.mxu0 0
    %2588 = vmatpush1.bf16.msra.mxu0 0
    %2589 = vmatprep.subr.bf16.mxu0 0
    %2590 = vmatpush1.bf16.msra.mxu0 0
    %2591 = vmatprep.subr.bf16.mxu0 0
    %2592 = vmatpush1.bf16.msra.mxu0 0
    %2593 = vmatprep.subr.bf16.mxu0 0
    %2594 = vmatpush1.bf16.msra.mxu0 0
    %2595 = vmatprep.subr.bf16.mxu0 0
    %2596 = vmatpush1.bf16.msra.mxu0 0
    %2597 = vmatprep.subr.bf16.mxu0 0
    %2598 = vmatpush1.bf16.msra.mxu0 0
    %2599 = vmatprep.subr.bf16.mxu0 0
    %2600 = vmatpush1.bf16.msra.mxu0 0
    %2601 = vmatprep.subr.bf16.mxu0 0
    %2602 = vmatpush1.bf16.msra.mxu0 0
    %2603 = vmatprep.subr.bf16.mxu0 0
    %2604 = vmatpush1.bf16.msra.mxu0 0
    %2605 = vmatprep.subr.bf16.mxu0 0
    %2606 = vmatpush1.bf16.msra.mxu0 0
    %2607 = vmatprep.mubr.bf16.mxu0 0
    %2608 = vmatmul.mubr.bf16.gmra.mrb[0].mxu0 %v2571
    %v2609 = vpop.f32.mrb[0].mxu0
    %v2610 = vadd.f32 0.0, %v2609
    %v2611 = vpop.f32.mrb[0].mxu0
    %v2612 = vpop.f32.mrb[0].mxu0
    %v2613 = vpop.f32.mrb[0].mxu0
    %2614 = vdwg.mxu0
    %v2615 = vadd.f32 %v2559, %v2610
    %v2616 = vld [vmem:[%s2] sm:$0xf]
    %2618 = vset.pattern.permute.xlu0 9
    %2619 = vperm.xlu0 %2618, %v2616
    %v2620 = vpop.permute.xlu0 %2619
    %v2622 = vadd.f32 %v2615, %v2620
    %v2623 = vxor.u32 %v2622, 2147483648
    %v2624 = vmul.f32 %v2623, 1.442695
    %v2625 = vpow.pop %v2624
    %v2626 = vadd.f32 %v2625, 1.0
    %v2627 = vrcp.pop %v2626
    %v2628 = vmul.f32 1.0, %v2627
    %v2629 = vmul.f32 %v2622, %v2628
    %v2630 = vpack.c.bf16 %v2629, %v2629
    %2632 = vrot.lane.b32.xlu0 %v2630, 126
    %v2633 = vpop.permute.xlu0 %2632
    %vm2634 = vcmask 171008
    %v2637 = vsel %vm2634, %v2630, %v2633
    %v2638 = vld [vmem:[#allocation2 + $0x60] sm:$0x1]
    %2639 = vrot.lane.b32.xlu0 %v2630, 127
    %v2640 = vpop.permute.xlu0 %2639
    %2641 = vrot.lane.b32.xlu0 %v2630, 125
    %v2642 = vpop.permute.xlu0 %2641
    %v2645 = vsel %vm2634, %v2640, %v2642
    %v2647 = vunpack.c.l.b16 %v2638
    %v2648 = vpack.c.b16 %v2647, %v2647
    %2649 = vrot.lane.b32.xlu0 %v2648, 124
    %v2650 = vpop.permute.xlu0 %2649
    %vm2651 = vcmask 31744
    %v2653 = vsel %vm2651, %v2650, 0
    %vm2655 = vcmask 1041408
    %v2656 = vsel %vm2655, %v2645, 0
    %2658 = vmatprep.subr.bf16.mxu0 0
    %2659 = vmatpush1.bf16.msra.mxu0 %v2656
    %2660 = vmatprep.subr.bf16.mxu0 0
    %2661 = vmatpush1.bf16.msra.mxu0 0
    %2662 = vmatprep.subr.bf16.mxu0 0
    %2663 = vmatpush1.bf16.msra.mxu0 0
    %2664 = vmatprep.subr.bf16.mxu0 0
    %2665 = vmatpush1.bf16.msra.mxu0 0
    %2666 = vmatprep.subr.bf16.mxu0 0
    %2667 = vmatpush1.bf16.msra.mxu0 0
    %2668 = vmatprep.subr.bf16.mxu0 0
    %2669 = vmatpush1.bf16.msra.mxu0 0
    %2670 = vmatprep.subr.bf16.mxu0 0
    %2671 = vmatpush1.bf16.msra.mxu0 0
    %2672 = vmatprep.subr.bf16.mxu0 0
    %2673 = vmatpush1.bf16.msra.mxu0 0
    %2674 = vmatprep.subr.bf16.mxu0 0
    %2675 = vmatpush1.bf16.msra.mxu0 0
    %2676 = vmatprep.subr.bf16.mxu0 0
    %2677 = vmatpush1.bf16.msra.mxu0 0
    %2678 = vmatprep.subr.bf16.mxu0 0
    %2679 = vmatpush1.bf16.msra.mxu0 0
    %2680 = vmatprep.subr.bf16.mxu0 0
    %2681 = vmatpush1.bf16.msra.mxu0 0
    %2682 = vmatprep.subr.bf16.mxu0 0
    %2683 = vmatpush1.bf16.msra.mxu0 0
    %2684 = vmatprep.subr.bf16.mxu0 0
    %2685 = vmatpush1.bf16.msra.mxu0 0
    %2686 = vmatprep.subr.bf16.mxu0 0
    %2687 = vmatpush1.bf16.msra.mxu0 0
    %2688 = vmatprep.subr.bf16.mxu0 0
    %2689 = vmatpush1.bf16.msra.mxu0 0
    %2690 = vmatprep.mubr.bf16.mxu0 0
    %2691 = vmatmul.mubr.bf16.gmra.mrb[0].mxu0 %v2653
    %v2692 = vpop.f32.mrb[0].mxu0
    %v2693 = vadd.f32 0.0, %v2692
    %v2694 = vpop.f32.mrb[0].mxu0
    %v2695 = vpop.f32.mrb[0].mxu0
    %v2696 = vpop.f32.mrb[0].mxu0
    %2697 = vdwg.mxu0
    %v2699 = vsel %vm2651, %v2638, 0
    %v2701 = vsel %vm2655, %v2637, 0
    %2703 = vmatprep.subr.bf16.mxu0 0
    %2704 = vmatpush1.bf16.msra.mxu0 %v2701
    %2705 = vmatprep.subr.bf16.mxu0 0
    %2706 = vmatpush1.bf16.msra.mxu0 0
    %2707 = vmatprep.subr.bf16.mxu0 0
    %2708 = vmatpush1.bf16.msra.mxu0 0
    %2709 = vmatprep.subr.bf16.mxu0 0
    %2710 = vmatpush1.bf16.msra.mxu0 0
    %2711 = vmatprep.subr.bf16.mxu0 0
    %2712 = vmatpush1.bf16.msra.mxu0 0
    %2713 = vmatprep.subr.bf16.mxu0 0
    %2714 = vmatpush1.bf16.msra.mxu0 0
    %2715 = vmatprep.subr.bf16.mxu0 0
    %2716 = vmatpush1.bf16.msra.mxu0 0
    %2717 = vmatprep.subr.bf16.mxu0 0
    %2718 = vmatpush1.bf16.msra.mxu0 0
    %2719 = vmatprep.subr.bf16.mxu0 0
    %2720 = vmatpush1.bf16.msra.mxu0 0
    %2721 = vmatprep.subr.bf16.mxu0 0
    %2722 = vmatpush1.bf16.msra.mxu0 0
    %2723 = vmatprep.subr.bf16.mxu0 0
    %2724 = vmatpush1.bf16.msra.mxu0 0
    %2725 = vmatprep.subr.bf16.mxu0 0
    %2726 = vmatpush1.bf16.msra.mxu0 0
    %2727 = vmatprep.subr.bf16.mxu0 0
    %2728 = vmatpush1.bf16.msra.mxu0 0
    %2729 = vmatprep.subr.bf16.mxu0 0
    %2730 = vmatpush1.bf16.msra.mxu0 0
    %2731 = vmatprep.subr.bf16.mxu0 0
    %2732 = vmatpush1.bf16.msra.mxu0 0
    %2733 = vmatprep.subr.bf16.mxu0 0
    %2734 = vmatpush1.bf16.msra.mxu0 0
    %2735 = vmatprep.mubr.bf16.mxu0 0
    %2736 = vmatmul.mubr.bf16.gmra.mrb[0].mxu0 %v2699
    %v2737 = vpop.f32.mrb[0].mxu0
    %v2738 = vadd.f32 %v2693, %v2737
    %v2739 = vpop.f32.mrb[0].mxu0
    %v2740 = vpop.f32.mrb[0].mxu0
    %v2741 = vpop.f32.mrb[0].mxu0
    %2742 = vdwg.mxu0
    %2743 = vrot.lane.b32.xlu0 %v2630, 124
    %v2744 = vpop.permute.xlu0 %2743
    %v2746 = vsel %vm2634, %v2633, %v2744
    %2747 = vrot.lane.b32.xlu0 %v2648, 120
    %v2748 = vpop.permute.xlu0 %2747
    %v2750 = vsel %vm2651, %v2748, 0
    %v2752 = vsel %vm2655, %v2746, 0
    %2754 = vmatprep.subr.bf16.mxu0 0
    %2755 = vmatpush1.bf16.msra.mxu0 %v2752
    %2756 = vmatprep.subr.bf16.mxu0 0
    %2757 = vmatpush1.bf16.msra.mxu0 0
    %2758 = vmatprep.subr.bf16.mxu0 0
    %2759 = vmatpush1.bf16.msra.mxu0 0
    %2760 = vmatprep.subr.bf16.mxu0 0
    %2761 = vmatpush1.bf16.msra.mxu0 0
    %2762 = vmatprep.subr.bf16.mxu0 0
    %2763 = vmatpush1.bf16.msra.mxu0 0
    %2764 = vmatprep.subr.bf16.mxu0 0
    %2765 = vmatpush1.bf16.msra.mxu0 0
    %2766 = vmatprep.subr.bf16.mxu0 0
    %2767 = vmatpush1.bf16.msra.mxu0 0
    %2768 = vmatprep.subr.bf16.mxu0 0
    %2769 = vmatpush1.bf16.msra.mxu0 0
    %2770 = vmatprep.subr.bf16.mxu0 0
    %2771 = vmatpush1.bf16.msra.mxu0 0
    %2772 = vmatprep.subr.bf16.mxu0 0
    %2773 = vmatpush1.bf16.msra.mxu0 0
    %2774 = vmatprep.subr.bf16.mxu0 0
    %2775 = vmatpush1.bf16.msra.mxu0 0
    %2776 = vmatprep.subr.bf16.mxu0 0
    %2777 = vmatpush1.bf16.msra.mxu0 0
    %2778 = vmatprep.subr.bf16.mxu0 0
    %2779 = vmatpush1.bf16.msra.mxu0 0
    %2780 = vmatprep.subr.bf16.mxu0 0
    %2781 = vmatpush1.bf16.msra.mxu0 0
    %2782 = vmatprep.subr.bf16.mxu0 0
    %2783 = vmatpush1.bf16.msra.mxu0 0
    %2784 = vmatprep.subr.bf16.mxu0 0
    %2785 = vmatpush1.bf16.msra.mxu0 0
    %2786 = vmatprep.mubr.bf16.mxu0 0
    %2787 = vmatmul.mubr.bf16.gmra.mrb[0].mxu0 %v2750
    %v2788 = vpop.f32.mrb[0].mxu0
    %v2789 = vadd.f32 0.0, %v2788
    %v2790 = vpop.f32.mrb[0].mxu0
    %v2791 = vpop.f32.mrb[0].mxu0
    %v2792 = vpop.f32.mrb[0].mxu0
    %2793 = vdwg.mxu0
    %v2794 = vadd.f32 %v2738, %v2789
    %v2795 = vld [vmem:[%s2] sm:$0x3]
    %2797 = vset.pattern.permute.xlu0 10
    %2798 = vperm.xlu0 %2797, %v2795
    %v2799 = vpop.permute.xlu0 %2798
    %v2801 = vadd.f32 %v2794, %v2799
    %v2802 = vxor.u32 %v2801, 2147483648
    %v2803 = vmul.f32 %v2802, 1.442695
    %v2804 = vpow.pop %v2803
    %v2805 = vadd.f32 %v2804, 1.0
    %v2806 = vrcp.pop %v2805
    %v2807 = vmul.f32 1.0, %v2806
    %v2808 = vmul.f32 %v2801, %v2807
    %v2809 = vpack.c.bf16 %v2808, %v2808
    %2811 = vrot.lane.b32.xlu0 %v2809, 126
    %v2812 = vpop.permute.xlu0 %2811
    %vm2813 = vcmask 154624
    %v2816 = vsel %vm2813, %v2809, %v2812
    %v2817 = vld [vmem:[#allocation2 + $0x68] sm:$0x1]
    %2818 = vrot.lane.b32.xlu0 %v2809, 127
    %v2819 = vpop.permute.xlu0 %2818
    %2820 = vrot.lane.b32.xlu0 %v2809, 125
    %v2821 = vpop.permute.xlu0 %2820
    %v2824 = vsel %vm2813, %v2819, %v2821
    %v2826 = vunpack.c.l.b16 %v2817
    %v2827 = vpack.c.b16 %v2826, %v2826
    %2828 = vrot.lane.b32.xlu0 %v2827, 126
    %v2829 = vpop.permute.xlu0 %2828
    %vm2830 = vcmask 15360
    %v2832 = vsel %vm2830, %v2829, 0
    %vm2834 = vcmask 1040384
    %v2835 = vsel %vm2834, %v2824, 0
    %2837 = vmatprep.subr.bf16.mxu0 0
    %2838 = vmatpush1.bf16.msra.mxu0 %v2835
    %2839 = vmatprep.subr.bf16.mxu0 0
    %2840 = vmatpush1.bf16.msra.mxu0 0
    %2841 = vmatprep.subr.bf16.mxu0 0
    %2842 = vmatpush1.bf16.msra.mxu0 0
    %2843 = vmatprep.subr.bf16.mxu0 0
    %2844 = vmatpush1.bf16.msra.mxu0 0
    %2845 = vmatprep.subr.bf16.mxu0 0
    %2846 = vmatpush1.bf16.msra.mxu0 0
    %2847 = vmatprep.subr.bf16.mxu0 0
    %2848 = vmatpush1.bf16.msra.mxu0 0
    %2849 = vmatprep.subr.bf16.mxu0 0
    %2850 = vmatpush1.bf16.msra.mxu0 0
    %2851 = vmatprep.subr.bf16.mxu0 0
    %2852 = vmatpush1.bf16.msra.mxu0 0
    %2853 = vmatprep.subr.bf16.mxu0 0
    %2854 = vmatpush1.bf16.msra.mxu0 0
    %2855 = vmatprep.subr.bf16.mxu0 0
    %2856 = vmatpush1.bf16.msra.mxu0 0
    %2857 = vmatprep.subr.bf16.mxu0 0
    %2858 = vmatpush1.bf16.msra.mxu0 0
    %2859 = vmatprep.subr.bf16.mxu0 0
    %2860 = vmatpush1.bf16.msra.mxu0 0
    %2861 = vmatprep.subr.bf16.mxu0 0
    %2862 = vmatpush1.bf16.msra.mxu0 0
    %2863 = vmatprep.subr.bf16.mxu0 0
    %2864 = vmatpush1.bf16.msra.mxu0 0
    %2865 = vmatprep.subr.bf16.mxu0 0
    %2866 = vmatpush1.bf16.msra.mxu0 0
    %2867 = vmatprep.subr.bf16.mxu0 0
    %2868 = vmatpush1.bf16.msra.mxu0 0
    %2869 = vmatprep.mubr.bf16.mxu0 0
    %2870 = vmatmul.mubr.bf16.gmra.mrb[0].mxu0 %v2832
    %v2871 = vpop.f32.mrb[0].mxu0
    %v2872 = vadd.f32 0.0, %v2871
    %v2873 = vpop.f32.mrb[0].mxu0
    %v2874 = vpop.f32.mrb[0].mxu0
    %v2875 = vpop.f32.mrb[0].mxu0
    %2876 = vdwg.mxu0
    %v2878 = vsel %vm2830, %v2817, 0
    %v2880 = vsel %vm2834, %v2816, 0
    %2882 = vmatprep.subr.bf16.mxu0 0
    %2883 = vmatpush1.bf16.msra.mxu0 %v2880
    %2884 = vmatprep.subr.bf16.mxu0 0
    %2885 = vmatpush1.bf16.msra.mxu0 0
    %2886 = vmatprep.subr.bf16.mxu0 0
    %2887 = vmatpush1.bf16.msra.mxu0 0
    %2888 = vmatprep.subr.bf16.mxu0 0
    %2889 = vmatpush1.bf16.msra.mxu0 0
    %2890 = vmatprep.subr.bf16.mxu0 0
    %2891 = vmatpush1.bf16.msra.mxu0 0
    %2892 = vmatprep.subr.bf16.mxu0 0
    %2893 = vmatpush1.bf16.msra.mxu0 0
    %2894 = vmatprep.subr.bf16.mxu0 0
    %2895 = vmatpush1.bf16.msra.mxu0 0
    %2896 = vmatprep.subr.bf16.mxu0 0
    %2897 = vmatpush1.bf16.msra.mxu0 0
    %2898 = vmatprep.subr.bf16.mxu0 0
    %2899 = vmatpush1.bf16.msra.mxu0 0
    %2900 = vmatprep.subr.bf16.mxu0 0
    %2901 = vmatpush1.bf16.msra.mxu0 0
    %2902 = vmatprep.subr.bf16.mxu0 0
    %2903 = vmatpush1.bf16.msra.mxu0 0
    %2904 = vmatprep.subr.bf16.mxu0 0
    %2905 = vmatpush1.bf16.msra.mxu0 0
    %2906 = vmatprep.subr.bf16.mxu0 0
    %2907 = vmatpush1.bf16.msra.mxu0 0
    %2908 = vmatprep.subr.bf16.mxu0 0
    %2909 = vmatpush1.bf16.msra.mxu0 0
    %2910 = vmatprep.subr.bf16.mxu0 0
    %2911 = vmatpush1.bf16.msra.mxu0 0
    %2912 = vmatprep.subr.bf16.mxu0 0
    %2913 = vmatpush1.bf16.msra.mxu0 0
    %2914 = vmatprep.mubr.bf16.mxu0 0
    %2915 = vmatmul.mubr.bf16.gmra.mrb[0].mxu0 %v2878
    %v2916 = vpop.f32.mrb[0].mxu0
    %v2917 = vadd.f32 %v2872, %v2916
    %v2918 = vpop.f32.mrb[0].mxu0
    %v2919 = vpop.f32.mrb[0].mxu0
    %v2920 = vpop.f32.mrb[0].mxu0
    %2921 = vdwg.mxu0
    %2922 = vrot.lane.b32.xlu0 %v2809, 124
    %v2923 = vpop.permute.xlu0 %2922
    %v2925 = vsel %vm2813, %v2812, %v2923
    %2926 = vrot.lane.b32.xlu0 %v2827, 124
    %v2927 = vpop.permute.xlu0 %2926
    %v2929 = vsel %vm2830, %v2927, 0
    %v2931 = vsel %vm2834, %v2925, 0
    %2933 = vmatprep.subr.bf16.mxu0 0
    %2934 = vmatpush1.bf16.msra.mxu0 %v2931
    %2935 = vmatprep.subr.bf16.mxu0 0
    %2936 = vmatpush1.bf16.msra.mxu0 0
    %2937 = vmatprep.subr.bf16.mxu0 0
    %2938 = vmatpush1.bf16.msra.mxu0 0
    %2939 = vmatprep.subr.bf16.mxu0 0
    %2940 = vmatpush1.bf16.msra.mxu0 0
    %2941 = vmatprep.subr.bf16.mxu0 0
    %2942 = vmatpush1.bf16.msra.mxu0 0
    %2943 = vmatprep.subr.bf16.mxu0 0
    %2944 = vmatpush1.bf16.msra.mxu0 0
    %2945 = vmatprep.subr.bf16.mxu0 0
    %2946 = vmatpush1.bf16.msra.mxu0 0
    %2947 = vmatprep.subr.bf16.mxu0 0
    %2948 = vmatpush1.bf16.msra.mxu0 0
    %2949 = vmatprep.subr.bf16.mxu0 0
    %2950 = vmatpush1.bf16.msra.mxu0 0
    %2951 = vmatprep.subr.bf16.mxu0 0
    %2952 = vmatpush1.bf16.msra.mxu0 0
    %2953 = vmatprep.subr.bf16.mxu0 0
    %2954 = vmatpush1.bf16.msra.mxu0 0
    %2955 = vmatprep.subr.bf16.mxu0 0
    %2956 = vmatpush1.bf16.msra.mxu0 0
    %2957 = vmatprep.subr.bf16.mxu0 0
    %2958 = vmatpush1.bf16.msra.mxu0 0
    %2959 = vmatprep.subr.bf16.mxu0 0
    %2960 = vmatpush1.bf16.msra.mxu0 0
    %2961 = vmatprep.subr.bf16.mxu0 0
    %2962 = vmatpush1.bf16.msra.mxu0 0
    %2963 = vmatprep.subr.bf16.mxu0 0
    %2964 = vmatpush1.bf16.msra.mxu0 0
    %2965 = vmatprep.mubr.bf16.mxu0 0
    %2966 = vmatmul.mubr.bf16.gmra.mrb[0].mxu0 %v2929
    %v2967 = vpop.f32.mrb[0].mxu0
    %v2968 = vadd.f32 0.0, %v2967
    %v2969 = vpop.f32.mrb[0].mxu0
    %v2970 = vpop.f32.mrb[0].mxu0
    %v2971 = vpop.f32.mrb[0].mxu0
    %2972 = vdwg.mxu0
    %v2973 = vadd.f32 %v2917, %v2968
    %v2974 = vld [vmem:[%s2] sm:$0x1]
    %2976 = vset.pattern.permute.xlu0 11
    %2977 = vperm.xlu0 %2976, %v2974
    %v2978 = vpop.permute.xlu0 %2977
    %v2980 = vadd.f32 %v2973, %v2978
    %v2981 = vxor.u32 %v2980, 2147483648
    %v2982 = vmul.f32 %v2981, 1.442695
    %v2983 = vpow.pop %v2982
    %v2984 = vadd.f32 %v2983, 1.0
    %v2985 = vrcp.pop %v2984
    %v2986 = vmul.f32 1.0, %v2985
    %v2987 = vmul.f32 %v2980, %v2986
    %v2988 = vpack.c.bf16 %v2987, %v2987
    %2990 = vrot.lane.b32.xlu0 %v2988, 126
    %v2991 = vpop.permute.xlu0 %2990
    %vm2992 = vcmask 138240
    %v2995 = vsel %vm2992, %v2988, %v2991
    %v2997 = vld [vmem:[#allocation2 + $0x70] sm:$0x1]
    %v2998 = vunpack.c.l.bf16 %v2997
    %v2999 = vunpack.c.l.bf16 %v2995
    %3001 = vset.pattern.permute.xlu0 0
    %3002 = vperm.xlu0 %3001, %v2998
    %v3003 = vpop.permute.xlu0 %3002
    %v3005 = vlaneseq
    %v3006 = vshrl.u32 %v3005, 7
    %v3007 = vsub.s32 0, %v3006
    %v3008 = vrot.slane %v2999, %v3007
    %v3009 = vmul.f32 %v3003, %v3008
    %3010 = vrot.lane.b32.xlu0 %v2988, 127
    %v3011 = vpop.permute.xlu0 %3010
    %3012 = vrot.lane.b32.xlu0 %v2988, 125
    %v3013 = vpop.permute.xlu0 %3012
    %v3016 = vsel %vm2992, %v3011, %v3013
    %v3018 = vunpack.c.l.bf16 %v3016
    %3019 = vset.pattern.permute.xlu0 1
    %3020 = vperm.xlu0 %3019, %v2998
    %v3021 = vpop.permute.xlu0 %3020
    %v3023 = vlaneseq
    %v3024 = vshrl.u32 %v3023, 7
    %v3025 = vsub.s32 0, %v3024
    %v3026 = vrot.slane %v3018, %v3025
    %v3027 = vmul.f32 %v3021, %v3026
    %v3028 = vadd.f32 %v3009, %v3027
    %3029 = vrot.lane.b32.xlu0 %v2988, 124
    %v3030 = vpop.permute.xlu0 %3029
    %v3032 = vsel %vm2992, %v2991, %v3030
    %v3034 = vunpack.c.l.bf16 %v3032
    %3035 = vset.pattern.permute.xlu0 2
    %3036 = vperm.xlu0 %3035, %v2998
    %v3037 = vpop.permute.xlu0 %3036
    %v3039 = vlaneseq
    %v3040 = vshrl.u32 %v3039, 7
    %v3041 = vsub.s32 0, %v3040
    %v3042 = vrot.slane %v3034, %v3041
    %v3043 = vmul.f32 %v3037, %v3042
    %v3044 = vadd.f32 %v3028, %v3043
    %v3046 = vsel %vm2992, %v3044, 0
    %v3049 = vsel %vm2834, %v1109, 0
    %3051 = vmatprep.subr.mxu0 0.0
    %3052 = vmatpush1.msra.mxu0 %v1107
    %3053 = vmatprep.subr.mxu0 0.0
    %3054 = vmatpush1.msra.mxu0 %v1108
    %3055 = vmatprep.subr.mxu0 0.0
    %3056 = vmatpush1.msra.mxu0 %v3049
    %3057 = vmatprep.subr.mxu0 0.0
    %3058 = vmatpush1.msra.mxu0 0.0
    %3059 = vmatprep.subr.mxu0 0.0
    %3060 = vmatpush1.msra.mxu0 0.0
    %3061 = vmatprep.subr.mxu0 0.0
    %3062 = vmatpush1.msra.mxu0 0.0
    %3063 = vmatprep.subr.mxu0 0.0
    %3064 = vmatpush1.msra.mxu0 0.0
    %3065 = vmatprep.subr.mxu0 0.0
    %3066 = vmatpush1.msra.mxu0 0.0
    %3067 = vmatprep.subr.mxu0 0.0
    %3068 = vmatpush1.msra.mxu0 0.0
    %3069 = vmatprep.subr.mxu0 0.0
    %3070 = vmatpush1.msra.mxu0 0.0
    %3071 = vmatprep.subr.mxu0 0.0
    %3072 = vmatpush1.msra.mxu0 0.0
    %3073 = vmatprep.subr.mxu0 0.0
    %3074 = vmatpush1.msra.mxu0 0.0
    %3075 = vmatprep.subr.mxu0 0.0
    %3076 = vmatpush1.msra.mxu0 0.0
    %3077 = vmatprep.subr.mxu0 0.0
    %3078 = vmatpush1.msra.mxu0 0.0
    %3079 = vmatprep.subr.mxu0 0.0
    %3080 = vmatpush1.msra.mxu0 0.0
    %3081 = vmatprep.subr.mxu0 0.0
    %3082 = vmatpush1.msra.mxu0 0.0
    %3083 = vmatprep.subr.mxu0 0.0
    %3084 = vmatpush1.msra.mxu0 0.0
    %3085 = vmatprep.subr.mxu0 0.0
    %3086 = vmatpush1.msra.mxu0 0.0
    %3087 = vmatprep.subr.mxu0 0.0
    %3088 = vmatpush1.msra.mxu0 0.0
    %3089 = vmatprep.subr.mxu0 0.0
    %3090 = vmatpush1.msra.mxu0 0.0
    %3091 = vmatprep.subr.mxu0 0.0
    %3092 = vmatpush1.msra.mxu0 0.0
    %3093 = vmatprep.subr.mxu0 0.0
    %3094 = vmatpush1.msra.mxu0 0.0
    %3095 = vmatprep.subr.mxu0 0.0
    %3096 = vmatpush1.msra.mxu0 0.0
    %3097 = vmatprep.subr.mxu0 0.0
    %3098 = vmatpush1.msra.mxu0 0.0
    %3099 = vmatprep.subr.mxu0 0.0
    %3100 = vmatpush1.msra.mxu0 0.0
    %3101 = vmatprep.subr.mxu0 0.0
    %3102 = vmatpush1.msra.mxu0 0.0
    %3103 = vmatprep.subr.mxu0 0.0
    %3104 = vmatpush1.msra.mxu0 0.0
    %3105 = vmatprep.subr.mxu0 0.0
    %3106 = vmatpush1.msra.mxu0 0.0
    %3107 = vmatprep.subr.mxu0 0.0
    %3108 = vmatpush1.msra.mxu0 0.0
    %3109 = vmatprep.subr.mxu0 0.0
    %3110 = vmatpush1.msra.mxu0 0.0
    %3111 = vmatprep.subr.mxu0 0.0
    %3112 = vmatpush1.msra.mxu0 0.0
    %3113 = vmatprep.subr.mxu0 0.0
    %3114 = vmatpush1.msra.mxu0 0.0
    %3115 = vmatprep.mubr.f32.mxu0 0.0
    %3116 = vmatmul.mubr.f32.gmra.mrb[0].mxu0 %v3046
    %v3117 = vpop.f32.mrb[0].mxu0
    %v3118 = vadd.f32 0.0, %v3117
    %v3119 = vpop.f32.mrb[0].mxu0
    %3120 = vdwg.mxu0
    %3121 = vrot.lane.b32.xlu0 %v3044, 111
    %v3122 = vpop.permute.xlu0 %3121
    %v3123 = vsel %vm2992, %v3122, 0
    %3125 = vmatprep.subr.mxu0 0.0
    %3126 = vmatpush1.msra.mxu0 %v1107
    %3127 = vmatprep.subr.mxu0 0.0
    %3128 = vmatpush1.msra.mxu0 %v1108
    %3129 = vmatprep.subr.mxu0 0.0
    %3130 = vmatpush1.msra.mxu0 %v3049
    %3131 = vmatprep.subr.mxu0 0.0
    %3132 = vmatpush1.msra.mxu0 0.0
    %3133 = vmatprep.subr.mxu0 0.0
    %3134 = vmatpush1.msra.mxu0 0.0
    %3135 = vmatprep.subr.mxu0 0.0
    %3136 = vmatpush1.msra.mxu0 0.0
    %3137 = vmatprep.subr.mxu0 0.0
    %3138 = vmatpush1.msra.mxu0 0.0
    %3139 = vmatprep.subr.mxu0 0.0
    %3140 = vmatpush1.msra.mxu0 0.0
    %3141 = vmatprep.subr.mxu0 0.0
    %3142 = vmatpush1.msra.mxu0 0.0
    %3143 = vmatprep.subr.mxu0 0.0
    %3144 = vmatpush1.msra.mxu0 0.0
    %3145 = vmatprep.subr.mxu0 0.0
    %3146 = vmatpush1.msra.mxu0 0.0
    %3147 = vmatprep.subr.mxu0 0.0
    %3148 = vmatpush1.msra.mxu0 0.0
    %3149 = vmatprep.subr.mxu0 0.0
    %3150 = vmatpush1.msra.mxu0 0.0
    %3151 = vmatprep.subr.mxu0 0.0
    %3152 = vmatpush1.msra.mxu0 0.0
    %3153 = vmatprep.subr.mxu0 0.0
    %3154 = vmatpush1.msra.mxu0 0.0
    %3155 = vmatprep.subr.mxu0 0.0
    %3156 = vmatpush1.msra.mxu0 0.0
    %3157 = vmatprep.subr.mxu0 0.0
    %3158 = vmatpush1.msra.mxu0 0.0
    %3159 = vmatprep.subr.mxu0 0.0
    %3160 = vmatpush1.msra.mxu0 0.0
    %3161 = vmatprep.subr.mxu0 0.0
    %3162 = vmatpush1.msra.mxu0 0.0
    %3163 = vmatprep.subr.mxu0 0.0
    %3164 = vmatpush1.msra.mxu0 0.0
    %3165 = vmatprep.subr.mxu0 0.0
    %3166 = vmatpush1.msra.mxu0 0.0
    %3167 = vmatprep.subr.mxu0 0.0
    %3168 = vmatpush1.msra.mxu0 0.0
    %3169 = vmatprep.subr.mxu0 0.0
    %3170 = vmatpush1.msra.mxu0 0.0
    %3171 = vmatprep.subr.mxu0 0.0
    %3172 = vmatpush1.msra.mxu0 0.0
    %3173 = vmatprep.subr.mxu0 0.0
    %3174 = vmatpush1.msra.mxu0 0.0
    %3175 = vmatprep.subr.mxu0 0.0
    %3176 = vmatpush1.msra.mxu0 0.0
    %3177 = vmatprep.subr.mxu0 0.0
    %3178 = vmatpush1.msra.mxu0 0.0
    %3179 = vmatprep.subr.mxu0 0.0
    %3180 = vmatpush1.msra.mxu0 0.0
    %3181 = vmatprep.subr.mxu0 0.0
    %3182 = vmatpush1.msra.mxu0 0.0
    %3183 = vmatprep.subr.mxu0 0.0
    %3184 = vmatpush1.msra.mxu0 0.0
    %3185 = vmatprep.subr.mxu0 0.0
    %3186 = vmatpush1.msra.mxu0 0.0
    %3187 = vmatprep.subr.mxu0 0.0
    %3188 = vmatpush1.msra.mxu0 0.0
    %3189 = vmatprep.mubr.f32.mxu0 0.0
    %3190 = vmatmul.mubr.f32.gmra.mrb[0].mxu0 %v3123
    %v3191 = vpop.f32.mrb[0].mxu0
    %v3192 = vadd.f32 0.0, %v3191
    %v3193 = vpop.f32.mrb[0].mxu0
    %3194 = vdwg.mxu0
    %3196 = vrot.lane.b32.xlu0 %v3192, 9
    %v3197 = vpop.permute.xlu0 %3196
    %vm3199 = vcmask 72704
    %v3200 = vsel %vm3199, %v3118, %v3197
    %3201 = vset.pattern.permute.xlu0 12
    %3202 = vperm.xlu0 %3201, %v2795
    %v3203 = vpop.permute.xlu0 %3202
    %v3205 = vadd.f32 %v3200, %v3203
    %v3206 = vxor.u32 %v3205, 2147483648
    %v3207 = vmul.f32 %v3206, 1.442695
    %v3208 = vpow.pop %v3207
    %v3209 = vadd.f32 %v3208, 1.0
    %v3210 = vrcp.pop %v3209
    %v3211 = vmul.f32 1.0, %v3210
    %v3212 = vmul.f32 %v3205, %v3211
    %vm3213 = vcmask 66560
    %3214 = vst.msk [vmem:[#allocation5] sm:$0x3] %vm3213, %v3212
    %3216 = vrot.lane.b32.xlu0 %v3212, 119
    %v3217 = vpop.permute.xlu0 %3216
    %s3219 = scalar_lea.vmem [#allocation5], 2
    %3220 = vst.msk [vmem:[%s3219] sm:$0x3] %vm3213, %v3217
    // Predicated region
    $region18: #{tpu_custom_call.1} parent=1 // pred_check
      _
    $region19: #{tpu_custom_call.1} parent=1 // pred_check_branch
      %3222 = sbr.rel (0) target = $region21
    $region20: #{tpu_custom_call.1} parent=1 // pred_region
      %s3224 = ssub.s32 64, 64
      %3225 = vsyncadd [#allocation4], %s3224
      %s3226 = sshll.u32 [#allocation5], 4
      %s3227 = int_to_ptr.vmem [resolvable:$true] %s3226
      %3232 = dma.vmem_to_hbm [thread:$0]  %s3227, 64, %s3, [#allocation4], 32, 32, 2
    $region21: #{tpu_custom_call.1} parent=1 // pred_fallthru
      _
    // Predicated region
    $region22: #{tpu_custom_call.1} parent=1 // pred_check
      _
    $region23: #{tpu_custom_call.1} parent=1 // pred_check_branch
      %3234 = sbr.rel (0) target = $region25
    $region24: #{tpu_custom_call.1} parent=1 // pred_region
      %3235 = dma.done [#allocation4], 64
    $region25: #{tpu_custom_call.1} parent=1 // pred_fallthru
      _
    %3236 = vsyncpa [#allocation3], 1
    %3237 = vsyncpa [#allocation4], 1

</llo_original>
